<compile_context>
chip_gen: v7x
topology: tpu7x:2x2x1
jax: 0.10.0
libtpu: 0.0.40
codegen_flags: <defaults>
</compile_context>

<pallas_src>
import functools

import jax
import jax.numpy as jnp
from jax import lax
from jax.experimental import pallas as pl
from jax.experimental.pallas import tpu as pltpu


# ----------------------------------------------------------------------------- kernels


def make_lstm_layer_kernel(hidden_pad: int, t_chunk: int, t_valid, is_last: bool):
    """One LSTM layer over a (t_chunk, b_chunk, in_dim) block; optionally fused fc.

    hidden_pad: lane-aligned hidden width (multiple of 128).
    t_valid:    true sequence length if the last time chunk is ragged, else None.
    """
    Hp = hidden_pad
    ragged = t_valid is not None

    def kernel(*refs):
        if is_last:
            (seq_ref, wih_ref, whh_ref, b_ref, wfc_ref, bfc_ref,
             out_ref, h_sc, c_sc, gx_sc) = refs
        else:
            (seq_ref, wih_ref, whh_ref, b_ref,
             out_ref, h_sc, c_sc, gx_sc) = refs

        ti = pl.program_id(1)
        nt = pl.num_programs(1)
        b_chunk = seq_ref.shape[1]
        in_dim = seq_ref.shape[2]

        # Zero (h, c) at the start of every batch-chunk's time sweep (h0 = c0 = 0).
        @pl.when(ti == 0)
        def _():
            h_sc[...] = jnp.zeros_like(h_sc)
            c_sc[...] = jnp.zeros_like(c_sc)

        # ---- Hoisted input projection: ONE (Tc*Bc, in) @ (in, 4Hp) MXU matmul -----
        # Bias is broadcast once per chunk; the scratch is bf16 to halve VMEM.
        x_all = seq_ref[...].reshape(t_chunk * b_chunk, in_dim)
        gx = jnp.dot(x_all, wih_ref[...], preferred_element_type=jnp.float32)
        gx_sc[...] = (gx + b_ref[...]).reshape(
            t_chunk, b_chunk, 4 * Hp).astype(gx_sc.dtype)

        # ---- Serial recurrence: only h @ Whh + elementwise per step ----------------
        def step(t, carry):
            h, c = carry                                     # h: bf16, c: f32
            gates = jnp.dot(h, whh_ref[...],
                            preferred_element_type=jnp.float32) + gx_sc[t]
            # Gate columns were packed as [i, f, o, g]; i/f/o pre-activations were
            # pre-scaled by 0.5, so one tanh over 4Hp covers everything:
            #   sigmoid(x) = 0.5 * tanh(x/2) + 0.5
            tg = jnp.tanh(gates)                             # single EUP launch
            sig = tg[:, :3 * Hp] * 0.5 + 0.5                 # sigmoid of i, f, o
            g = tg[:, 3 * Hp:]
            i_g = sig[:, 0:Hp]
            f_g = sig[:, Hp:2 * Hp]
            o_g = sig[:, 2 * Hp:3 * Hp]
            c_new = f_g * c + i_g * g
            h_new = (o_g * jnp.tanh(c_new)).astype(jnp.bfloat16)
            if ragged:
                # Hold the state on zero-padded tail timesteps.
                step_idx = ti * t_chunk + t
                keep = jnp.full(c.shape, step_idx, jnp.int32) < t_valid
                c_new = jnp.where(keep, c_new, c)
                h_new = jnp.where(keep, h_new, h)
            if not is_last:
                out_ref[t] = h_new                           # feed next layer (bf16)
            return h_new, c_new

        # Unroll short chunks so the MXU push of step t+1 overlaps EUP of step t.
        unroll = True if t_chunk <= 16 else (4 if t_chunk % 4 == 0 else 1)
        h_f, c_f = lax.fori_loop(0, t_chunk, step, (h_sc[...], c_sc[...]),
                                 unroll=unroll)
        h_sc[...] = h_f
        c_sc[...] = c_f

        if is_last:
            # fc on the last timestep's hidden state of the top layer.
            @pl.when(ti == nt - 1)
            def _():
                out_ref[...] = (jnp.dot(h_f, wfc_ref[...],
                                        preferred_element_type=jnp.float32)
                                + bfc_ref[...]).astype(out_ref.dtype)

    return kernel


# ----------------------------------------------------------------------------- helpers


def _largest_divisor_leq(n: int, cap: int) -> int:
    for d in range(min(n, cap), 0, -1):
        if n % d == 0:
            return d
    return 1


@functools.lru_cache(maxsize=1)
def _tpu_traits():
    """(vmem_capacity_bytes, MXU-row cap for b_chunk, force_two_batch_chunks)."""
    vmem_cap = 64 * 1024 * 1024                      # conservative fallback (v7x)
    kind = ""
    try:
        info = pltpu.get_tpu_info()
        vmem_cap = int(getattr(info, "vmem_capacity_bytes", vmem_cap))
    except Exception:
        pass
    try:
        kind = jax.devices()[0].device_kind.lower()
    except Exception:
        pass
    is_v5 = "v5" in kind
    is_v7 = "v7" in kind
    row_cap = 128 if is_v5 else 256                  # v6e/v7x MXUs are 256 rows wide
    return vmem_cap, row_cap, is_v7


# ----------------------------------------------------------------------------- params


def init_params(key, input_dim, hidden_dim, num_layers, output_dim):
    """Deterministic uniform(-1/sqrt(H), 1/sqrt(H)) init, PyTorch-style shapes."""
    k = 1.0 / jnp.sqrt(jnp.float32(hidden_dim))
    params = {"layers": []}
    keys = jax.random.split(key, num_layers * 4 + 2)
    ki = 0
    for l in range(num_layers):
        in_dim = input_dim if l == 0 else hidden_dim
        w_ih = jax.random.uniform(keys[ki], (4 * hidden_dim, in_dim),
                                  jnp.float32, -k, k); ki += 1
        w_hh = jax.random.uniform(keys[ki], (4 * hidden_dim, hidden_dim),
                                  jnp.float32, -k, k); ki += 1
        b_ih = jax.random.uniform(keys[ki], (4 * hidden_dim,),
                                  jnp.float32, -k, k); ki += 1
        b_hh = jax.random.uniform(keys[ki], (4 * hidden_dim,),
                                  jnp.float32, -k, k); ki += 1
        params["layers"].append((w_ih, w_hh, b_ih, b_hh))
    params["fc_w"] = jax.random.uniform(keys[ki], (output_dim, hidden_dim),
                                        jnp.float32, -k, k); ki += 1
    params["fc_b"] = jax.random.uniform(keys[ki], (output_dim,),
                                        jnp.float32, -k, k)
    return params


def prepare_params(params, hidden_dim):
    """One-time packing (outside the jitted forward):
      - transpose weights, re-pack gate blocks from PyTorch [i,f,g,o] to [i,f,o,g],
      - pad every gate block (and the hidden axis) from H to Hp = multiple of 128,
      - pre-scale i/f/o weights & bias by 0.5 (tanh-only gate nonlinearity),
      - fuse biases, cast MXU operands to bf16 (incl. fc_w)."""
    H = hidden_dim
    Hp = ((H + 127) // 128) * 128

    def pack_gate_matrix(w_t, in_pad):
        # w_t: (in_orig, 4H), PyTorch gate order [i, f, g, o] along columns.
        in_orig = w_t.shape[0]
        blk = {}
        for name, s in (("i", 0), ("f", 1), ("g", 2), ("o", 3)):
            b = w_t[:, s * H:(s + 1) * H]
            blk[name] = jnp.pad(b, ((0, in_pad - in_orig), (0, Hp - H)))
        w = jnp.concatenate([0.5 * blk["i"], 0.5 * blk["f"],
                             0.5 * blk["o"], blk["g"]], axis=1)      # (in_pad, 4Hp)
        return w.astype(jnp.bfloat16)

    def pack_bias(b):
        segs = [jnp.pad(b[s * H:(s + 1) * H], (0, Hp - H)) for s in range(4)]  # i,f,g,o
        fused = jnp.concatenate([0.5 * segs[0], 0.5 * segs[1],
                                 0.5 * segs[3], segs[2]])
        return fused.reshape(1, 4 * Hp).astype(jnp.float32)

    layers = []
    for li, (w_ih, w_hh, b_ih, b_hh) in enumerate(params["layers"]):
        in_orig = w_ih.shape[1]
        in_pad = in_orig if li == 0 else Hp            # deeper layers eat padded hidden
        wih = pack_gate_matrix(jnp.transpose(w_ih), in_pad)   # (in_pad, 4Hp) bf16
        whh = pack_gate_matrix(jnp.transpose(w_hh), Hp)       # (Hp, 4Hp) bf16
        b = pack_bias(b_ih + b_hh)                             # (1, 4Hp) f32
        layers.append((wih, whh, b))

    fc_w = jnp.pad(jnp.transpose(params["fc_w"]),
                   ((0, Hp - H), (0, 0))).astype(jnp.bfloat16)        # (Hp, O) bf16
    fc_b = params["fc_b"].reshape(1, -1).astype(jnp.float32)          # (1, O)
    return {"layers": layers, "fc_w": fc_w, "fc_b": fc_b}


# ----------------------------------------------------------------------------- wrapper


@functools.partial(jax.jit,
                   static_argnames=("hidden_dim", "num_layers", "t_chunk", "b_chunk"))
def lstm_model_forward(x, packed, *, hidden_dim, num_layers,
                       t_chunk=None, b_chunk=None):
    """x: (B, T, input_dim) batch_first, like the PyTorch module.  Returns (B, O)."""
    B, T, D = x.shape
    Hp = packed["layers"][0][1].shape[0]               # padded hidden dim (Whh rows)
    O = packed["fc_b"].shape[1]

    # --- generation-aware VMEM budget -----------------------------------------------
    vmem_cap, row_cap, force_two_batch_chunks = _tpu_traits()
    vmem_limit = int(vmem_cap * 3 // 4)                # ~75% of physical VMEM per core
    budget = int(vmem_limit * 9 // 10)                 # headroom for compiler scratch

    # --- batch padding / chunking ----------------------------------------------------
    B_pad = max(8, ((B + 7) // 8) * 8)                 # fp32 sublane granularity
    if B_pad != B:
        x = jnp.pad(x, ((0, B_pad - B), (0, 0), (0, 0)))

    if b_chunk is None:
        units = B_pad // 8
        cap_units = max(1, row_cap // 8)               # fill MXU rows on the recurrence
        if force_two_batch_chunks and units >= 2:
            cap_units = min(cap_units, units // 2)     # keep both v7x TCs busy
        b_chunk = 8 * _largest_divisor_leq(units, cap_units)
    nb = B_pad // b_chunk

    # --- time chunking: fixed-size chunks, ragged tail masked in-kernel --------------
    max_in = max(D, Hp)

    def chunk_bytes(tc, bc):
        io_in = 2 * tc * bc * max_in * 2               # double-buffered bf16 input blk
        io_out = 2 * tc * bc * Hp * 2                  # double-buffered bf16 output blk
        gx = tc * bc * 4 * Hp * 2                      # bf16 hoisted-projection scratch
        state = bc * Hp * (2 + 4)                      # h (bf16) + c (f32) carries
        weights = 2 * ((max_in + Hp) * 4 * Hp * 2 + 4 * Hp * 4)  # 2 pipeline buffers
        fc = 2 * (Hp * O * 2 + O * 4)
        return io_in + io_out + gx + state + weights + fc

    if t_chunk is None:
        t_chunk = min(T, 256)
        while t_chunk > 8 and chunk_bytes(t_chunk, b_chunk) > budget:
            t_chunk = max(8, t_chunk // 2)
    T_pad = ((T + t_chunk - 1) // t_chunk) * t_chunk
    nt = T_pad // t_chunk
    t_valid = T if T_pad != T else None

    # Time-major, bf16 activations feeding the MXU (state stays f32/bf16 in-kernel).
    seq = jnp.transpose(x, (1, 0, 2)).astype(jnp.bfloat16)        # (T, B_pad, D)
    if T_pad != T:
        seq = jnp.pad(seq, ((0, T_pad - T), (0, 0), (0, 0)))

    compiler_params = pltpu.CompilerParams(
        dimension_semantics=("parallel", "arbitrary"),
        vmem_limit_bytes=vmem_limit)

    out = None
    for l in range(num_layers):
        wih, whh, b = packed["layers"][l]
        in_dim = wih.shape[0]
        is_last = (l == num_layers - 1)

        in_specs = [
            pl.BlockSpec((t_chunk, b_chunk, in_dim), lambda bi, ti: (ti, bi, 0)),
            pl.BlockSpec((in_dim, 4 * Hp), lambda bi, ti: (0, 0)),
            pl.BlockSpec((Hp, 4 * Hp), lambda bi, ti: (0, 0)),
            pl.BlockSpec((1, 4 * Hp), lambda bi, ti: (0, 0)),
        ]
        args = [seq, wih, whh, b]
        if is_last:
            in_specs += [pl.BlockSpec((Hp, O), lambda bi, ti: (0, 0)),
                         pl.BlockSpec((1, O), lambda bi, ti: (0, 0))]
            args += [packed["fc_w"], packed["fc_b"]]
            out_shape = jax.ShapeDtypeStruct((B_pad, O), jnp.float32)
            out_specs = pl.BlockSpec((b_chunk, O), lambda bi, ti: (bi, 0))
        else:
            out_shape = jax.ShapeDtypeStruct((T_pad, B_pad, Hp), jnp.bfloat16)
            out_specs = pl.BlockSpec((t_chunk, b_chunk, Hp), lambda bi, ti: (ti, bi, 0))

        result = pl.pallas_call(
            make_lstm_layer_kernel(Hp, t_chunk, t_valid, is_last),
            out_shape=out_shape,
            grid_spec=pltpu.PrefetchScalarGridSpec(
                num_scalar_prefetch=0,
                grid=(nb, nt),
                in_specs=in_specs,
                out_specs=out_specs,
                scratch_shapes=[
                    pltpu.VMEM((b_chunk, Hp), jnp.bfloat16),               # h carry
                    pltpu.VMEM((b_chunk, Hp), jnp.float32),                # c carry
                    pltpu.VMEM((t_chunk, b_chunk, 4 * Hp), jnp.bfloat16),  # x-proj gates
                ]),
            compiler_params=compiler_params,
        )(*args)

        if is_last:
            out = result
        else:
            seq = result                                           # feeds next layer

    return out[:B]


# --------------------------------------------------------------------------- reference


def lstm_model_reference(x, params, *, hidden_dim, num_layers):
    """Pure-JAX fp32 reference for correctness checking (PyTorch semantics)."""
    B, T, D = x.shape
    H = hidden_dim
    seq = x
    for (w_ih, w_hh, b_ih, b_hh) in params["layers"]:
        h = jnp.zeros((B, H), jnp.float32)
        c = jnp.zeros((B, H), jnp.float32)
        outs = []
        for t in range(T):
            gates = seq[:, t, :] @ w_ih.T + b_ih + h @ w_hh.T + b_hh
            i = jax.nn.sigmoid(gates[:, 0 * H:1 * H])
            f = jax.nn.sigmoid(gates[:, 1 * H:2 * H])
            g = jnp.tanh(gates[:, 2 * H:3 * H])
            o = jax.nn.sigmoid(gates[:, 3 * H:4 * H])
            c = f * c + i * g
            h = o * jnp.tanh(c)
            outs.append(h)
        seq = jnp.stack(outs, axis=1)
    return seq[:, -1, :] @ params["fc_w"].T + params["fc_b"]


if __name__ == "__main__":
    input_dim, hidden_dim, num_layers, output_dim = 16, 32, 2, 4

    key = jax.random.PRNGKey(0)
    kx, kp, kx2 = jax.random.split(key, 3)
    params = init_params(kp, input_dim, hidden_dim, num_layers, output_dim)
    packed = prepare_params(params, hidden_dim)      # one-time packing, outside jit

    # Main check: B=2, T=8 (T fits in one time chunk; no masking path).
    x = jax.random.normal(kx, (2, 8, input_dim), jnp.float32)
    out = lstm_model_forward(x, packed,
                             hidden_dim=hidden_dim, num_layers=num_layers)
    out = jax.block_until_ready(out)
    ref = lstm_model_reference(x, params,
                               hidden_dim=hidden_dim, num_layers=num_layers)
    assert out.shape == (2, output_dim)
    # bf16 MXU operands / carries (f32 accumulation) -> loosened tolerance vs fp32 ref.
    assert jnp.allclose(out, ref, atol=5e-2, rtol=5e-2), "mismatch vs reference"

    # Ragged-time check: T=6 with forced t_chunk=4 exercises the masked-tail path.
    x2 = jax.random.normal(kx2, (2, 6, input_dim), jnp.float32)
    out2 = lstm_model_forward(x2, packed, hidden_dim=hidden_dim,
                              num_layers=num_layers, t_chunk=4)
    out2 = jax.block_until_ready(out2)
    ref2 = lstm_model_reference(x2, params,
                                hidden_dim=hidden_dim, num_layers=num_layers)
    assert jnp.allclose(out2, ref2, atol=5e-2, rtol=5e-2), "mismatch (ragged T)"

    print("KERNEL_OK")
</pallas_src>

<mosaic_0001>
module attributes {stable_mosaic.version = 11 : i64} {
  func.func @kernel(%arg0: i32, %arg1: i32, %arg2: memref<8x8x16xbf16, #tpu.memory_space<vmem>>, %arg3: memref<16x512xbf16, #tpu.memory_space<vmem>>, %arg4: memref<128x512xbf16, #tpu.memory_space<vmem>>, %arg5: memref<1x512xf32, #tpu.memory_space<vmem>>, %arg6: memref<8x8x128xbf16, #tpu.memory_space<vmem>>, %arg7: memref<8x128xbf16, #tpu.memory_space<vmem>>, %arg8: memref<8x128xf32, #tpu.memory_space<vmem>>, %arg9: memref<8x8x512xbf16, #tpu.memory_space<vmem>>) attributes {dimension_semantics = [#tpu.dimension_semantics<parallel>, #tpu.dimension_semantics<arbitrary>], iteration_bounds = array<i64: 1, 1>, scalar_prefetch = 0 : i64, scratch_operands = 3 : i64, tpu.core_type = #tpu.core_type<tc>, window_params = [{transform_indices = @transform_0, window_bounds = array<i64: 8, 8, 16>}, {pipeline_mode = #tpu.pipeline_mode<synchronous>, transform_indices = @transform_1, window_bounds = array<i64: 16, 512>}, {pipeline_mode = #tpu.pipeline_mode<synchronous>, transform_indices = @transform_2, window_bounds = array<i64: 128, 512>}, {pipeline_mode = #tpu.pipeline_mode<synchronous>, transform_indices = @transform_3, window_bounds = array<i64: 1, 512>}, {transform_indices = @transform_4, window_bounds = array<i64: 8, 8, 128>}]} {
    %c0_i32 = arith.constant 0 : i32
    %0 = arith.cmpi eq, %arg1, %c0_i32 : i32
    %1 = arith.extui %0 : i1 to i32
    %c0_i32_0 = arith.constant 0 : i32
    %2 = arith.cmpi ne, %1, %c0_i32_0 : i32
    scf.if %2 {
      %cst_91 = arith.constant 0.000000e+00 : bf16
      %233 = vector.broadcast %cst_91 : bf16 to vector<8x128xbf16>
      %c0_92 = arith.constant 0 : index
      %c0_93 = arith.constant 0 : index
      %234 = vector.load %arg7[%c0_92, %c0_93] : memref<8x128xbf16, #tpu.memory_space<vmem>>, vector<8x128xbf16>
      tpu.vector_store %arg7[%c0_92, %c0_93], %233 {strides = array<i32>} : memref<8x128xbf16, #tpu.memory_space<vmem>>, vector<8x128xbf16>,
      %cst_94 = arith.constant 0.000000e+00 : f32
      %235 = vector.broadcast %cst_94 : f32 to vector<8x128xf32>
      %c0_95 = arith.constant 0 : index
      %c0_96 = arith.constant 0 : index
      %236 = vector.load %arg8[%c0_95, %c0_96] : memref<8x128xf32, #tpu.memory_space<vmem>>, vector<8x128xf32>
      tpu.vector_store %arg8[%c0_95, %c0_96], %235 {strides = array<i32>} : memref<8x128xf32, #tpu.memory_space<vmem>>, vector<8x128xf32>,
    } else {
    }
    %c0 = arith.constant 0 : index
    %c0_1 = arith.constant 0 : index
    %c0_2 = arith.constant 0 : index
    %3 = vector.load %arg2[%c0, %c0_1, %c0_2] : memref<8x8x16xbf16, #tpu.memory_space<vmem>>, vector<8x8x16xbf16>
    %4 = vector.shape_cast %3 : vector<8x8x16xbf16> to vector<64x16xbf16>
    %c0_3 = arith.constant 0 : index
    %c0_4 = arith.constant 0 : index
    %5 = vector.load %arg3[%c0_3, %c0_4] : memref<16x512xbf16, #tpu.memory_space<vmem>>, vector<16x512xbf16>
    %cst = arith.constant dense<0.000000e+00> : vector<64x512xf32>
    %6 = tpu.matmul %4, %5, %cst {dimension_numbers = #tpu.dot_dimension_numbers<[1], [0], [0], [1], [0, 0, 1, 1], [], []>} : vector<64x16xbf16>, vector<16x512xbf16>, vector<64x512xf32> -> vector<64x512xf32>
    %c0_5 = arith.constant 0 : index
    %c0_6 = arith.constant 0 : index
    %7 = vector.load %arg5[%c0_5, %c0_6] : memref<1x512xf32, #tpu.memory_space<vmem>>, vector<1x512xf32>
    %8 = vector.broadcast %7 : vector<1x512xf32> to vector<64x512xf32>
    %9 = arith.addf %6, %8 : vector<64x512xf32>
    %10 = vector.shape_cast %9 : vector<64x512xf32> to vector<8x8x512xf32>
    %11 = arith.truncf %10 : vector<8x8x512xf32> to vector<8x8x512xbf16>
    %c0_7 = arith.constant 0 : index
    %c0_8 = arith.constant 0 : index
    %c0_9 = arith.constant 0 : index
    %12 = vector.load %arg9[%c0_7, %c0_8, %c0_9] : memref<8x8x512xbf16, #tpu.memory_space<vmem>>, vector<8x8x512xbf16>
    tpu.vector_store %arg9[%c0_7, %c0_8, %c0_9], %11 {strides = array<i32>} : memref<8x8x512xbf16, #tpu.memory_space<vmem>>, vector<8x8x512xbf16>,
    %c0_10 = arith.constant 0 : index
    %c0_11 = arith.constant 0 : index
    %13 = vector.load %arg7[%c0_10, %c0_11] : memref<8x128xbf16, #tpu.memory_space<vmem>>, vector<8x128xbf16>
    %c0_12 = arith.constant 0 : index
    %c0_13 = arith.constant 0 : index
    %14 = vector.load %arg8[%c0_12, %c0_13] : memref<8x128xf32, #tpu.memory_space<vmem>>, vector<8x128xf32>
    %c0_i32_14 = arith.constant 0 : i32
    %c0_15 = arith.constant 0 : index
    %c0_16 = arith.constant 0 : index
    %15 = vector.load %arg4[%c0_15, %c0_16] : memref<128x512xbf16, #tpu.memory_space<vmem>>, vector<128x512xbf16>
    %cst_17 = arith.constant dense<0.000000e+00> : vector<8x512xf32>
    %16 = tpu.matmul %13, %15, %cst_17 {dimension_numbers = #tpu.dot_dimension_numbers<[1], [0], [0], [1], [0, 0, 1, 1], [], []>} : vector<8x128xbf16>, vector<128x512xbf16>, vector<8x512xf32> -> vector<8x512xf32>
    %17 = arith.index_cast %c0_i32_14 : i32 to index
    %c0_18 = arith.constant 0 : index
    %c0_19 = arith.constant 0 : index
    %18 = vector.load %arg9[%17, %c0_18, %c0_19] : memref<8x8x512xbf16, #tpu.memory_space<vmem>>, vector<1x8x512xbf16>
    %19 = vector.shape_cast %18 : vector<1x8x512xbf16> to vector<8x512xbf16>
    %20 = arith.extf %19 : vector<8x512xbf16> to vector<8x512xf32>
    %21 = arith.addf %16, %20 : vector<8x512xf32>
    %22 = math.tanh %21 : vector<8x512xf32>
    %23 = vector.extract_strided_slice %22 {offsets = [0, 0], sizes = [8, 384], strides = [1, 1]} : vector<8x512xf32> to vector<8x384xf32>
    %cst_20 = arith.constant 5.000000e-01 : f32
    %24 = vector.broadcast %cst_20 : f32 to vector<8x384xf32>
    %25 = arith.mulf %23, %24 : vector<8x384xf32>
    %cst_21 = arith.constant 5.000000e-01 : f32
    %26 = vector.broadcast %cst_21 : f32 to vector<8x384xf32>
    %27 = arith.addf %25, %26 : vector<8x384xf32>
    %28 = vector.extract_strided_slice %22 {offsets = [0, 384], sizes = [8, 128], strides = [1, 1]} : vector<8x512xf32> to vector<8x128xf32>
    %29 = vector.extract_strided_slice %27 {offsets = [0, 0], sizes = [8, 128], strides = [1, 1]} : vector<8x384xf32> to vector<8x128xf32>
    %30 = vector.extract_strided_slice %27 {offsets = [0, 128], sizes = [8, 128], strides = [1, 1]} : vector<8x384xf32> to vector<8x128xf32>
    %31 = vector.extract_strided_slice %27 {offsets = [0, 256], sizes = [8, 128], strides = [1, 1]} : vector<8x384xf32> to vector<8x128xf32>
    %32 = arith.mulf %30, %14 : vector<8x128xf32>
    %33 = arith.mulf %29, %28 : vector<8x128xf32>
    %34 = arith.addf %32, %33 : vector<8x128xf32>
    %35 = math.tanh %34 : vector<8x128xf32>
    %36 = arith.mulf %31, %35 : vector<8x128xf32>
    %37 = arith.truncf %36 : vector<8x128xf32> to vector<8x128xbf16>
    %38 = arith.index_cast %c0_i32_14 : i32 to index
    %c0_22 = arith.constant 0 : index
    %c0_23 = arith.constant 0 : index
    %39 = vector.load %arg6[%38, %c0_22, %c0_23] : memref<8x8x128xbf16, #tpu.memory_space<vmem>>, vector<1x8x128xbf16>
    %40 = vector.shape_cast %39 : vector<1x8x128xbf16> to vector<8x128xbf16>
    %41 = vector.shape_cast %37 : vector<8x128xbf16> to vector<1x8x128xbf16>
    tpu.vector_store %arg6[%38, %c0_22, %c0_23], %41 {strides = array<i32>} : memref<8x8x128xbf16, #tpu.memory_space<vmem>>, vector<1x8x128xbf16>,
    %c1_i32 = arith.constant 1 : i32
    %c0_24 = arith.constant 0 : index
    %c0_25 = arith.constant 0 : index
    %42 = vector.load %arg4[%c0_24, %c0_25] : memref<128x512xbf16, #tpu.memory_space<vmem>>, vector<128x512xbf16>
    %cst_26 = arith.constant dense<0.000000e+00> : vector<8x512xf32>
    %43 = tpu.matmul %37, %42, %cst_26 {dimension_numbers = #tpu.dot_dimension_numbers<[1], [0], [0], [1], [0, 0, 1, 1], [], []>} : vector<8x128xbf16>, vector<128x512xbf16>, vector<8x512xf32> -> vector<8x512xf32>
    %44 = arith.index_cast %c1_i32 : i32 to index
    %c0_27 = arith.constant 0 : index
    %c0_28 = arith.constant 0 : index
    %45 = vector.load %arg9[%44, %c0_27, %c0_28] : memref<8x8x512xbf16, #tpu.memory_space<vmem>>, vector<1x8x512xbf16>
    %46 = vector.shape_cast %45 : vector<1x8x512xbf16> to vector<8x512xbf16>
    %47 = arith.extf %46 : vector<8x512xbf16> to vector<8x512xf32>
    %48 = arith.addf %43, %47 : vector<8x512xf32>
    %49 = math.tanh %48 : vector<8x512xf32>
    %50 = vector.extract_strided_slice %49 {offsets = [0, 0], sizes = [8, 384], strides = [1, 1]} : vector<8x512xf32> to vector<8x384xf32>
    %cst_29 = arith.constant 5.000000e-01 : f32
    %51 = vector.broadcast %cst_29 : f32 to vector<8x384xf32>
    %52 = arith.mulf %50, %51 : vector<8x384xf32>
    %cst_30 = arith.constant 5.000000e-01 : f32
    %53 = vector.broadcast %cst_30 : f32 to vector<8x384xf32>
    %54 = arith.addf %52, %53 : vector<8x384xf32>
    %55 = vector.extract_strided_slice %49 {offsets = [0, 384], sizes = [8, 128], strides = [1, 1]} : vector<8x512xf32> to vector<8x128xf32>
    %56 = vector.extract_strided_slice %54 {offsets = [0, 0], sizes = [8, 128], strides = [1, 1]} : vector<8x384xf32> to vector<8x128xf32>
    %57 = vector.extract_strided_slice %54 {offsets = [0, 128], sizes = [8, 128], strides = [1, 1]} : vector<8x384xf32> to vector<8x128xf32>
    %58 = vector.extract_strided_slice %54 {offsets = [0, 256], sizes = [8, 128], strides = [1, 1]} : vector<8x384xf32> to vector<8x128xf32>
    %59 = arith.mulf %57, %34 : vector<8x128xf32>
    %60 = arith.mulf %56, %55 : vector<8x128xf32>
    %61 = arith.addf %59, %60 : vector<8x128xf32>
    %62 = math.tanh %61 : vector<8x128xf32>
    %63 = arith.mulf %58, %62 : vector<8x128xf32>
    %64 = arith.truncf %63 : vector<8x128xf32> to vector<8x128xbf16>
    %65 = arith.index_cast %c1_i32 : i32 to index
    %c0_31 = arith.constant 0 : index
    %c0_32 = arith.constant 0 : index
    %66 = vector.load %arg6[%65, %c0_31, %c0_32] : memref<8x8x128xbf16, #tpu.memory_space<vmem>>, vector<1x8x128xbf16>
    %67 = vector.shape_cast %66 : vector<1x8x128xbf16> to vector<8x128xbf16>
    %68 = vector.shape_cast %64 : vector<8x128xbf16> to vector<1x8x128xbf16>
    tpu.vector_store %arg6[%65, %c0_31, %c0_32], %68 {strides = array<i32>} : memref<8x8x128xbf16, #tpu.memory_space<vmem>>, vector<1x8x128xbf16>,
    %c2_i32 = arith.constant 2 : i32
    %c0_33 = arith.constant 0 : index
    %c0_34 = arith.constant 0 : index
    %69 = vector.load %arg4[%c0_33, %c0_34] : memref<128x512xbf16, #tpu.memory_space<vmem>>, vector<128x512xbf16>
    %cst_35 = arith.constant dense<0.000000e+00> : vector<8x512xf32>
    %70 = tpu.matmul %64, %69, %cst_35 {dimension_numbers = #tpu.dot_dimension_numbers<[1], [0], [0], [1], [0, 0, 1, 1], [], []>} : vector<8x128xbf16>, vector<128x512xbf16>, vector<8x512xf32> -> vector<8x512xf32>
    %71 = arith.index_cast %c2_i32 : i32 to index
    %c0_36 = arith.constant 0 : index
    %c0_37 = arith.constant 0 : index
    %72 = vector.load %arg9[%71, %c0_36, %c0_37] : memref<8x8x512xbf16, #tpu.memory_space<vmem>>, vector<1x8x512xbf16>
    %73 = vector.shape_cast %72 : vector<1x8x512xbf16> to vector<8x512xbf16>
    %74 = arith.extf %73 : vector<8x512xbf16> to vector<8x512xf32>
    %75 = arith.addf %70, %74 : vector<8x512xf32>
    %76 = math.tanh %75 : vector<8x512xf32>
    %77 = vector.extract_strided_slice %76 {offsets = [0, 0], sizes = [8, 384], strides = [1, 1]} : vector<8x512xf32> to vector<8x384xf32>
    %cst_38 = arith.constant 5.000000e-01 : f32
    %78 = vector.broadcast %cst_38 : f32 to vector<8x384xf32>
    %79 = arith.mulf %77, %78 : vector<8x384xf32>
    %cst_39 = arith.constant 5.000000e-01 : f32
    %80 = vector.broadcast %cst_39 : f32 to vector<8x384xf32>
    %81 = arith.addf %79, %80 : vector<8x384xf32>
    %82 = vector.extract_strided_slice %76 {offsets = [0, 384], sizes = [8, 128], strides = [1, 1]} : vector<8x512xf32> to vector<8x128xf32>
    %83 = vector.extract_strided_slice %81 {offsets = [0, 0], sizes = [8, 128], strides = [1, 1]} : vector<8x384xf32> to vector<8x128xf32>
    %84 = vector.extract_strided_slice %81 {offsets = [0, 128], sizes = [8, 128], strides = [1, 1]} : vector<8x384xf32> to vector<8x128xf32>
    %85 = vector.extract_strided_slice %81 {offsets = [0, 256], sizes = [8, 128], strides = [1, 1]} : vector<8x384xf32> to vector<8x128xf32>
    %86 = arith.mulf %84, %61 : vector<8x128xf32>
    %87 = arith.mulf %83, %82 : vector<8x128xf32>
    %88 = arith.addf %86, %87 : vector<8x128xf32>
    %89 = math.tanh %88 : vector<8x128xf32>
    %90 = arith.mulf %85, %89 : vector<8x128xf32>
    %91 = arith.truncf %90 : vector<8x128xf32> to vector<8x128xbf16>
    %92 = arith.index_cast %c2_i32 : i32 to index
    %c0_40 = arith.constant 0 : index
    %c0_41 = arith.constant 0 : index
    %93 = vector.load %arg6[%92, %c0_40, %c0_41] : memref<8x8x128xbf16, #tpu.memory_space<vmem>>, vector<1x8x128xbf16>
    %94 = vector.shape_cast %93 : vector<1x8x128xbf16> to vector<8x128xbf16>
    %95 = vector.shape_cast %91 : vector<8x128xbf16> to vector<1x8x128xbf16>
    tpu.vector_store %arg6[%92, %c0_40, %c0_41], %95 {strides = array<i32>} : memref<8x8x128xbf16, #tpu.memory_space<vmem>>, vector<1x8x128xbf16>,
    %c3_i32 = arith.constant 3 : i32
    %c0_42 = arith.constant 0 : index
    %c0_43 = arith.constant 0 : index
    %96 = vector.load %arg4[%c0_42, %c0_43] : memref<128x512xbf16, #tpu.memory_space<vmem>>, vector<128x512xbf16>
    %cst_44 = arith.constant dense<0.000000e+00> : vector<8x512xf32>
    %97 = tpu.matmul %91, %96, %cst_44 {dimension_numbers = #tpu.dot_dimension_numbers<[1], [0], [0], [1], [0, 0, 1, 1], [], []>} : vector<8x128xbf16>, vector<128x512xbf16>, vector<8x512xf32> -> vector<8x512xf32>
    %98 = arith.index_cast %c3_i32 : i32 to index
    %c0_45 = arith.constant 0 : index
    %c0_46 = arith.constant 0 : index
    %99 = vector.load %arg9[%98, %c0_45, %c0_46] : memref<8x8x512xbf16, #tpu.memory_space<vmem>>, vector<1x8x512xbf16>
    %100 = vector.shape_cast %99 : vector<1x8x512xbf16> to vector<8x512xbf16>
    %101 = arith.extf %100 : vector<8x512xbf16> to vector<8x512xf32>
    %102 = arith.addf %97, %101 : vector<8x512xf32>
    %103 = math.tanh %102 : vector<8x512xf32>
    %104 = vector.extract_strided_slice %103 {offsets = [0, 0], sizes = [8, 384], strides = [1, 1]} : vector<8x512xf32> to vector<8x384xf32>
    %cst_47 = arith.constant 5.000000e-01 : f32
    %105 = vector.broadcast %cst_47 : f32 to vector<8x384xf32>
    %106 = arith.mulf %104, %105 : vector<8x384xf32>
    %cst_48 = arith.constant 5.000000e-01 : f32
    %107 = vector.broadcast %cst_48 : f32 to vector<8x384xf32>
    %108 = arith.addf %106, %107 : vector<8x384xf32>
    %109 = vector.extract_strided_slice %103 {offsets = [0, 384], sizes = [8, 128], strides = [1, 1]} : vector<8x512xf32> to vector<8x128xf32>
    %110 = vector.extract_strided_slice %108 {offsets = [0, 0], sizes = [8, 128], strides = [1, 1]} : vector<8x384xf32> to vector<8x128xf32>
    %111 = vector.extract_strided_slice %108 {offsets = [0, 128], sizes = [8, 128], strides = [1, 1]} : vector<8x384xf32> to vector<8x128xf32>
    %112 = vector.extract_strided_slice %108 {offsets = [0, 256], sizes = [8, 128], strides = [1, 1]} : vector<8x384xf32> to vector<8x128xf32>
    %113 = arith.mulf %111, %88 : vector<8x128xf32>
    %114 = arith.mulf %110, %109 : vector<8x128xf32>
    %115 = arith.addf %113, %114 : vector<8x128xf32>
    %116 = math.tanh %115 : vector<8x128xf32>
    %117 = arith.mulf %112, %116 : vector<8x128xf32>
    %118 = arith.truncf %117 : vector<8x128xf32> to vector<8x128xbf16>
    %119 = arith.index_cast %c3_i32 : i32 to index
    %c0_49 = arith.constant 0 : index
    %c0_50 = arith.constant 0 : index
    %120 = vector.load %arg6[%119, %c0_49, %c0_50] : memref<8x8x128xbf16, #tpu.memory_space<vmem>>, vector<1x8x128xbf16>
    %121 = vector.shape_cast %120 : vector<1x8x128xbf16> to vector<8x128xbf16>
    %122 = vector.shape_cast %118 : vector<8x128xbf16> to vector<1x8x128xbf16>
    tpu.vector_store %arg6[%119, %c0_49, %c0_50], %122 {strides = array<i32>} : memref<8x8x128xbf16, #tpu.memory_space<vmem>>, vector<1x8x128xbf16>,
    %c4_i32 = arith.constant 4 : i32
    %c0_51 = arith.constant 0 : index
    %c0_52 = arith.constant 0 : index
    %123 = vector.load %arg4[%c0_51, %c0_52] : memref<128x512xbf16, #tpu.memory_space<vmem>>, vector<128x512xbf16>
    %cst_53 = arith.constant dense<0.000000e+00> : vector<8x512xf32>
    %124 = tpu.matmul %118, %123, %cst_53 {dimension_numbers = #tpu.dot_dimension_numbers<[1], [0], [0], [1], [0, 0, 1, 1], [], []>} : vector<8x128xbf16>, vector<128x512xbf16>, vector<8x512xf32> -> vector<8x512xf32>
    %125 = arith.index_cast %c4_i32 : i32 to index
    %c0_54 = arith.constant 0 : index
    %c0_55 = arith.constant 0 : index
    %126 = vector.load %arg9[%125, %c0_54, %c0_55] : memref<8x8x512xbf16, #tpu.memory_space<vmem>>, vector<1x8x512xbf16>
    %127 = vector.shape_cast %126 : vector<1x8x512xbf16> to vector<8x512xbf16>
    %128 = arith.extf %127 : vector<8x512xbf16> to vector<8x512xf32>
    %129 = arith.addf %124, %128 : vector<8x512xf32>
    %130 = math.tanh %129 : vector<8x512xf32>
    %131 = vector.extract_strided_slice %130 {offsets = [0, 0], sizes = [8, 384], strides = [1, 1]} : vector<8x512xf32> to vector<8x384xf32>
    %cst_56 = arith.constant 5.000000e-01 : f32
    %132 = vector.broadcast %cst_56 : f32 to vector<8x384xf32>
    %133 = arith.mulf %131, %132 : vector<8x384xf32>
    %cst_57 = arith.constant 5.000000e-01 : f32
    %134 = vector.broadcast %cst_57 : f32 to vector<8x384xf32>
    %135 = arith.addf %133, %134 : vector<8x384xf32>
    %136 = vector.extract_strided_slice %130 {offsets = [0, 384], sizes = [8, 128], strides = [1, 1]} : vector<8x512xf32> to vector<8x128xf32>
    %137 = vector.extract_strided_slice %135 {offsets = [0, 0], sizes = [8, 128], strides = [1, 1]} : vector<8x384xf32> to vector<8x128xf32>
    %138 = vector.extract_strided_slice %135 {offsets = [0, 128], sizes = [8, 128], strides = [1, 1]} : vector<8x384xf32> to vector<8x128xf32>
    %139 = vector.extract_strided_slice %135 {offsets = [0, 256], sizes = [8, 128], strides = [1, 1]} : vector<8x384xf32> to vector<8x128xf32>
    %140 = arith.mulf %138, %115 : vector<8x128xf32>
    %141 = arith.mulf %137, %136 : vector<8x128xf32>
    %142 = arith.addf %140, %141 : vector<8x128xf32>
    %143 = math.tanh %142 : vector<8x128xf32>
    %144 = arith.mulf %139, %143 : vector<8x128xf32>
    %145 = arith.truncf %144 : vector<8x128xf32> to vector<8x128xbf16>
    %146 = arith.index_cast %c4_i32 : i32 to index
    %c0_58 = arith.constant 0 : index
    %c0_59 = arith.constant 0 : index
    %147 = vector.load %arg6[%146, %c0_58, %c0_59] : memref<8x8x128xbf16, #tpu.memory_space<vmem>>, vector<1x8x128xbf16>
    %148 = vector.shape_cast %147 : vector<1x8x128xbf16> to vector<8x128xbf16>
    %149 = vector.shape_cast %145 : vector<8x128xbf16> to vector<1x8x128xbf16>
    tpu.vector_store %arg6[%146, %c0_58, %c0_59], %149 {strides = array<i32>} : memref<8x8x128xbf16, #tpu.memory_space<vmem>>, vector<1x8x128xbf16>,
    %c5_i32 = arith.constant 5 : i32
    %c0_60 = arith.constant 0 : index
    %c0_61 = arith.constant 0 : index
    %150 = vector.load %arg4[%c0_60, %c0_61] : memref<128x512xbf16, #tpu.memory_space<vmem>>, vector<128x512xbf16>
    %cst_62 = arith.constant dense<0.000000e+00> : vector<8x512xf32>
    %151 = tpu.matmul %145, %150, %cst_62 {dimension_numbers = #tpu.dot_dimension_numbers<[1], [0], [0], [1], [0, 0, 1, 1], [], []>} : vector<8x128xbf16>, vector<128x512xbf16>, vector<8x512xf32> -> vector<8x512xf32>
    %152 = arith.index_cast %c5_i32 : i32 to index
    %c0_63 = arith.constant 0 : index
    %c0_64 = arith.constant 0 : index
    %153 = vector.load %arg9[%152, %c0_63, %c0_64] : memref<8x8x512xbf16, #tpu.memory_space<vmem>>, vector<1x8x512xbf16>
    %154 = vector.shape_cast %153 : vector<1x8x512xbf16> to vector<8x512xbf16>
    %155 = arith.extf %154 : vector<8x512xbf16> to vector<8x512xf32>
    %156 = arith.addf %151, %155 : vector<8x512xf32>
    %157 = math.tanh %156 : vector<8x512xf32>
    %158 = vector.extract_strided_slice %157 {offsets = [0, 0], sizes = [8, 384], strides = [1, 1]} : vector<8x512xf32> to vector<8x384xf32>
    %cst_65 = arith.constant 5.000000e-01 : f32
    %159 = vector.broadcast %cst_65 : f32 to vector<8x384xf32>
    %160 = arith.mulf %158, %159 : vector<8x384xf32>
    %cst_66 = arith.constant 5.000000e-01 : f32
    %161 = vector.broadcast %cst_66 : f32 to vector<8x384xf32>
    %162 = arith.addf %160, %161 : vector<8x384xf32>
    %163 = vector.extract_strided_slice %157 {offsets = [0, 384], sizes = [8, 128], strides = [1, 1]} : vector<8x512xf32> to vector<8x128xf32>
    %164 = vector.extract_strided_slice %162 {offsets = [0, 0], sizes = [8, 128], strides = [1, 1]} : vector<8x384xf32> to vector<8x128xf32>
    %165 = vector.extract_strided_slice %162 {offsets = [0, 128], sizes = [8, 128], strides = [1, 1]} : vector<8x384xf32> to vector<8x128xf32>
    %166 = vector.extract_strided_slice %162 {offsets = [0, 256], sizes = [8, 128], strides = [1, 1]} : vector<8x384xf32> to vector<8x128xf32>
    %167 = arith.mulf %165, %142 : vector<8x128xf32>
    %168 = arith.mulf %164, %163 : vector<8x128xf32>
    %169 = arith.addf %167, %168 : vector<8x128xf32>
    %170 = math.tanh %169 : vector<8x128xf32>
    %171 = arith.mulf %166, %170 : vector<8x128xf32>
    %172 = arith.truncf %171 : vector<8x128xf32> to vector<8x128xbf16>
    %173 = arith.index_cast %c5_i32 : i32 to index
    %c0_67 = arith.constant 0 : index
    %c0_68 = arith.constant 0 : index
    %174 = vector.load %arg6[%173, %c0_67, %c0_68] : memref<8x8x128xbf16, #tpu.memory_space<vmem>>, vector<1x8x128xbf16>
    %175 = vector.shape_cast %174 : vector<1x8x128xbf16> to vector<8x128xbf16>
    %176 = vector.shape_cast %172 : vector<8x128xbf16> to vector<1x8x128xbf16>
    tpu.vector_store %arg6[%173, %c0_67, %c0_68], %176 {strides = array<i32>} : memref<8x8x128xbf16, #tpu.memory_space<vmem>>, vector<1x8x128xbf16>,
    %c6_i32 = arith.constant 6 : i32
    %c0_69 = arith.constant 0 : index
    %c0_70 = arith.constant 0 : index
    %177 = vector.load %arg4[%c0_69, %c0_70] : memref<128x512xbf16, #tpu.memory_space<vmem>>, vector<128x512xbf16>
    %cst_71 = arith.constant dense<0.000000e+00> : vector<8x512xf32>
    %178 = tpu.matmul %172, %177, %cst_71 {dimension_numbers = #tpu.dot_dimension_numbers<[1], [0], [0], [1], [0, 0, 1, 1], [], []>} : vector<8x128xbf16>, vector<128x512xbf16>, vector<8x512xf32> -> vector<8x512xf32>
    %179 = arith.index_cast %c6_i32 : i32 to index
    %c0_72 = arith.constant 0 : index
    %c0_73 = arith.constant 0 : index
    %180 = vector.load %arg9[%179, %c0_72, %c0_73] : memref<8x8x512xbf16, #tpu.memory_space<vmem>>, vector<1x8x512xbf16>
    %181 = vector.shape_cast %180 : vector<1x8x512xbf16> to vector<8x512xbf16>
    %182 = arith.extf %181 : vector<8x512xbf16> to vector<8x512xf32>
    %183 = arith.addf %178, %182 : vector<8x512xf32>
    %184 = math.tanh %183 : vector<8x512xf32>
    %185 = vector.extract_strided_slice %184 {offsets = [0, 0], sizes = [8, 384], strides = [1, 1]} : vector<8x512xf32> to vector<8x384xf32>
    %cst_74 = arith.constant 5.000000e-01 : f32
    %186 = vector.broadcast %cst_74 : f32 to vector<8x384xf32>
    %187 = arith.mulf %185, %186 : vector<8x384xf32>
    %cst_75 = arith.constant 5.000000e-01 : f32
    %188 = vector.broadcast %cst_75 : f32 to vector<8x384xf32>
    %189 = arith.addf %187, %188 : vector<8x384xf32>
    %190 = vector.extract_strided_slice %184 {offsets = [0, 384], sizes = [8, 128], strides = [1, 1]} : vector<8x512xf32> to vector<8x128xf32>
    %191 = vector.extract_strided_slice %189 {offsets = [0, 0], sizes = [8, 128], strides = [1, 1]} : vector<8x384xf32> to vector<8x128xf32>
    %192 = vector.extract_strided_slice %189 {offsets = [0, 128], sizes = [8, 128], strides = [1, 1]} : vector<8x384xf32> to vector<8x128xf32>
    %193 = vector.extract_strided_slice %189 {offsets = [0, 256], sizes = [8, 128], strides = [1, 1]} : vector<8x384xf32> to vector<8x128xf32>
    %194 = arith.mulf %192, %169 : vector<8x128xf32>
    %195 = arith.mulf %191, %190 : vector<8x128xf32>
    %196 = arith.addf %194, %195 : vector<8x128xf32>
    %197 = math.tanh %196 : vector<8x128xf32>
    %198 = arith.mulf %193, %197 : vector<8x128xf32>
    %199 = arith.truncf %198 : vector<8x128xf32> to vector<8x128xbf16>
    %200 = arith.index_cast %c6_i32 : i32 to index
    %c0_76 = arith.constant 0 : index
    %c0_77 = arith.constant 0 : index
    %201 = vector.load %arg6[%200, %c0_76, %c0_77] : memref<8x8x128xbf16, #tpu.memory_space<vmem>>, vector<1x8x128xbf16>
    %202 = vector.shape_cast %201 : vector<1x8x128xbf16> to vector<8x128xbf16>
    %203 = vector.shape_cast %199 : vector<8x128xbf16> to vector<1x8x128xbf16>
    tpu.vector_store %arg6[%200, %c0_76, %c0_77], %203 {strides = array<i32>} : memref<8x8x128xbf16, #tpu.memory_space<vmem>>, vector<1x8x128xbf16>,
    %c7_i32 = arith.constant 7 : i32
    %c0_78 = arith.constant 0 : index
    %c0_79 = arith.constant 0 : index
    %204 = vector.load %arg4[%c0_78, %c0_79] : memref<128x512xbf16, #tpu.memory_space<vmem>>, vector<128x512xbf16>
    %cst_80 = arith.constant dense<0.000000e+00> : vector<8x512xf32>
    %205 = tpu.matmul %199, %204, %cst_80 {dimension_numbers = #tpu.dot_dimension_numbers<[1], [0], [0], [1], [0, 0, 1, 1], [], []>} : vector<8x128xbf16>, vector<128x512xbf16>, vector<8x512xf32> -> vector<8x512xf32>
    %206 = arith.index_cast %c7_i32 : i32 to index
    %c0_81 = arith.constant 0 : index
    %c0_82 = arith.constant 0 : index
    %207 = vector.load %arg9[%206, %c0_81, %c0_82] : memref<8x8x512xbf16, #tpu.memory_space<vmem>>, vector<1x8x512xbf16>
    %208 = vector.shape_cast %207 : vector<1x8x512xbf16> to vector<8x512xbf16>
    %209 = arith.extf %208 : vector<8x512xbf16> to vector<8x512xf32>
    %210 = arith.addf %205, %209 : vector<8x512xf32>
    %211 = math.tanh %210 : vector<8x512xf32>
    %212 = vector.extract_strided_slice %211 {offsets = [0, 0], sizes = [8, 384], strides = [1, 1]} : vector<8x512xf32> to vector<8x384xf32>
    %cst_83 = arith.constant 5.000000e-01 : f32
    %213 = vector.broadcast %cst_83 : f32 to vector<8x384xf32>
    %214 = arith.mulf %212, %213 : vector<8x384xf32>
    %cst_84 = arith.constant 5.000000e-01 : f32
    %215 = vector.broadcast %cst_84 : f32 to vector<8x384xf32>
    %216 = arith.addf %214, %215 : vector<8x384xf32>
    %217 = vector.extract_strided_slice %211 {offsets = [0, 384], sizes = [8, 128], strides = [1, 1]} : vector<8x512xf32> to vector<8x128xf32>
    %218 = vector.extract_strided_slice %216 {offsets = [0, 0], sizes = [8, 128], strides = [1, 1]} : vector<8x384xf32> to vector<8x128xf32>
    %219 = vector.extract_strided_slice %216 {offsets = [0, 128], sizes = [8, 128], strides = [1, 1]} : vector<8x384xf32> to vector<8x128xf32>
    %220 = vector.extract_strided_slice %216 {offsets = [0, 256], sizes = [8, 128], strides = [1, 1]} : vector<8x384xf32> to vector<8x128xf32>
    %221 = arith.mulf %219, %196 : vector<8x128xf32>
    %222 = arith.mulf %218, %217 : vector<8x128xf32>
    %223 = arith.addf %221, %222 : vector<8x128xf32>
    %224 = math.tanh %223 : vector<8x128xf32>
    %225 = arith.mulf %220, %224 : vector<8x128xf32>
    %226 = arith.truncf %225 : vector<8x128xf32> to vector<8x128xbf16>
    %227 = arith.index_cast %c7_i32 : i32 to index
    %c0_85 = arith.constant 0 : index
    %c0_86 = arith.constant 0 : index
    %228 = vector.load %arg6[%227, %c0_85, %c0_86] : memref<8x8x128xbf16, #tpu.memory_space<vmem>>, vector<1x8x128xbf16>
    %229 = vector.shape_cast %228 : vector<1x8x128xbf16> to vector<8x128xbf16>
    %230 = vector.shape_cast %226 : vector<8x128xbf16> to vector<1x8x128xbf16>
    tpu.vector_store %arg6[%227, %c0_85, %c0_86], %230 {strides = array<i32>} : memref<8x8x128xbf16, #tpu.memory_space<vmem>>, vector<1x8x128xbf16>,
    %c8_i32 = arith.constant 8 : i32
    %c0_87 = arith.constant 0 : index
    %c0_88 = arith.constant 0 : index
    %231 = vector.load %arg7[%c0_87, %c0_88] : memref<8x128xbf16, #tpu.memory_space<vmem>>, vector<8x128xbf16>
    tpu.vector_store %arg7[%c0_87, %c0_88], %226 {strides = array<i32>} : memref<8x128xbf16, #tpu.memory_space<vmem>>, vector<8x128xbf16>,
    %c0_89 = arith.constant 0 : index
    %c0_90 = arith.constant 0 : index
    %232 = vector.load %arg8[%c0_89, %c0_90] : memref<8x128xf32, #tpu.memory_space<vmem>>, vector<8x128xf32>
    tpu.vector_store %arg8[%c0_89, %c0_90], %223 {strides = array<i32>} : memref<8x128xf32, #tpu.memory_space<vmem>>, vector<8x128xf32>,
    return
  }
  func.func @transform_0(%arg0: i32, %arg1: i32) -> (i32, i32, i32) {
    %c0_i32 = arith.constant 0 : i32
    %c0_i32_0 = arith.constant 0 : i32
    return %arg1, %arg0, %c0_i32 : i32, i32, i32
  }
  func.func @transform_1(%arg0: i32, %arg1: i32) -> (i32, i32) {
    %c0_i32 = arith.constant 0 : i32
    %c0_i32_0 = arith.constant 0 : i32
    %c0_i32_1 = arith.constant 0 : i32
    return %c0_i32, %c0_i32_0 : i32, i32
  }
  func.func @transform_2(%arg0: i32, %arg1: i32) -> (i32, i32) {
    %c0_i32 = arith.constant 0 : i32
    %c0_i32_0 = arith.constant 0 : i32
    %c0_i32_1 = arith.constant 0 : i32
    return %c0_i32, %c0_i32_0 : i32, i32
  }
  func.func @transform_3(%arg0: i32, %arg1: i32) -> (i32, i32) {
    %c0_i32 = arith.constant 0 : i32
    %c0_i32_0 = arith.constant 0 : i32
    %c0_i32_1 = arith.constant 0 : i32
    return %c0_i32, %c0_i32_0 : i32, i32
  }
  func.func @transform_4(%arg0: i32, %arg1: i32) -> (i32, i32, i32) {
    %c0_i32 = arith.constant 0 : i32
    %c0_i32_0 = arith.constant 0 : i32
    return %arg1, %arg0, %c0_i32 : i32, i32, i32
  }
}

module attributes {stable_mosaic.version = 11 : i64} {
  func.func @kernel(%arg0: i32, %arg1: i32, %arg2: memref<8x8x128xbf16, #tpu.memory_space<vmem>>, %arg3: memref<128x512xbf16, #tpu.memory_space<vmem>>, %arg4: memref<128x512xbf16, #tpu.memory_space<vmem>>, %arg5: memref<1x512xf32, #tpu.memory_space<vmem>>, %arg6: memref<128x4xbf16, #tpu.memory_space<vmem>>, %arg7: memref<1x4xf32, #tpu.memory_space<vmem>>, %arg8: memref<8x4xf32, #tpu.memory_space<vmem>>, %arg9: memref<8x128xbf16, #tpu.memory_space<vmem>>, %arg10: memref<8x128xf32, #tpu.memory_space<vmem>>, %arg11: memref<8x8x512xbf16, #tpu.memory_space<vmem>>) attributes {dimension_semantics = [#tpu.dimension_semantics<parallel>, #tpu.dimension_semantics<arbitrary>], iteration_bounds = array<i64: 1, 1>, scalar_prefetch = 0 : i64, scratch_operands = 3 : i64, tpu.core_type = #tpu.core_type<tc>, window_params = [{transform_indices = @transform_0, window_bounds = array<i64: 8, 8, 128>}, {pipeline_mode = #tpu.pipeline_mode<synchronous>, transform_indices = @transform_1, window_bounds = array<i64: 128, 512>}, {pipeline_mode = #tpu.pipeline_mode<synchronous>, transform_indices = @transform_2, window_bounds = array<i64: 128, 512>}, {pipeline_mode = #tpu.pipeline_mode<synchronous>, transform_indices = @transform_3, window_bounds = array<i64: 1, 512>}, {pipeline_mode = #tpu.pipeline_mode<synchronous>, transform_indices = @transform_4, window_bounds = array<i64: 128, 4>}, {pipeline_mode = #tpu.pipeline_mode<synchronous>, transform_indices = @transform_5, window_bounds = array<i64: 1, 4>}, {transform_indices = @transform_6, window_bounds = array<i64: 8, 4>}]} {
    %c0_i32 = arith.constant 0 : i32
    %0 = arith.cmpi eq, %arg1, %c0_i32 : i32
    %1 = arith.extui %0 : i1 to i32
    %c0_i32_0 = arith.constant 0 : i32
    %2 = arith.cmpi ne, %1, %c0_i32_0 : i32
    scf.if %2 {
      %cst_77 = arith.constant 0.000000e+00 : bf16
      %204 = vector.broadcast %cst_77 : bf16 to vector<8x128xbf16>
      %c0_78 = arith.constant 0 : index
      %c0_79 = arith.constant 0 : index
      %205 = vector.load %arg9[%c0_78, %c0_79] : memref<8x128xbf16, #tpu.memory_space<vmem>>, vector<8x128xbf16>
      tpu.vector_store %arg9[%c0_78, %c0_79], %204 {strides = array<i32>} : memref<8x128xbf16, #tpu.memory_space<vmem>>, vector<8x128xbf16>,
      %cst_80 = arith.constant 0.000000e+00 : f32
      %206 = vector.broadcast %cst_80 : f32 to vector<8x128xf32>
      %c0_81 = arith.constant 0 : index
      %c0_82 = arith.constant 0 : index
      %207 = vector.load %arg10[%c0_81, %c0_82] : memref<8x128xf32, #tpu.memory_space<vmem>>, vector<8x128xf32>
      tpu.vector_store %arg10[%c0_81, %c0_82], %206 {strides = array<i32>} : memref<8x128xf32, #tpu.memory_space<vmem>>, vector<8x128xf32>,
    } else {
    }
    %c0 = arith.constant 0 : index
    %c0_1 = arith.constant 0 : index
    %c0_2 = arith.constant 0 : index
    %3 = vector.load %arg2[%c0, %c0_1, %c0_2] : memref<8x8x128xbf16, #tpu.memory_space<vmem>>, vector<8x8x128xbf16>
    %4 = vector.shape_cast %3 : vector<8x8x128xbf16> to vector<64x128xbf16>
    %c0_3 = arith.constant 0 : index
    %c0_4 = arith.constant 0 : index
    %5 = vector.load %arg3[%c0_3, %c0_4] : memref<128x512xbf16, #tpu.memory_space<vmem>>, vector<128x512xbf16>
    %cst = arith.constant dense<0.000000e+00> : vector<64x512xf32>
    %6 = tpu.matmul %4, %5, %cst {dimension_numbers = #tpu.dot_dimension_numbers<[1], [0], [0], [1], [0, 0, 1, 1], [], []>} : vector<64x128xbf16>, vector<128x512xbf16>, vector<64x512xf32> -> vector<64x512xf32>
    %c0_5 = arith.constant 0 : index
    %c0_6 = arith.constant 0 : index
    %7 = vector.load %arg5[%c0_5, %c0_6] : memref<1x512xf32, #tpu.memory_space<vmem>>, vector<1x512xf32>
    %8 = vector.broadcast %7 : vector<1x512xf32> to vector<64x512xf32>
    %9 = arith.addf %6, %8 : vector<64x512xf32>
    %10 = vector.shape_cast %9 : vector<64x512xf32> to vector<8x8x512xf32>
    %11 = arith.truncf %10 : vector<8x8x512xf32> to vector<8x8x512xbf16>
    %c0_7 = arith.constant 0 : index
    %c0_8 = arith.constant 0 : index
    %c0_9 = arith.constant 0 : index
    %12 = vector.load %arg11[%c0_7, %c0_8, %c0_9] : memref<8x8x512xbf16, #tpu.memory_space<vmem>>, vector<8x8x512xbf16>
    tpu.vector_store %arg11[%c0_7, %c0_8, %c0_9], %11 {strides = array<i32>} : memref<8x8x512xbf16, #tpu.memory_space<vmem>>, vector<8x8x512xbf16>,
    %c0_10 = arith.constant 0 : index
    %c0_11 = arith.constant 0 : index
    %13 = vector.load %arg9[%c0_10, %c0_11] : memref<8x128xbf16, #tpu.memory_space<vmem>>, vector<8x128xbf16>
    %c0_12 = arith.constant 0 : index
    %c0_13 = arith.constant 0 : index
    %14 = vector.load %arg10[%c0_12, %c0_13] : memref<8x128xf32, #tpu.memory_space<vmem>>, vector<8x128xf32>
    %c0_i32_14 = arith.constant 0 : i32
    %c0_15 = arith.constant 0 : index
    %c0_16 = arith.constant 0 : index
    %15 = vector.load %arg4[%c0_15, %c0_16] : memref<128x512xbf16, #tpu.memory_space<vmem>>, vector<128x512xbf16>
    %cst_17 = arith.constant dense<0.000000e+00> : vector<8x512xf32>
    %16 = tpu.matmul %13, %15, %cst_17 {dimension_numbers = #tpu.dot_dimension_numbers<[1], [0], [0], [1], [0, 0, 1, 1], [], []>} : vector<8x128xbf16>, vector<128x512xbf16>, vector<8x512xf32> -> vector<8x512xf32>
    %17 = arith.index_cast %c0_i32_14 : i32 to index
    %c0_18 = arith.constant 0 : index
    %c0_19 = arith.constant 0 : index
    %18 = vector.load %arg11[%17, %c0_18, %c0_19] : memref<8x8x512xbf16, #tpu.memory_space<vmem>>, vector<1x8x512xbf16>
    %19 = vector.shape_cast %18 : vector<1x8x512xbf16> to vector<8x512xbf16>
    %20 = arith.extf %19 : vector<8x512xbf16> to vector<8x512xf32>
    %21 = arith.addf %16, %20 : vector<8x512xf32>
    %22 = math.tanh %21 : vector<8x512xf32>
    %23 = vector.extract_strided_slice %22 {offsets = [0, 0], sizes = [8, 384], strides = [1, 1]} : vector<8x512xf32> to vector<8x384xf32>
    %cst_20 = arith.constant 5.000000e-01 : f32
    %24 = vector.broadcast %cst_20 : f32 to vector<8x384xf32>
    %25 = arith.mulf %23, %24 : vector<8x384xf32>
    %cst_21 = arith.constant 5.000000e-01 : f32
    %26 = vector.broadcast %cst_21 : f32 to vector<8x384xf32>
    %27 = arith.addf %25, %26 : vector<8x384xf32>
    %28 = vector.extract_strided_slice %22 {offsets = [0, 384], sizes = [8, 128], strides = [1, 1]} : vector<8x512xf32> to vector<8x128xf32>
    %29 = vector.extract_strided_slice %27 {offsets = [0, 0], sizes = [8, 128], strides = [1, 1]} : vector<8x384xf32> to vector<8x128xf32>
    %30 = vector.extract_strided_slice %27 {offsets = [0, 128], sizes = [8, 128], strides = [1, 1]} : vector<8x384xf32> to vector<8x128xf32>
    %31 = vector.extract_strided_slice %27 {offsets = [0, 256], sizes = [8, 128], strides = [1, 1]} : vector<8x384xf32> to vector<8x128xf32>
    %32 = arith.mulf %30, %14 : vector<8x128xf32>
    %33 = arith.mulf %29, %28 : vector<8x128xf32>
    %34 = arith.addf %32, %33 : vector<8x128xf32>
    %35 = math.tanh %34 : vector<8x128xf32>
    %36 = arith.mulf %31, %35 : vector<8x128xf32>
    %37 = arith.truncf %36 : vector<8x128xf32> to vector<8x128xbf16>
    %c1_i32 = arith.constant 1 : i32
    %c0_22 = arith.constant 0 : index
    %c0_23 = arith.constant 0 : index
    %38 = vector.load %arg4[%c0_22, %c0_23] : memref<128x512xbf16, #tpu.memory_space<vmem>>, vector<128x512xbf16>
    %cst_24 = arith.constant dense<0.000000e+00> : vector<8x512xf32>
    %39 = tpu.matmul %37, %38, %cst_24 {dimension_numbers = #tpu.dot_dimension_numbers<[1], [0], [0], [1], [0, 0, 1, 1], [], []>} : vector<8x128xbf16>, vector<128x512xbf16>, vector<8x512xf32> -> vector<8x512xf32>
    %40 = arith.index_cast %c1_i32 : i32 to index
    %c0_25 = arith.constant 0 : index
    %c0_26 = arith.constant 0 : index
    %41 = vector.load %arg11[%40, %c0_25, %c0_26] : memref<8x8x512xbf16, #tpu.memory_space<vmem>>, vector<1x8x512xbf16>
    %42 = vector.shape_cast %41 : vector<1x8x512xbf16> to vector<8x512xbf16>
    %43 = arith.extf %42 : vector<8x512xbf16> to vector<8x512xf32>
    %44 = arith.addf %39, %43 : vector<8x512xf32>
    %45 = math.tanh %44 : vector<8x512xf32>
    %46 = vector.extract_strided_slice %45 {offsets = [0, 0], sizes = [8, 384], strides = [1, 1]} : vector<8x512xf32> to vector<8x384xf32>
    %cst_27 = arith.constant 5.000000e-01 : f32
    %47 = vector.broadcast %cst_27 : f32 to vector<8x384xf32>
    %48 = arith.mulf %46, %47 : vector<8x384xf32>
    %cst_28 = arith.constant 5.000000e-01 : f32
    %49 = vector.broadcast %cst_28 : f32 to vector<8x384xf32>
    %50 = arith.addf %48, %49 : vector<8x384xf32>
    %51 = vector.extract_strided_slice %45 {offsets = [0, 384], sizes = [8, 128], strides = [1, 1]} : vector<8x512xf32> to vector<8x128xf32>
    %52 = vector.extract_strided_slice %50 {offsets = [0, 0], sizes = [8, 128], strides = [1, 1]} : vector<8x384xf32> to vector<8x128xf32>
    %53 = vector.extract_strided_slice %50 {offsets = [0, 128], sizes = [8, 128], strides = [1, 1]} : vector<8x384xf32> to vector<8x128xf32>
    %54 = vector.extract_strided_slice %50 {offsets = [0, 256], sizes = [8, 128], strides = [1, 1]} : vector<8x384xf32> to vector<8x128xf32>
    %55 = arith.mulf %53, %34 : vector<8x128xf32>
    %56 = arith.mulf %52, %51 : vector<8x128xf32>
    %57 = arith.addf %55, %56 : vector<8x128xf32>
    %58 = math.tanh %57 : vector<8x128xf32>
    %59 = arith.mulf %54, %58 : vector<8x128xf32>
    %60 = arith.truncf %59 : vector<8x128xf32> to vector<8x128xbf16>
    %c2_i32 = arith.constant 2 : i32
    %c0_29 = arith.constant 0 : index
    %c0_30 = arith.constant 0 : index
    %61 = vector.load %arg4[%c0_29, %c0_30] : memref<128x512xbf16, #tpu.memory_space<vmem>>, vector<128x512xbf16>
    %cst_31 = arith.constant dense<0.000000e+00> : vector<8x512xf32>
    %62 = tpu.matmul %60, %61, %cst_31 {dimension_numbers = #tpu.dot_dimension_numbers<[1], [0], [0], [1], [0, 0, 1, 1], [], []>} : vector<8x128xbf16>, vector<128x512xbf16>, vector<8x512xf32> -> vector<8x512xf32>
    %63 = arith.index_cast %c2_i32 : i32 to index
    %c0_32 = arith.constant 0 : index
    %c0_33 = arith.constant 0 : index
    %64 = vector.load %arg11[%63, %c0_32, %c0_33] : memref<8x8x512xbf16, #tpu.memory_space<vmem>>, vector<1x8x512xbf16>
    %65 = vector.shape_cast %64 : vector<1x8x512xbf16> to vector<8x512xbf16>
    %66 = arith.extf %65 : vector<8x512xbf16> to vector<8x512xf32>
    %67 = arith.addf %62, %66 : vector<8x512xf32>
    %68 = math.tanh %67 : vector<8x512xf32>
    %69 = vector.extract_strided_slice %68 {offsets = [0, 0], sizes = [8, 384], strides = [1, 1]} : vector<8x512xf32> to vector<8x384xf32>
    %cst_34 = arith.constant 5.000000e-01 : f32
    %70 = vector.broadcast %cst_34 : f32 to vector<8x384xf32>
    %71 = arith.mulf %69, %70 : vector<8x384xf32>
    %cst_35 = arith.constant 5.000000e-01 : f32
    %72 = vector.broadcast %cst_35 : f32 to vector<8x384xf32>
    %73 = arith.addf %71, %72 : vector<8x384xf32>
    %74 = vector.extract_strided_slice %68 {offsets = [0, 384], sizes = [8, 128], strides = [1, 1]} : vector<8x512xf32> to vector<8x128xf32>
    %75 = vector.extract_strided_slice %73 {offsets = [0, 0], sizes = [8, 128], strides = [1, 1]} : vector<8x384xf32> to vector<8x128xf32>
    %76 = vector.extract_strided_slice %73 {offsets = [0, 128], sizes = [8, 128], strides = [1, 1]} : vector<8x384xf32> to vector<8x128xf32>
    %77 = vector.extract_strided_slice %73 {offsets = [0, 256], sizes = [8, 128], strides = [1, 1]} : vector<8x384xf32> to vector<8x128xf32>
    %78 = arith.mulf %76, %57 : vector<8x128xf32>
    %79 = arith.mulf %75, %74 : vector<8x128xf32>
    %80 = arith.addf %78, %79 : vector<8x128xf32>
    %81 = math.tanh %80 : vector<8x128xf32>
    %82 = arith.mulf %77, %81 : vector<8x128xf32>
    %83 = arith.truncf %82 : vector<8x128xf32> to vector<8x128xbf16>
    %c3_i32 = arith.constant 3 : i32
    %c0_36 = arith.constant 0 : index
    %c0_37 = arith.constant 0 : index
    %84 = vector.load %arg4[%c0_36, %c0_37] : memref<128x512xbf16, #tpu.memory_space<vmem>>, vector<128x512xbf16>
    %cst_38 = arith.constant dense<0.000000e+00> : vector<8x512xf32>
    %85 = tpu.matmul %83, %84, %cst_38 {dimension_numbers = #tpu.dot_dimension_numbers<[1], [0], [0], [1], [0, 0, 1, 1], [], []>} : vector<8x128xbf16>, vector<128x512xbf16>, vector<8x512xf32> -> vector<8x512xf32>
    %86 = arith.index_cast %c3_i32 : i32 to index
    %c0_39 = arith.constant 0 : index
    %c0_40 = arith.constant 0 : index
    %87 = vector.load %arg11[%86, %c0_39, %c0_40] : memref<8x8x512xbf16, #tpu.memory_space<vmem>>, vector<1x8x512xbf16>
    %88 = vector.shape_cast %87 : vector<1x8x512xbf16> to vector<8x512xbf16>
    %89 = arith.extf %88 : vector<8x512xbf16> to vector<8x512xf32>
    %90 = arith.addf %85, %89 : vector<8x512xf32>
    %91 = math.tanh %90 : vector<8x512xf32>
    %92 = vector.extract_strided_slice %91 {offsets = [0, 0], sizes = [8, 384], strides = [1, 1]} : vector<8x512xf32> to vector<8x384xf32>
    %cst_41 = arith.constant 5.000000e-01 : f32
    %93 = vector.broadcast %cst_41 : f32 to vector<8x384xf32>
    %94 = arith.mulf %92, %93 : vector<8x384xf32>
    %cst_42 = arith.constant 5.000000e-01 : f32
    %95 = vector.broadcast %cst_42 : f32 to vector<8x384xf32>
    %96 = arith.addf %94, %95 : vector<8x384xf32>
    %97 = vector.extract_strided_slice %91 {offsets = [0, 384], sizes = [8, 128], strides = [1, 1]} : vector<8x512xf32> to vector<8x128xf32>
    %98 = vector.extract_strided_slice %96 {offsets = [0, 0], sizes = [8, 128], strides = [1, 1]} : vector<8x384xf32> to vector<8x128xf32>
    %99 = vector.extract_strided_slice %96 {offsets = [0, 128], sizes = [8, 128], strides = [1, 1]} : vector<8x384xf32> to vector<8x128xf32>
    %100 = vector.extract_strided_slice %96 {offsets = [0, 256], sizes = [8, 128], strides = [1, 1]} : vector<8x384xf32> to vector<8x128xf32>
    %101 = arith.mulf %99, %80 : vector<8x128xf32>
    %102 = arith.mulf %98, %97 : vector<8x128xf32>
    %103 = arith.addf %101, %102 : vector<8x128xf32>
    %104 = math.tanh %103 : vector<8x128xf32>
    %105 = arith.mulf %100, %104 : vector<8x128xf32>
    %106 = arith.truncf %105 : vector<8x128xf32> to vector<8x128xbf16>
    %c4_i32 = arith.constant 4 : i32
    %c0_43 = arith.constant 0 : index
    %c0_44 = arith.constant 0 : index
    %107 = vector.load %arg4[%c0_43, %c0_44] : memref<128x512xbf16, #tpu.memory_space<vmem>>, vector<128x512xbf16>
    %cst_45 = arith.constant dense<0.000000e+00> : vector<8x512xf32>
    %108 = tpu.matmul %106, %107, %cst_45 {dimension_numbers = #tpu.dot_dimension_numbers<[1], [0], [0], [1], [0, 0, 1, 1], [], []>} : vector<8x128xbf16>, vector<128x512xbf16>, vector<8x512xf32> -> vector<8x512xf32>
    %109 = arith.index_cast %c4_i32 : i32 to index
    %c0_46 = arith.constant 0 : index
    %c0_47 = arith.constant 0 : index
    %110 = vector.load %arg11[%109, %c0_46, %c0_47] : memref<8x8x512xbf16, #tpu.memory_space<vmem>>, vector<1x8x512xbf16>
    %111 = vector.shape_cast %110 : vector<1x8x512xbf16> to vector<8x512xbf16>
    %112 = arith.extf %111 : vector<8x512xbf16> to vector<8x512xf32>
    %113 = arith.addf %108, %112 : vector<8x512xf32>
    %114 = math.tanh %113 : vector<8x512xf32>
    %115 = vector.extract_strided_slice %114 {offsets = [0, 0], sizes = [8, 384], strides = [1, 1]} : vector<8x512xf32> to vector<8x384xf32>
    %cst_48 = arith.constant 5.000000e-01 : f32
    %116 = vector.broadcast %cst_48 : f32 to vector<8x384xf32>
    %117 = arith.mulf %115, %116 : vector<8x384xf32>
    %cst_49 = arith.constant 5.000000e-01 : f32
    %118 = vector.broadcast %cst_49 : f32 to vector<8x384xf32>
    %119 = arith.addf %117, %118 : vector<8x384xf32>
    %120 = vector.extract_strided_slice %114 {offsets = [0, 384], sizes = [8, 128], strides = [1, 1]} : vector<8x512xf32> to vector<8x128xf32>
    %121 = vector.extract_strided_slice %119 {offsets = [0, 0], sizes = [8, 128], strides = [1, 1]} : vector<8x384xf32> to vector<8x128xf32>
    %122 = vector.extract_strided_slice %119 {offsets = [0, 128], sizes = [8, 128], strides = [1, 1]} : vector<8x384xf32> to vector<8x128xf32>
    %123 = vector.extract_strided_slice %119 {offsets = [0, 256], sizes = [8, 128], strides = [1, 1]} : vector<8x384xf32> to vector<8x128xf32>
    %124 = arith.mulf %122, %103 : vector<8x128xf32>
    %125 = arith.mulf %121, %120 : vector<8x128xf32>
    %126 = arith.addf %124, %125 : vector<8x128xf32>
    %127 = math.tanh %126 : vector<8x128xf32>
    %128 = arith.mulf %123, %127 : vector<8x128xf32>
    %129 = arith.truncf %128 : vector<8x128xf32> to vector<8x128xbf16>
    %c5_i32 = arith.constant 5 : i32
    %c0_50 = arith.constant 0 : index
    %c0_51 = arith.constant 0 : index
    %130 = vector.load %arg4[%c0_50, %c0_51] : memref<128x512xbf16, #tpu.memory_space<vmem>>, vector<128x512xbf16>
    %cst_52 = arith.constant dense<0.000000e+00> : vector<8x512xf32>
    %131 = tpu.matmul %129, %130, %cst_52 {dimension_numbers = #tpu.dot_dimension_numbers<[1], [0], [0], [1], [0, 0, 1, 1], [], []>} : vector<8x128xbf16>, vector<128x512xbf16>, vector<8x512xf32> -> vector<8x512xf32>
    %132 = arith.index_cast %c5_i32 : i32 to index
    %c0_53 = arith.constant 0 : index
    %c0_54 = arith.constant 0 : index
    %133 = vector.load %arg11[%132, %c0_53, %c0_54] : memref<8x8x512xbf16, #tpu.memory_space<vmem>>, vector<1x8x512xbf16>
    %134 = vector.shape_cast %133 : vector<1x8x512xbf16> to vector<8x512xbf16>
    %135 = arith.extf %134 : vector<8x512xbf16> to vector<8x512xf32>
    %136 = arith.addf %131, %135 : vector<8x512xf32>
    %137 = math.tanh %136 : vector<8x512xf32>
    %138 = vector.extract_strided_slice %137 {offsets = [0, 0], sizes = [8, 384], strides = [1, 1]} : vector<8x512xf32> to vector<8x384xf32>
    %cst_55 = arith.constant 5.000000e-01 : f32
    %139 = vector.broadcast %cst_55 : f32 to vector<8x384xf32>
    %140 = arith.mulf %138, %139 : vector<8x384xf32>
    %cst_56 = arith.constant 5.000000e-01 : f32
    %141 = vector.broadcast %cst_56 : f32 to vector<8x384xf32>
    %142 = arith.addf %140, %141 : vector<8x384xf32>
    %143 = vector.extract_strided_slice %137 {offsets = [0, 384], sizes = [8, 128], strides = [1, 1]} : vector<8x512xf32> to vector<8x128xf32>
    %144 = vector.extract_strided_slice %142 {offsets = [0, 0], sizes = [8, 128], strides = [1, 1]} : vector<8x384xf32> to vector<8x128xf32>
    %145 = vector.extract_strided_slice %142 {offsets = [0, 128], sizes = [8, 128], strides = [1, 1]} : vector<8x384xf32> to vector<8x128xf32>
    %146 = vector.extract_strided_slice %142 {offsets = [0, 256], sizes = [8, 128], strides = [1, 1]} : vector<8x384xf32> to vector<8x128xf32>
    %147 = arith.mulf %145, %126 : vector<8x128xf32>
    %148 = arith.mulf %144, %143 : vector<8x128xf32>
    %149 = arith.addf %147, %148 : vector<8x128xf32>
    %150 = math.tanh %149 : vector<8x128xf32>
    %151 = arith.mulf %146, %150 : vector<8x128xf32>
    %152 = arith.truncf %151 : vector<8x128xf32> to vector<8x128xbf16>
    %c6_i32 = arith.constant 6 : i32
    %c0_57 = arith.constant 0 : index
    %c0_58 = arith.constant 0 : index
    %153 = vector.load %arg4[%c0_57, %c0_58] : memref<128x512xbf16, #tpu.memory_space<vmem>>, vector<128x512xbf16>
    %cst_59 = arith.constant dense<0.000000e+00> : vector<8x512xf32>
    %154 = tpu.matmul %152, %153, %cst_59 {dimension_numbers = #tpu.dot_dimension_numbers<[1], [0], [0], [1], [0, 0, 1, 1], [], []>} : vector<8x128xbf16>, vector<128x512xbf16>, vector<8x512xf32> -> vector<8x512xf32>
    %155 = arith.index_cast %c6_i32 : i32 to index
    %c0_60 = arith.constant 0 : index
    %c0_61 = arith.constant 0 : index
    %156 = vector.load %arg11[%155, %c0_60, %c0_61] : memref<8x8x512xbf16, #tpu.memory_space<vmem>>, vector<1x8x512xbf16>
    %157 = vector.shape_cast %156 : vector<1x8x512xbf16> to vector<8x512xbf16>
    %158 = arith.extf %157 : vector<8x512xbf16> to vector<8x512xf32>
    %159 = arith.addf %154, %158 : vector<8x512xf32>
    %160 = math.tanh %159 : vector<8x512xf32>
    %161 = vector.extract_strided_slice %160 {offsets = [0, 0], sizes = [8, 384], strides = [1, 1]} : vector<8x512xf32> to vector<8x384xf32>
    %cst_62 = arith.constant 5.000000e-01 : f32
    %162 = vector.broadcast %cst_62 : f32 to vector<8x384xf32>
    %163 = arith.mulf %161, %162 : vector<8x384xf32>
    %cst_63 = arith.constant 5.000000e-01 : f32
    %164 = vector.broadcast %cst_63 : f32 to vector<8x384xf32>
    %165 = arith.addf %163, %164 : vector<8x384xf32>
    %166 = vector.extract_strided_slice %160 {offsets = [0, 384], sizes = [8, 128], strides = [1, 1]} : vector<8x512xf32> to vector<8x128xf32>
    %167 = vector.extract_strided_slice %165 {offsets = [0, 0], sizes = [8, 128], strides = [1, 1]} : vector<8x384xf32> to vector<8x128xf32>
    %168 = vector.extract_strided_slice %165 {offsets = [0, 128], sizes = [8, 128], strides = [1, 1]} : vector<8x384xf32> to vector<8x128xf32>
    %169 = vector.extract_strided_slice %165 {offsets = [0, 256], sizes = [8, 128], strides = [1, 1]} : vector<8x384xf32> to vector<8x128xf32>
    %170 = arith.mulf %168, %149 : vector<8x128xf32>
    %171 = arith.mulf %167, %166 : vector<8x128xf32>
    %172 = arith.addf %170, %171 : vector<8x128xf32>
    %173 = math.tanh %172 : vector<8x128xf32>
    %174 = arith.mulf %169, %173 : vector<8x128xf32>
    %175 = arith.truncf %174 : vector<8x128xf32> to vector<8x128xbf16>
    %c7_i32 = arith.constant 7 : i32
    %c0_64 = arith.constant 0 : index
    %c0_65 = arith.constant 0 : index
    %176 = vector.load %arg4[%c0_64, %c0_65] : memref<128x512xbf16, #tpu.memory_space<vmem>>, vector<128x512xbf16>
    %cst_66 = arith.constant dense<0.000000e+00> : vector<8x512xf32>
    %177 = tpu.matmul %175, %176, %cst_66 {dimension_numbers = #tpu.dot_dimension_numbers<[1], [0], [0], [1], [0, 0, 1, 1], [], []>} : vector<8x128xbf16>, vector<128x512xbf16>, vector<8x512xf32> -> vector<8x512xf32>
    %178 = arith.index_cast %c7_i32 : i32 to index
    %c0_67 = arith.constant 0 : index
    %c0_68 = arith.constant 0 : index
    %179 = vector.load %arg11[%178, %c0_67, %c0_68] : memref<8x8x512xbf16, #tpu.memory_space<vmem>>, vector<1x8x512xbf16>
    %180 = vector.shape_cast %179 : vector<1x8x512xbf16> to vector<8x512xbf16>
    %181 = arith.extf %180 : vector<8x512xbf16> to vector<8x512xf32>
    %182 = arith.addf %177, %181 : vector<8x512xf32>
    %183 = math.tanh %182 : vector<8x512xf32>
    %184 = vector.extract_strided_slice %183 {offsets = [0, 0], sizes = [8, 384], strides = [1, 1]} : vector<8x512xf32> to vector<8x384xf32>
    %cst_69 = arith.constant 5.000000e-01 : f32
    %185 = vector.broadcast %cst_69 : f32 to vector<8x384xf32>
    %186 = arith.mulf %184, %185 : vector<8x384xf32>
    %cst_70 = arith.constant 5.000000e-01 : f32
    %187 = vector.broadcast %cst_70 : f32 to vector<8x384xf32>
    %188 = arith.addf %186, %187 : vector<8x384xf32>
    %189 = vector.extract_strided_slice %183 {offsets = [0, 384], sizes = [8, 128], strides = [1, 1]} : vector<8x512xf32> to vector<8x128xf32>
    %190 = vector.extract_strided_slice %188 {offsets = [0, 0], sizes = [8, 128], strides = [1, 1]} : vector<8x384xf32> to vector<8x128xf32>
    %191 = vector.extract_strided_slice %188 {offsets = [0, 128], sizes = [8, 128], strides = [1, 1]} : vector<8x384xf32> to vector<8x128xf32>
    %192 = vector.extract_strided_slice %188 {offsets = [0, 256], sizes = [8, 128], strides = [1, 1]} : vector<8x384xf32> to vector<8x128xf32>
    %193 = arith.mulf %191, %172 : vector<8x128xf32>
    %194 = arith.mulf %190, %189 : vector<8x128xf32>
    %195 = arith.addf %193, %194 : vector<8x128xf32>
    %196 = math.tanh %195 : vector<8x128xf32>
    %197 = arith.mulf %192, %196 : vector<8x128xf32>
    %198 = arith.truncf %197 : vector<8x128xf32> to vector<8x128xbf16>
    %c8_i32 = arith.constant 8 : i32
    %c0_71 = arith.constant 0 : index
    %c0_72 = arith.constant 0 : index
    %199 = vector.load %arg9[%c0_71, %c0_72] : memref<8x128xbf16, #tpu.memory_space<vmem>>, vector<8x128xbf16>
    tpu.vector_store %arg9[%c0_71, %c0_72], %198 {strides = array<i32>} : memref<8x128xbf16, #tpu.memory_space<vmem>>, vector<8x128xbf16>,
    %c0_73 = arith.constant 0 : index
    %c0_74 = arith.constant 0 : index
    %200 = vector.load %arg10[%c0_73, %c0_74] : memref<8x128xf32, #tpu.memory_space<vmem>>, vector<8x128xf32>
    tpu.vector_store %arg10[%c0_73, %c0_74], %195 {strides = array<i32>} : memref<8x128xf32, #tpu.memory_space<vmem>>, vector<8x128xf32>,
    %c0_i32_75 = arith.constant 0 : i32
    %201 = arith.cmpi eq, %arg1, %c0_i32_75 : i32
    %202 = arith.extui %201 : i1 to i32
    %c0_i32_76 = arith.constant 0 : i32
    %203 = arith.cmpi ne, %202, %c0_i32_76 : i32
    scf.if %203 {
      %c0_77 = arith.constant 0 : index
      %c0_78 = arith.constant 0 : index
      %204 = vector.load %arg6[%c0_77, %c0_78] : memref<128x4xbf16, #tpu.memory_space<vmem>>, vector<128x4xbf16>
      %cst_79 = arith.constant dense<0.000000e+00> : vector<8x4xf32>
      %205 = tpu.matmul %198, %204, %cst_79 {dimension_numbers = #tpu.dot_dimension_numbers<[1], [0], [0], [1], [0, 0, 1, 1], [], []>} : vector<8x128xbf16>, vector<128x4xbf16>, vector<8x4xf32> -> vector<8x4xf32>
      %c0_80 = arith.constant 0 : index
      %c0_81 = arith.constant 0 : index
      %206 = vector.load %arg7[%c0_80, %c0_81] : memref<1x4xf32, #tpu.memory_space<vmem>>, vector<1x4xf32>
      %207 = vector.broadcast %206 : vector<1x4xf32> to vector<8x4xf32>
      %208 = arith.addf %205, %207 : vector<8x4xf32>
      %c0_82 = arith.constant 0 : index
      %c0_83 = arith.constant 0 : index
      %209 = vector.load %arg8[%c0_82, %c0_83] : memref<8x4xf32, #tpu.memory_space<vmem>>, vector<8x4xf32>
      tpu.vector_store %arg8[%c0_82, %c0_83], %208 {strides = array<i32>} : memref<8x4xf32, #tpu.memory_space<vmem>>, vector<8x4xf32>,
    } else {
    }
    return
  }
  func.func @transform_0(%arg0: i32, %arg1: i32) -> (i32, i32, i32) {
    %c0_i32 = arith.constant 0 : i32
    %c0_i32_0 = arith.constant 0 : i32
    return %arg1, %arg0, %c0_i32 : i32, i32, i32
  }
  func.func @transform_1(%arg0: i32, %arg1: i32) -> (i32, i32) {
    %c0_i32 = arith.constant 0 : i32
    %c0_i32_0 = arith.constant 0 : i32
    %c0_i32_1 = arith.constant 0 : i32
    return %c0_i32, %c0_i32_0 : i32, i32
  }
  func.func @transform_2(%arg0: i32, %arg1: i32) -> (i32, i32) {
    %c0_i32 = arith.constant 0 : i32
    %c0_i32_0 = arith.constant 0 : i32
    %c0_i32_1 = arith.constant 0 : i32
    return %c0_i32, %c0_i32_0 : i32, i32
  }
  func.func @transform_3(%arg0: i32, %arg1: i32) -> (i32, i32) {
    %c0_i32 = arith.constant 0 : i32
    %c0_i32_0 = arith.constant 0 : i32
    %c0_i32_1 = arith.constant 0 : i32
    return %c0_i32, %c0_i32_0 : i32, i32
  }
  func.func @transform_4(%arg0: i32, %arg1: i32) -> (i32, i32) {
    %c0_i32 = arith.constant 0 : i32
    %c0_i32_0 = arith.constant 0 : i32
    %c0_i32_1 = arith.constant 0 : i32
    return %c0_i32, %c0_i32_0 : i32, i32
  }
  func.func @transform_5(%arg0: i32, %arg1: i32) -> (i32, i32) {
    %c0_i32 = arith.constant 0 : i32
    %c0_i32_0 = arith.constant 0 : i32
    %c0_i32_1 = arith.constant 0 : i32
    return %c0_i32, %c0_i32_0 : i32, i32
  }
  func.func @transform_6(%arg0: i32, %arg1: i32) -> (i32, i32) {
    %c0_i32 = arith.constant 0 : i32
    %c0_i32_0 = arith.constant 0 : i32
    return %arg0, %c0_i32 : i32, i32
  }
}

</mosaic_0001>

<llo_original>
// kernel: lstm_model_forward.3
$region0: #{lstm_model_forward.3}
  #allocation0 [shape = 'u32[]', space=smem, size = 0x4, offset = 0x4, fixed_abs, tag = 'smem constant byte address 0x4 - core index']
  #allocation1 [shape = 'u32[144,128]{1,0:T(1,128)}', space=vmem, size = 0x12000, scoped, tag = 'internal scratch']
  #allocation2 [shape = 'bf16[8,128]{1,0:T(8,128)(2,1)}', space=vmem, size = 0x800, scoped, tag = 'scratch operand']
  #allocation3 [shape = 'f32[8,128]{1,0:T(8,128)}', space=vmem, size = 0x1000, scoped, tag = 'scratch operand']
  #allocation4 [shape = 'bf16[8,8,512]{2,1,0:T(8,128)(2,1)}', space=vmem, size = 0x10000, scoped, tag = 'scratch operand']
  %s0 = inlined_call_operand.vmem [shape: bf16[8,8,128], index: 0, kind: input, shape index: {}]
  %s1 = inlined_call_operand.vmem [shape: bf16[128,512], index: 1, kind: input, shape index: {}]
  %s2 = inlined_call_operand.vmem [shape: bf16[128,512], index: 2, kind: input, shape index: {}]
  %s3 = inlined_call_operand.vmem [shape: f32[1,512], index: 3, kind: input, shape index: {}]
  %s4 = inlined_call_operand.vmem [shape: bf16[128,4], index: 4, kind: input, shape index: {}]
  %s5 = inlined_call_operand.hbm [shape: f32[1,4], index: 5, kind: input, shape index: {}]
  %s6 = inlined_call_operand.vmem [shape: f32[8,4], index: 6, kind: output, shape index: {}]
  %s7 = sld [smem:[#allocation0]]
  $region46: #{lstm_model_forward.3} parent=0
    _
  %s9 = ssub.s32 1, %s7
  %s10 = scalar_select 0, %s9, %s7
  $region1: #{lstm_model_forward.3} parent=0
    #allocation5 [shape = 'u8[512]{0}', space=vmem, size = 0x400, scoped, tag = 'input window, operand 5, single buffered']
    #allocation6 [shape = 's32[1]{0}', space=sflag, size = 0x4, scoped, tag = 'scoped memory for lstm_model_forward.3']
    %11 = vsyncpa [#allocation6], 0
    // Predicated region
    $region2: #{lstm_model_forward.3} parent=1 // pred_check
      _
    $region3: #{lstm_model_forward.3} parent=1 // pred_check_branch
      %13 = sbr.rel (0) target = $region5
    $region4: #{lstm_model_forward.3} parent=1 // pred_region
      _
    $region5: #{lstm_model_forward.3} parent=1 // pred_fallthru
      _
    // Predicated region
    $region6: #{lstm_model_forward.3} parent=1 // pred_check
      _
    $region7: #{lstm_model_forward.3} parent=1 // pred_check_branch
      %15 = sbr.rel (0) target = $region9
    $region8: #{lstm_model_forward.3} parent=1 // pred_region
      _
    $region9: #{lstm_model_forward.3} parent=1 // pred_fallthru
      _
    // Predicated region
    $region10: #{lstm_model_forward.3} parent=1 // pred_check
      _
    $region11: #{lstm_model_forward.3} parent=1 // pred_check_branch
      %17 = sbr.rel (0) target = $region13
    $region12: #{lstm_model_forward.3} parent=1 // pred_region
      _
    $region13: #{lstm_model_forward.3} parent=1 // pred_fallthru
      _
    // Predicated region
    $region14: #{lstm_model_forward.3} parent=1 // pred_check
      _
    $region15: #{lstm_model_forward.3} parent=1 // pred_check_branch
      %19 = sbr.rel (0) target = $region17
    $region16: #{lstm_model_forward.3} parent=1 // pred_region
      _
    $region17: #{lstm_model_forward.3} parent=1 // pred_fallthru
      _
    // Predicated region
    $region18: #{lstm_model_forward.3} parent=1 // pred_check
      _
    $region19: #{lstm_model_forward.3} parent=1 // pred_check_branch
      %21 = sbr.rel (0) target = $region21
    $region20: #{lstm_model_forward.3} parent=1 // pred_region
      _
    $region21: #{lstm_model_forward.3} parent=1 // pred_fallthru
      _
    // Predicated region
    $region22: #{lstm_model_forward.3} parent=1 // pred_check
      _
    $region23: #{lstm_model_forward.3} parent=1 // pred_check_branch
      %23 = sbr.rel (0) target = $region25
    $region24: #{lstm_model_forward.3} parent=1 // pred_region
      %s25 = ssub.s32 16, 16
      %26 = vsyncadd [#allocation6], %s25
      %s28 = sshll.u32 [#allocation5], 4
      %s29 = int_to_ptr.vmem [resolvable:$true] %s28
      %31 = dma.hbm_to_vmem [thread:$0]  %s5, 16, %s29, [#allocation6]
    $region25: #{lstm_model_forward.3} parent=1 // pred_fallthru
      _
    // Predicated region
    $region26: #{lstm_model_forward.3} parent=1 // pred_check
      _
    $region27: #{lstm_model_forward.3} parent=1 // pred_check_branch
      %33 = sbr.rel (0) target = $region29
    $region28: #{lstm_model_forward.3} parent=1 // pred_region
      %34 = dma.done [#allocation6], 16
    $region29: #{lstm_model_forward.3} parent=1 // pred_fallthru
      _
    %p36 = scmp.eq.s32.totalorder 0, 0
    // Predicated region
    $region30: #{lstm_model_forward.3} parent=1 // pred_check
      %p37 = pneg %p36
    $region31: #{lstm_model_forward.3} parent=1 // pred_check_branch
      %39 = sbr.rel (%p37) target = $region33
    $region32: #{lstm_model_forward.3} parent=1 // pred_region
      %40 = vst [vmem:[#allocation2] sm:$0xf] 0
      %41 = vst [vmem:[#allocation3] sm:$0xff] 0.0
    $region33: #{lstm_model_forward.3} parent=1 // pred_fallthru
      _
    %v42 = vld [vmem:[%s0] sm:$0xf]
    %v43 = vld [vmem:[%s0 + $0x4] sm:$0xf]
    %v44 = vld [vmem:[%s0 + $0x8] sm:$0xf]
    %v45 = vld [vmem:[%s0 + $0xc] sm:$0xf]
    %v46 = vld [vmem:[%s0 + $0x10] sm:$0xf]
    %v47 = vld [vmem:[%s0 + $0x14] sm:$0xf]
    %v48 = vld [vmem:[%s0 + $0x18] sm:$0xf]
    %v49 = vld [vmem:[%s0 + $0x1c] sm:$0xf]
    %v50 = vld [vmem:[%s1] sm:$0xff]
    %v51 = vld [vmem:[%s1 + $0x8] sm:$0xff]
    %v52 = vld [vmem:[%s1 + $0x10] sm:$0xff]
    %v53 = vld [vmem:[%s1 + $0x18] sm:$0xff]
    %v54 = vld [vmem:[%s1 + $0x20] sm:$0xff]
    %v55 = vld [vmem:[%s1 + $0x28] sm:$0xff]
    %v56 = vld [vmem:[%s1 + $0x30] sm:$0xff]
    %v57 = vld [vmem:[%s1 + $0x38] sm:$0xff]
    %v58 = vld [vmem:[%s1 + $0x40] sm:$0xff]
    %v59 = vld [vmem:[%s1 + $0x48] sm:$0xff]
    %v60 = vld [vmem:[%s1 + $0x50] sm:$0xff]
    %v61 = vld [vmem:[%s1 + $0x58] sm:$0xff]
    %v62 = vld [vmem:[%s1 + $0x60] sm:$0xff]
    %v63 = vld [vmem:[%s1 + $0x68] sm:$0xff]
    %v64 = vld [vmem:[%s1 + $0x70] sm:$0xff]
    %v65 = vld [vmem:[%s1 + $0x78] sm:$0xff]
    %v66 = vld [vmem:[%s1 + $0x80] sm:$0xff]
    %v67 = vld [vmem:[%s1 + $0x88] sm:$0xff]
    %v68 = vld [vmem:[%s1 + $0x90] sm:$0xff]
    %v69 = vld [vmem:[%s1 + $0x98] sm:$0xff]
    %v70 = vld [vmem:[%s1 + $0xa0] sm:$0xff]
    %v71 = vld [vmem:[%s1 + $0xa8] sm:$0xff]
    %v72 = vld [vmem:[%s1 + $0xb0] sm:$0xff]
    %v73 = vld [vmem:[%s1 + $0xb8] sm:$0xff]
    %v74 = vld [vmem:[%s1 + $0xc0] sm:$0xff]
    %v75 = vld [vmem:[%s1 + $0xc8] sm:$0xff]
    %v76 = vld [vmem:[%s1 + $0xd0] sm:$0xff]
    %v77 = vld [vmem:[%s1 + $0xd8] sm:$0xff]
    %v78 = vld [vmem:[%s1 + $0xe0] sm:$0xff]
    %v79 = vld [vmem:[%s1 + $0xe8] sm:$0xff]
    %v80 = vld [vmem:[%s1 + $0xf0] sm:$0xff]
    %v81 = vld [vmem:[%s1 + $0xf8] sm:$0xff]
    %v82 = vld [vmem:[%s3] sm:$0xf]
    %v84 = vlaneseq
    %v85 = vshrl.u32 %v84, 7
    %v86 = vsub.s32 0, %v85
    %v87 = vrot.slane %v82, %v86
    %v88 = vlaneseq
    %v89 = vshrl.u32 %v88, 7
    %v90 = vsub.s32 1, %v89
    %v91 = vrot.slane %v82, %v90
    %v92 = vlaneseq
    %v93 = vshrl.u32 %v92, 7
    %v94 = vsub.s32 2, %v93
    %v95 = vrot.slane %v82, %v94
    %v96 = vlaneseq
    %v97 = vshrl.u32 %v96, 7
    %v98 = vsub.s32 3, %v97
    %v99 = vrot.slane %v82, %v98
    %v112 = vunpack.c.l.b16 %v42
    %v113 = vunpack.c.l.b16 %v43
    %v114 = vunpack.c.l.b16 %v44
    %v115 = vunpack.c.l.b16 %v45
    %v116 = vunpack.c.l.b16 %v46
    %v117 = vunpack.c.l.b16 %v47
    %v118 = vunpack.c.l.b16 %v48
    %v119 = vunpack.c.l.b16 %v49
    %v120 = vpack.c.b16 %v113, %v112
    %v121 = vpack.c.b16 %v115, %v114
    %v122 = vpack.c.b16 %v117, %v116
    %v123 = vpack.c.b16 %v119, %v118
    %v160 = vunpack.c.l.b16 %v50
    %v161 = vunpack.c.h.b16 %v50
    %v162 = vunpack.c.l.b16 %v51
    %v163 = vunpack.c.h.b16 %v51
    %v164 = vunpack.c.l.b16 %v52
    %v165 = vunpack.c.h.b16 %v52
    %v166 = vunpack.c.l.b16 %v53
    %v167 = vunpack.c.h.b16 %v53
    %v168 = vunpack.c.l.b16 %v54
    %v169 = vunpack.c.h.b16 %v54
    %v170 = vunpack.c.l.b16 %v55
    %v171 = vunpack.c.h.b16 %v55
    %v172 = vunpack.c.l.b16 %v56
    %v173 = vunpack.c.h.b16 %v56
    %v174 = vunpack.c.l.b16 %v57
    %v175 = vunpack.c.h.b16 %v57
    %v176 = vunpack.c.l.b16 %v58
    %v177 = vunpack.c.h.b16 %v58
    %v178 = vunpack.c.l.b16 %v59
    %v179 = vunpack.c.h.b16 %v59
    %v180 = vunpack.c.l.b16 %v60
    %v181 = vunpack.c.h.b16 %v60
    %v182 = vunpack.c.l.b16 %v61
    %v183 = vunpack.c.h.b16 %v61
    %v184 = vunpack.c.l.b16 %v62
    %v185 = vunpack.c.h.b16 %v62
    %v186 = vunpack.c.l.b16 %v63
    %v187 = vunpack.c.h.b16 %v63
    %v188 = vunpack.c.l.b16 %v64
    %v189 = vunpack.c.h.b16 %v64
    %v190 = vunpack.c.l.b16 %v65
    %v191 = vunpack.c.h.b16 %v65
    %v192 = vunpack.c.l.b16 %v66
    %v193 = vunpack.c.h.b16 %v66
    %v194 = vunpack.c.l.b16 %v67
    %v195 = vunpack.c.h.b16 %v67
    %v196 = vunpack.c.l.b16 %v68
    %v197 = vunpack.c.h.b16 %v68
    %v198 = vunpack.c.l.b16 %v69
    %v199 = vunpack.c.h.b16 %v69
    %v200 = vunpack.c.l.b16 %v70
    %v201 = vunpack.c.h.b16 %v70
    %v202 = vunpack.c.l.b16 %v71
    %v203 = vunpack.c.h.b16 %v71
    %v204 = vunpack.c.l.b16 %v72
    %v205 = vunpack.c.h.b16 %v72
    %v206 = vunpack.c.l.b16 %v73
    %v207 = vunpack.c.h.b16 %v73
    %v208 = vunpack.c.l.b16 %v74
    %v209 = vunpack.c.h.b16 %v74
    %v210 = vunpack.c.l.b16 %v75
    %v211 = vunpack.c.h.b16 %v75
    %v212 = vunpack.c.l.b16 %v76
    %v213 = vunpack.c.h.b16 %v76
    %v214 = vunpack.c.l.b16 %v77
    %v215 = vunpack.c.h.b16 %v77
    %v216 = vunpack.c.l.b16 %v78
    %v217 = vunpack.c.h.b16 %v78
    %v218 = vunpack.c.l.b16 %v79
    %v219 = vunpack.c.h.b16 %v79
    %v220 = vunpack.c.l.b16 %v80
    %v221 = vunpack.c.h.b16 %v80
    %v222 = vunpack.c.l.b16 %v81
    %v223 = vunpack.c.h.b16 %v81
    %v224 = vpack.c.b16 %v164, %v160
    %v225 = vpack.c.b16 %v165, %v161
    %v226 = vpack.c.b16 %v166, %v162
    %v227 = vpack.c.b16 %v167, %v163
    %v228 = vpack.c.b16 %v172, %v168
    %v229 = vpack.c.b16 %v173, %v169
    %v230 = vpack.c.b16 %v174, %v170
    %v231 = vpack.c.b16 %v175, %v171
    %v232 = vpack.c.b16 %v180, %v176
    %v233 = vpack.c.b16 %v181, %v177
    %v234 = vpack.c.b16 %v182, %v178
    %v235 = vpack.c.b16 %v183, %v179
    %v236 = vpack.c.b16 %v188, %v184
    %v237 = vpack.c.b16 %v189, %v185
    %v238 = vpack.c.b16 %v190, %v186
    %v239 = vpack.c.b16 %v191, %v187
    %v240 = vpack.c.b16 %v196, %v192
    %v241 = vpack.c.b16 %v197, %v193
    %v242 = vpack.c.b16 %v198, %v194
    %v243 = vpack.c.b16 %v199, %v195
    %v244 = vpack.c.b16 %v204, %v200
    %v245 = vpack.c.b16 %v205, %v201
    %v246 = vpack.c.b16 %v206, %v202
    %v247 = vpack.c.b16 %v207, %v203
    %v248 = vpack.c.b16 %v212, %v208
    %v249 = vpack.c.b16 %v213, %v209
    %v250 = vpack.c.b16 %v214, %v210
    %v251 = vpack.c.b16 %v215, %v211
    %v252 = vpack.c.b16 %v220, %v216
    %v253 = vpack.c.b16 %v221, %v217
    %v254 = vpack.c.b16 %v222, %v218
    %v255 = vpack.c.b16 %v223, %v219
    %288 = vmatprep.subr.bf16.mxu0 %v225
    %289 = vmatpush1.bf16.msra.mxu0 %v224
    %290 = vmatprep.subr.bf16.mxu0 %v229
    %291 = vmatpush1.bf16.msra.mxu0 %v228
    %292 = vmatprep.subr.bf16.mxu0 %v233
    %293 = vmatpush1.bf16.msra.mxu0 %v232
    %294 = vmatprep.subr.bf16.mxu0 %v237
    %295 = vmatpush1.bf16.msra.mxu0 %v236
    %296 = vmatprep.subr.bf16.mxu0 %v241
    %297 = vmatpush1.bf16.msra.mxu0 %v240
    %298 = vmatprep.subr.bf16.mxu0 %v245
    %299 = vmatpush1.bf16.msra.mxu0 %v244
    %300 = vmatprep.subr.bf16.mxu0 %v249
    %301 = vmatpush1.bf16.msra.mxu0 %v248
    %302 = vmatprep.subr.bf16.mxu0 %v253
    %303 = vmatpush1.bf16.msra.mxu0 %v252
    %304 = vmatprep.subr.bf16.mxu0 0
    %305 = vmatpush1.bf16.msra.mxu0 0
    %306 = vmatprep.subr.bf16.mxu0 0
    %307 = vmatpush1.bf16.msra.mxu0 0
    %308 = vmatprep.subr.bf16.mxu0 0
    %309 = vmatpush1.bf16.msra.mxu0 0
    %310 = vmatprep.subr.bf16.mxu0 0
    %311 = vmatpush1.bf16.msra.mxu0 0
    %312 = vmatprep.subr.bf16.mxu0 0
    %313 = vmatpush1.bf16.msra.mxu0 0
    %314 = vmatprep.subr.bf16.mxu0 0
    %315 = vmatpush1.bf16.msra.mxu0 0
    %316 = vmatprep.subr.bf16.mxu0 0
    %317 = vmatpush1.bf16.msra.mxu0 0
    %318 = vmatprep.subr.bf16.mxu0 0
    %319 = vmatpush1.bf16.msra.mxu0 0
    %320 = vmatprep.mubr.bf16.mxu0 0
    %321 = vmatmul.mubr.bf16.gmra.mrb[0].mxu0 %v120
    %v322 = vpop.f32.mrb[0].mxu0
    %v323 = vadd.f32 %v87, %v322
    %v324 = vpop.f32.mrb[0].mxu0
    %v325 = vadd.f32 %v91, %v324
    %v326 = vpop.f32.mrb[0].mxu0
    %v327 = vadd.f32 %v87, %v326
    %v328 = vpop.f32.mrb[0].mxu0
    %v329 = vadd.f32 %v91, %v328
    %330 = vmatprep.mubr.bf16.mxu0 0
    %331 = vmatmul.mubr.bf16.gmra.mrb[0].mxu0 %v121
    %v332 = vpop.f32.mrb[0].mxu0
    %v333 = vadd.f32 %v87, %v332
    %v334 = vpop.f32.mrb[0].mxu0
    %v335 = vadd.f32 %v91, %v334
    %v336 = vpop.f32.mrb[0].mxu0
    %v337 = vadd.f32 %v87, %v336
    %v338 = vpop.f32.mrb[0].mxu0
    %v339 = vadd.f32 %v91, %v338
    %340 = vmatprep.mubr.bf16.mxu0 0
    %341 = vmatmul.mubr.bf16.gmra.mrb[0].mxu0 %v122
    %v342 = vpop.f32.mrb[0].mxu0
    %v343 = vadd.f32 %v87, %v342
    %v344 = vpop.f32.mrb[0].mxu0
    %v345 = vadd.f32 %v91, %v344
    %v346 = vpop.f32.mrb[0].mxu0
    %v347 = vadd.f32 %v87, %v346
    %v348 = vpop.f32.mrb[0].mxu0
    %v349 = vadd.f32 %v91, %v348
    %350 = vmatprep.mubr.bf16.mxu0 0
    %351 = vmatmul.mubr.bf16.gmra.mrb[0].mxu0 %v123
    %v352 = vpop.f32.mrb[0].mxu0
    %v353 = vadd.f32 %v87, %v352
    %v354 = vpop.f32.mrb[0].mxu0
    %v355 = vadd.f32 %v91, %v354
    %v356 = vpop.f32.mrb[0].mxu0
    %v357 = vadd.f32 %v87, %v356
    %v358 = vpop.f32.mrb[0].mxu0
    %v359 = vadd.f32 %v91, %v358
    %360 = vdwg.mxu0
    %361 = vmatprep.subr.bf16.mxu0 %v227
    %362 = vmatpush1.bf16.msra.mxu0 %v226
    %363 = vmatprep.subr.bf16.mxu0 %v231
    %364 = vmatpush1.bf16.msra.mxu0 %v230
    %365 = vmatprep.subr.bf16.mxu0 %v235
    %366 = vmatpush1.bf16.msra.mxu0 %v234
    %367 = vmatprep.subr.bf16.mxu0 %v239
    %368 = vmatpush1.bf16.msra.mxu0 %v238
    %369 = vmatprep.subr.bf16.mxu0 %v243
    %370 = vmatpush1.bf16.msra.mxu0 %v242
    %371 = vmatprep.subr.bf16.mxu0 %v247
    %372 = vmatpush1.bf16.msra.mxu0 %v246
    %373 = vmatprep.subr.bf16.mxu0 %v251
    %374 = vmatpush1.bf16.msra.mxu0 %v250
    %375 = vmatprep.subr.bf16.mxu0 %v255
    %376 = vmatpush1.bf16.msra.mxu0 %v254
    %377 = vmatprep.subr.bf16.mxu0 0
    %378 = vmatpush1.bf16.msra.mxu0 0
    %379 = vmatprep.subr.bf16.mxu0 0
    %380 = vmatpush1.bf16.msra.mxu0 0
    %381 = vmatprep.subr.bf16.mxu0 0
    %382 = vmatpush1.bf16.msra.mxu0 0
    %383 = vmatprep.subr.bf16.mxu0 0
    %384 = vmatpush1.bf16.msra.mxu0 0
    %385 = vmatprep.subr.bf16.mxu0 0
    %386 = vmatpush1.bf16.msra.mxu0 0
    %387 = vmatprep.subr.bf16.mxu0 0
    %388 = vmatpush1.bf16.msra.mxu0 0
    %389 = vmatprep.subr.bf16.mxu0 0
    %390 = vmatpush1.bf16.msra.mxu0 0
    %391 = vmatprep.subr.bf16.mxu0 0
    %392 = vmatpush1.bf16.msra.mxu0 0
    %393 = vmatprep.mubr.bf16.mxu0 0
    %394 = vmatmul.mubr.bf16.gmra.mrb[0].mxu0 %v120
    %v395 = vpop.f32.mrb[0].mxu0
    %v396 = vadd.f32 %v95, %v395
    %v397 = vpop.f32.mrb[0].mxu0
    %v398 = vadd.f32 %v99, %v397
    %v399 = vpop.f32.mrb[0].mxu0
    %v400 = vadd.f32 %v95, %v399
    %v401 = vpop.f32.mrb[0].mxu0
    %v402 = vadd.f32 %v99, %v401
    %403 = vmatprep.mubr.bf16.mxu0 0
    %404 = vmatmul.mubr.bf16.gmra.mrb[0].mxu0 %v121
    %v405 = vpop.f32.mrb[0].mxu0
    %v406 = vadd.f32 %v95, %v405
    %v407 = vpop.f32.mrb[0].mxu0
    %v408 = vadd.f32 %v99, %v407
    %v409 = vpop.f32.mrb[0].mxu0
    %v410 = vadd.f32 %v95, %v409
    %v411 = vpop.f32.mrb[0].mxu0
    %v412 = vadd.f32 %v99, %v411
    %413 = vmatprep.mubr.bf16.mxu0 0
    %414 = vmatmul.mubr.bf16.gmra.mrb[0].mxu0 %v122
    %v415 = vpop.f32.mrb[0].mxu0
    %v416 = vadd.f32 %v95, %v415
    %v417 = vpop.f32.mrb[0].mxu0
    %v418 = vadd.f32 %v99, %v417
    %v419 = vpop.f32.mrb[0].mxu0
    %v420 = vadd.f32 %v95, %v419
    %v421 = vpop.f32.mrb[0].mxu0
    %v422 = vadd.f32 %v99, %v421
    %423 = vmatprep.mubr.bf16.mxu0 0
    %424 = vmatmul.mubr.bf16.gmra.mrb[0].mxu0 %v123
    %v425 = vpop.f32.mrb[0].mxu0
    %v426 = vadd.f32 %v95, %v425
    %v427 = vpop.f32.mrb[0].mxu0
    %v428 = vadd.f32 %v99, %v427
    %v429 = vpop.f32.mrb[0].mxu0
    %v430 = vadd.f32 %v95, %v429
    %v431 = vpop.f32.mrb[0].mxu0
    %v432 = vadd.f32 %v99, %v431
    %433 = vdwg.mxu0
    %v434 = vpack.c.bf16 %v323, %v323
    %v435 = vpack.c.bf16 %v325, %v325
    %v436 = vpack.c.bf16 %v396, %v396
    %v437 = vpack.c.bf16 %v398, %v398
    %v438 = vpack.c.bf16 %v327, %v327
    %v439 = vpack.c.bf16 %v329, %v329
    %v440 = vpack.c.bf16 %v400, %v400
    %v441 = vpack.c.bf16 %v402, %v402
    %v442 = vpack.c.bf16 %v333, %v333
    %v443 = vpack.c.bf16 %v335, %v335
    %v444 = vpack.c.bf16 %v406, %v406
    %v445 = vpack.c.bf16 %v408, %v408
    %v446 = vpack.c.bf16 %v337, %v337
    %v447 = vpack.c.bf16 %v339, %v339
    %v448 = vpack.c.bf16 %v410, %v410
    %v449 = vpack.c.bf16 %v412, %v412
    %v450 = vpack.c.bf16 %v343, %v343
    %v451 = vpack.c.bf16 %v345, %v345
    %v452 = vpack.c.bf16 %v416, %v416
    %v453 = vpack.c.bf16 %v418, %v418
    %v454 = vpack.c.bf16 %v347, %v347
    %v455 = vpack.c.bf16 %v349, %v349
    %v456 = vpack.c.bf16 %v420, %v420
    %v457 = vpack.c.bf16 %v422, %v422
    %v458 = vpack.c.bf16 %v353, %v353
    %v459 = vpack.c.bf16 %v355, %v355
    %v460 = vpack.c.bf16 %v426, %v426
    %v461 = vpack.c.bf16 %v428, %v428
    %v462 = vpack.c.bf16 %v357, %v357
    %v463 = vpack.c.bf16 %v359, %v359
    %v464 = vpack.c.bf16 %v430, %v430
    %v465 = vpack.c.bf16 %v432, %v432
    %v498 = vunpack.c.l.b16 %v434
    %v499 = vunpack.c.l.b16 %v435
    %v500 = vunpack.c.l.b16 %v436
    %v501 = vunpack.c.l.b16 %v437
    %v502 = vunpack.c.l.b16 %v438
    %v503 = vunpack.c.l.b16 %v439
    %v504 = vunpack.c.l.b16 %v440
    %v505 = vunpack.c.l.b16 %v441
    %v506 = vunpack.c.l.b16 %v442
    %v507 = vunpack.c.l.b16 %v443
    %v508 = vunpack.c.l.b16 %v444
    %v509 = vunpack.c.l.b16 %v445
    %v510 = vunpack.c.l.b16 %v446
    %v511 = vunpack.c.l.b16 %v447
    %v512 = vunpack.c.l.b16 %v448
    %v513 = vunpack.c.l.b16 %v449
    %v514 = vunpack.c.l.b16 %v450
    %v515 = vunpack.c.l.b16 %v451
    %v516 = vunpack.c.l.b16 %v452
    %v517 = vunpack.c.l.b16 %v453
    %v518 = vunpack.c.l.b16 %v454
    %v519 = vunpack.c.l.b16 %v455
    %v520 = vunpack.c.l.b16 %v456
    %v521 = vunpack.c.l.b16 %v457
    %v522 = vunpack.c.l.b16 %v458
    %v523 = vunpack.c.l.b16 %v459
    %v524 = vunpack.c.l.b16 %v460
    %v525 = vunpack.c.l.b16 %v461
    %v526 = vunpack.c.l.b16 %v462
    %v527 = vunpack.c.l.b16 %v463
    %v528 = vunpack.c.l.b16 %v464
    %v529 = vunpack.c.l.b16 %v465
    %v530 = vpack.c.b16 %v499, %v498
    %v531 = vpack.c.b16 %v501, %v500
    %v532 = vpack.c.b16 %v503, %v502
    %v533 = vpack.c.b16 %v505, %v504
    %v534 = vpack.c.b16 %v507, %v506
    %v535 = vpack.c.b16 %v509, %v508
    %v536 = vpack.c.b16 %v511, %v510
    %v537 = vpack.c.b16 %v513, %v512
    %v538 = vpack.c.b16 %v515, %v514
    %v539 = vpack.c.b16 %v517, %v516
    %v540 = vpack.c.b16 %v519, %v518
    %v541 = vpack.c.b16 %v521, %v520
    %v542 = vpack.c.b16 %v523, %v522
    %v543 = vpack.c.b16 %v525, %v524
    %v544 = vpack.c.b16 %v527, %v526
    %v545 = vpack.c.b16 %v529, %v528
    %562 = vst [vmem:[#allocation4] sm:$0xff] %v530
    %563 = vst [vmem:[#allocation4 + $0x8] sm:$0xff] %v531
    %564 = vst [vmem:[#allocation4 + $0x10] sm:$0xff] %v532
    %565 = vst [vmem:[#allocation4 + $0x18] sm:$0xff] %v533
    %566 = vst [vmem:[#allocation4 + $0x20] sm:$0xff] %v534
    %567 = vst [vmem:[#allocation4 + $0x28] sm:$0xff] %v535
    %568 = vst [vmem:[#allocation4 + $0x30] sm:$0xff] %v536
    %569 = vst [vmem:[#allocation4 + $0x38] sm:$0xff] %v537
    %570 = vst [vmem:[#allocation4 + $0x40] sm:$0xff] %v538
    %571 = vst [vmem:[#allocation4 + $0x48] sm:$0xff] %v539
    %572 = vst [vmem:[#allocation4 + $0x50] sm:$0xff] %v540
    %573 = vst [vmem:[#allocation4 + $0x58] sm:$0xff] %v541
    %574 = vst [vmem:[#allocation4 + $0x60] sm:$0xff] %v542
    %575 = vst [vmem:[#allocation4 + $0x68] sm:$0xff] %v543
    %576 = vst [vmem:[#allocation4 + $0x70] sm:$0xff] %v544
    %577 = vst [vmem:[#allocation4 + $0x78] sm:$0xff] %v545
    %v578 = vld [vmem:[#allocation2] sm:$0xf]
    %v579 = vld [vmem:[#allocation3] sm:$0xff]
    %v580 = vld [vmem:[%s2] sm:$0xff]
    %v581 = vld [vmem:[%s2 + $0x8] sm:$0xff]
    %v582 = vld [vmem:[%s2 + $0x10] sm:$0xff]
    %v583 = vld [vmem:[%s2 + $0x18] sm:$0xff]
    %v584 = vld [vmem:[%s2 + $0x20] sm:$0xff]
    %v585 = vld [vmem:[%s2 + $0x28] sm:$0xff]
    %v586 = vld [vmem:[%s2 + $0x30] sm:$0xff]
    %v587 = vld [vmem:[%s2 + $0x38] sm:$0xff]
    %v588 = vld [vmem:[%s2 + $0x40] sm:$0xff]
    %v589 = vld [vmem:[%s2 + $0x48] sm:$0xff]
    %v590 = vld [vmem:[%s2 + $0x50] sm:$0xff]
    %v591 = vld [vmem:[%s2 + $0x58] sm:$0xff]
    %v592 = vld [vmem:[%s2 + $0x60] sm:$0xff]
    %v593 = vld [vmem:[%s2 + $0x68] sm:$0xff]
    %v594 = vld [vmem:[%s2 + $0x70] sm:$0xff]
    %v595 = vld [vmem:[%s2 + $0x78] sm:$0xff]
    %v596 = vld [vmem:[%s2 + $0x80] sm:$0xff]
    %v597 = vld [vmem:[%s2 + $0x88] sm:$0xff]
    %v598 = vld [vmem:[%s2 + $0x90] sm:$0xff]
    %v599 = vld [vmem:[%s2 + $0x98] sm:$0xff]
    %v600 = vld [vmem:[%s2 + $0xa0] sm:$0xff]
    %v601 = vld [vmem:[%s2 + $0xa8] sm:$0xff]
    %v602 = vld [vmem:[%s2 + $0xb0] sm:$0xff]
    %v603 = vld [vmem:[%s2 + $0xb8] sm:$0xff]
    %v604 = vld [vmem:[%s2 + $0xc0] sm:$0xff]
    %v605 = vld [vmem:[%s2 + $0xc8] sm:$0xff]
    %v606 = vld [vmem:[%s2 + $0xd0] sm:$0xff]
    %v607 = vld [vmem:[%s2 + $0xd8] sm:$0xff]
    %v608 = vld [vmem:[%s2 + $0xe0] sm:$0xff]
    %v609 = vld [vmem:[%s2 + $0xe8] sm:$0xff]
    %v610 = vld [vmem:[%s2 + $0xf0] sm:$0xff]
    %v611 = vld [vmem:[%s2 + $0xf8] sm:$0xff]
    %v612 = vld [vmem:[#allocation4] sm:$0xff]
    %v613 = vld [vmem:[#allocation4 + $0x8] sm:$0xff]
    %v614 = vunpack.c.l.bf16 %v612
    %v615 = vunpack.c.h.bf16 %v612
    %v616 = vunpack.c.l.bf16 %v613
    %v617 = vunpack.c.h.bf16 %v613
    %v650 = vunpack.c.l.b16 %v580
    %v651 = vunpack.c.h.b16 %v580
    %v652 = vunpack.c.l.b16 %v581
    %v653 = vunpack.c.h.b16 %v581
    %v654 = vunpack.c.l.b16 %v582
    %v655 = vunpack.c.h.b16 %v582
    %v656 = vunpack.c.l.b16 %v583
    %v657 = vunpack.c.h.b16 %v583
    %v658 = vunpack.c.l.b16 %v584
    %v659 = vunpack.c.h.b16 %v584
    %v660 = vunpack.c.l.b16 %v585
    %v661 = vunpack.c.h.b16 %v585
    %v662 = vunpack.c.l.b16 %v586
    %v663 = vunpack.c.h.b16 %v586
    %v664 = vunpack.c.l.b16 %v587
    %v665 = vunpack.c.h.b16 %v587
    %v666 = vunpack.c.l.b16 %v588
    %v667 = vunpack.c.h.b16 %v588
    %v668 = vunpack.c.l.b16 %v589
    %v669 = vunpack.c.h.b16 %v589
    %v670 = vunpack.c.l.b16 %v590
    %v671 = vunpack.c.h.b16 %v590
    %v672 = vunpack.c.l.b16 %v591
    %v673 = vunpack.c.h.b16 %v591
    %v674 = vunpack.c.l.b16 %v592
    %v675 = vunpack.c.h.b16 %v592
    %v676 = vunpack.c.l.b16 %v593
    %v677 = vunpack.c.h.b16 %v593
    %v678 = vunpack.c.l.b16 %v594
    %v679 = vunpack.c.h.b16 %v594
    %v680 = vunpack.c.l.b16 %v595
    %v681 = vunpack.c.h.b16 %v595
    %v682 = vunpack.c.l.b16 %v596
    %v683 = vunpack.c.h.b16 %v596
    %v684 = vunpack.c.l.b16 %v597
    %v685 = vunpack.c.h.b16 %v597
    %v686 = vunpack.c.l.b16 %v598
    %v687 = vunpack.c.h.b16 %v598
    %v688 = vunpack.c.l.b16 %v599
    %v689 = vunpack.c.h.b16 %v599
    %v690 = vunpack.c.l.b16 %v600
    %v691 = vunpack.c.h.b16 %v600
    %v692 = vunpack.c.l.b16 %v601
    %v693 = vunpack.c.h.b16 %v601
    %v694 = vunpack.c.l.b16 %v602
    %v695 = vunpack.c.h.b16 %v602
    %v696 = vunpack.c.l.b16 %v603
    %v697 = vunpack.c.h.b16 %v603
    %v698 = vunpack.c.l.b16 %v604
    %v699 = vunpack.c.h.b16 %v604
    %v700 = vunpack.c.l.b16 %v605
    %v701 = vunpack.c.h.b16 %v605
    %v702 = vunpack.c.l.b16 %v606
    %v703 = vunpack.c.h.b16 %v606
    %v704 = vunpack.c.l.b16 %v607
    %v705 = vunpack.c.h.b16 %v607
    %v706 = vunpack.c.l.b16 %v608
    %v707 = vunpack.c.h.b16 %v608
    %v708 = vunpack.c.l.b16 %v609
    %v709 = vunpack.c.h.b16 %v609
    %v710 = vunpack.c.l.b16 %v610
    %v711 = vunpack.c.h.b16 %v610
    %v712 = vunpack.c.l.b16 %v611
    %v713 = vunpack.c.h.b16 %v611
    %v714 = vpack.c.b16 %v654, %v650
    %v715 = vpack.c.b16 %v655, %v651
    %v716 = vpack.c.b16 %v656, %v652
    %v717 = vpack.c.b16 %v657, %v653
    %v718 = vpack.c.b16 %v662, %v658
    %v719 = vpack.c.b16 %v663, %v659
    %v720 = vpack.c.b16 %v664, %v660
    %v721 = vpack.c.b16 %v665, %v661
    %v722 = vpack.c.b16 %v670, %v666
    %v723 = vpack.c.b16 %v671, %v667
    %v724 = vpack.c.b16 %v672, %v668
    %v725 = vpack.c.b16 %v673, %v669
    %v726 = vpack.c.b16 %v678, %v674
    %v727 = vpack.c.b16 %v679, %v675
    %v728 = vpack.c.b16 %v680, %v676
    %v729 = vpack.c.b16 %v681, %v677
    %v730 = vpack.c.b16 %v686, %v682
    %v731 = vpack.c.b16 %v687, %v683
    %v732 = vpack.c.b16 %v688, %v684
    %v733 = vpack.c.b16 %v689, %v685
    %v734 = vpack.c.b16 %v694, %v690
    %v735 = vpack.c.b16 %v695, %v691
    %v736 = vpack.c.b16 %v696, %v692
    %v737 = vpack.c.b16 %v697, %v693
    %v738 = vpack.c.b16 %v702, %v698
    %v739 = vpack.c.b16 %v703, %v699
    %v740 = vpack.c.b16 %v704, %v700
    %v741 = vpack.c.b16 %v705, %v701
    %v742 = vpack.c.b16 %v710, %v706
    %v743 = vpack.c.b16 %v711, %v707
    %v744 = vpack.c.b16 %v712, %v708
    %v745 = vpack.c.b16 %v713, %v709
    %778 = vmatprep.subr.bf16.mxu0 %v715
    %779 = vmatpush1.bf16.msra.mxu0 %v714
    %780 = vmatprep.subr.bf16.mxu0 %v719
    %781 = vmatpush1.bf16.msra.mxu0 %v718
    %782 = vmatprep.subr.bf16.mxu0 %v723
    %783 = vmatpush1.bf16.msra.mxu0 %v722
    %784 = vmatprep.subr.bf16.mxu0 %v727
    %785 = vmatpush1.bf16.msra.mxu0 %v726
    %786 = vmatprep.subr.bf16.mxu0 %v731
    %787 = vmatpush1.bf16.msra.mxu0 %v730
    %788 = vmatprep.subr.bf16.mxu0 %v735
    %789 = vmatpush1.bf16.msra.mxu0 %v734
    %790 = vmatprep.subr.bf16.mxu0 %v739
    %791 = vmatpush1.bf16.msra.mxu0 %v738
    %792 = vmatprep.subr.bf16.mxu0 %v743
    %793 = vmatpush1.bf16.msra.mxu0 %v742
    %794 = vmatprep.subr.bf16.mxu0 0
    %795 = vmatpush1.bf16.msra.mxu0 0
    %796 = vmatprep.subr.bf16.mxu0 0
    %797 = vmatpush1.bf16.msra.mxu0 0
    %798 = vmatprep.subr.bf16.mxu0 0
    %799 = vmatpush1.bf16.msra.mxu0 0
    %800 = vmatprep.subr.bf16.mxu0 0
    %801 = vmatpush1.bf16.msra.mxu0 0
    %802 = vmatprep.subr.bf16.mxu0 0
    %803 = vmatpush1.bf16.msra.mxu0 0
    %804 = vmatprep.subr.bf16.mxu0 0
    %805 = vmatpush1.bf16.msra.mxu0 0
    %806 = vmatprep.subr.bf16.mxu0 0
    %807 = vmatpush1.bf16.msra.mxu0 0
    %808 = vmatprep.subr.bf16.mxu0 0
    %809 = vmatpush1.bf16.msra.mxu0 0
    %810 = vmatprep.mubr.bf16.mxu0 0
    %811 = vmatmul.mubr.bf16.gmra.mrb[0].mxu0 %v578
    %v812 = vpop.f32.mrb[0].mxu0
    %v813 = vadd.f32 %v614, %v812
    %v814 = vpop.f32.mrb[0].mxu0
    %v815 = vadd.f32 %v615, %v814
    %v816 = vpop.f32.mrb[0].mxu0
    %v817 = vpop.f32.mrb[0].mxu0
    %818 = vdwg.mxu0
    %819 = vmatprep.subr.bf16.mxu0 %v717
    %820 = vmatpush1.bf16.msra.mxu0 %v716
    %821 = vmatprep.subr.bf16.mxu0 %v721
    %822 = vmatpush1.bf16.msra.mxu0 %v720
    %823 = vmatprep.subr.bf16.mxu0 %v725
    %824 = vmatpush1.bf16.msra.mxu0 %v724
    %825 = vmatprep.subr.bf16.mxu0 %v729
    %826 = vmatpush1.bf16.msra.mxu0 %v728
    %827 = vmatprep.subr.bf16.mxu0 %v733
    %828 = vmatpush1.bf16.msra.mxu0 %v732
    %829 = vmatprep.subr.bf16.mxu0 %v737
    %830 = vmatpush1.bf16.msra.mxu0 %v736
    %831 = vmatprep.subr.bf16.mxu0 %v741
    %832 = vmatpush1.bf16.msra.mxu0 %v740
    %833 = vmatprep.subr.bf16.mxu0 %v745
    %834 = vmatpush1.bf16.msra.mxu0 %v744
    %835 = vmatprep.subr.bf16.mxu0 0
    %836 = vmatpush1.bf16.msra.mxu0 0
    %837 = vmatprep.subr.bf16.mxu0 0
    %838 = vmatpush1.bf16.msra.mxu0 0
    %839 = vmatprep.subr.bf16.mxu0 0
    %840 = vmatpush1.bf16.msra.mxu0 0
    %841 = vmatprep.subr.bf16.mxu0 0
    %842 = vmatpush1.bf16.msra.mxu0 0
    %843 = vmatprep.subr.bf16.mxu0 0
    %844 = vmatpush1.bf16.msra.mxu0 0
    %845 = vmatprep.subr.bf16.mxu0 0
    %846 = vmatpush1.bf16.msra.mxu0 0
    %847 = vmatprep.subr.bf16.mxu0 0
    %848 = vmatpush1.bf16.msra.mxu0 0
    %849 = vmatprep.subr.bf16.mxu0 0
    %850 = vmatpush1.bf16.msra.mxu0 0
    %851 = vmatprep.mubr.bf16.mxu0 0
    %852 = vmatmul.mubr.bf16.gmra.mrb[0].mxu0 %v578
    %v853 = vpop.f32.mrb[0].mxu0
    %v854 = vadd.f32 %v616, %v853
    %v855 = vpop.f32.mrb[0].mxu0
    %v856 = vadd.f32 %v617, %v855
    %v857 = vpop.f32.mrb[0].mxu0
    %v858 = vpop.f32.mrb[0].mxu0
    %859 = vdwg.mxu0
    %v860 = vtanh.pop %v813
    %v861 = vtanh.pop %v815
    %v862 = vtanh.pop %v854
    %v863 = vtanh.pop %v856
    %v864 = vmul.f32 %v860, 0.5
    %v865 = vmul.f32 %v861, 0.5
    %v866 = vmul.f32 %v862, 0.5
    %v867 = vadd.f32 %v864, 0.5
    %v868 = vadd.f32 %v865, 0.5
    %v869 = vadd.f32 %v866, 0.5
    %v870 = vmul.f32 %v868, %v579
    %v871 = vmul.f32 %v867, %v863
    %v872 = vadd.f32 %v870, %v871
    %v873 = vtanh.pop %v872
    %v874 = vmul.f32 %v869, %v873
    %v875 = vpack.c.bf16 %v874, %v874
    %s876 = scalar_lea.vmem [#allocation4], 16
    %v877 = vld [vmem:[%s876] sm:$0xff]
    %v878 = vld [vmem:[%s876 + $0x8] sm:$0xff]
    %v879 = vunpack.c.l.bf16 %v877
    %v880 = vunpack.c.h.bf16 %v877
    %v881 = vunpack.c.l.bf16 %v878
    %v882 = vunpack.c.h.bf16 %v878
    %883 = vmatprep.subr.bf16.mxu0 %v715
    %884 = vmatpush1.bf16.msra.mxu0 %v714
    %885 = vmatprep.subr.bf16.mxu0 %v719
    %886 = vmatpush1.bf16.msra.mxu0 %v718
    %887 = vmatprep.subr.bf16.mxu0 %v723
    %888 = vmatpush1.bf16.msra.mxu0 %v722
    %889 = vmatprep.subr.bf16.mxu0 %v727
    %890 = vmatpush1.bf16.msra.mxu0 %v726
    %891 = vmatprep.subr.bf16.mxu0 %v731
    %892 = vmatpush1.bf16.msra.mxu0 %v730
    %893 = vmatprep.subr.bf16.mxu0 %v735
    %894 = vmatpush1.bf16.msra.mxu0 %v734
    %895 = vmatprep.subr.bf16.mxu0 %v739
    %896 = vmatpush1.bf16.msra.mxu0 %v738
    %897 = vmatprep.subr.bf16.mxu0 %v743
    %898 = vmatpush1.bf16.msra.mxu0 %v742
    %899 = vmatprep.subr.bf16.mxu0 0
    %900 = vmatpush1.bf16.msra.mxu0 0
    %901 = vmatprep.subr.bf16.mxu0 0
    %902 = vmatpush1.bf16.msra.mxu0 0
    %903 = vmatprep.subr.bf16.mxu0 0
    %904 = vmatpush1.bf16.msra.mxu0 0
    %905 = vmatprep.subr.bf16.mxu0 0
    %906 = vmatpush1.bf16.msra.mxu0 0
    %907 = vmatprep.subr.bf16.mxu0 0
    %908 = vmatpush1.bf16.msra.mxu0 0
    %909 = vmatprep.subr.bf16.mxu0 0
    %910 = vmatpush1.bf16.msra.mxu0 0
    %911 = vmatprep.subr.bf16.mxu0 0
    %912 = vmatpush1.bf16.msra.mxu0 0
    %913 = vmatprep.subr.bf16.mxu0 0
    %914 = vmatpush1.bf16.msra.mxu0 0
    %915 = vmatprep.mubr.bf16.mxu0 0
    %916 = vmatmul.mubr.bf16.gmra.mrb[0].mxu0 %v875
    %v917 = vpop.f32.mrb[0].mxu0
    %v918 = vadd.f32 %v879, %v917
    %v919 = vpop.f32.mrb[0].mxu0
    %v920 = vadd.f32 %v880, %v919
    %v921 = vpop.f32.mrb[0].mxu0
    %v922 = vpop.f32.mrb[0].mxu0
    %923 = vdwg.mxu0
    %924 = vmatprep.subr.bf16.mxu0 %v717
    %925 = vmatpush1.bf16.msra.mxu0 %v716
    %926 = vmatprep.subr.bf16.mxu0 %v721
    %927 = vmatpush1.bf16.msra.mxu0 %v720
    %928 = vmatprep.subr.bf16.mxu0 %v725
    %929 = vmatpush1.bf16.msra.mxu0 %v724
    %930 = vmatprep.subr.bf16.mxu0 %v729
    %931 = vmatpush1.bf16.msra.mxu0 %v728
    %932 = vmatprep.subr.bf16.mxu0 %v733
    %933 = vmatpush1.bf16.msra.mxu0 %v732
    %934 = vmatprep.subr.bf16.mxu0 %v737
    %935 = vmatpush1.bf16.msra.mxu0 %v736
    %936 = vmatprep.subr.bf16.mxu0 %v741
    %937 = vmatpush1.bf16.msra.mxu0 %v740
    %938 = vmatprep.subr.bf16.mxu0 %v745
    %939 = vmatpush1.bf16.msra.mxu0 %v744
    %940 = vmatprep.subr.bf16.mxu0 0
    %941 = vmatpush1.bf16.msra.mxu0 0
    %942 = vmatprep.subr.bf16.mxu0 0
    %943 = vmatpush1.bf16.msra.mxu0 0
    %944 = vmatprep.subr.bf16.mxu0 0
    %945 = vmatpush1.bf16.msra.mxu0 0
    %946 = vmatprep.subr.bf16.mxu0 0
    %947 = vmatpush1.bf16.msra.mxu0 0
    %948 = vmatprep.subr.bf16.mxu0 0
    %949 = vmatpush1.bf16.msra.mxu0 0
    %950 = vmatprep.subr.bf16.mxu0 0
    %951 = vmatpush1.bf16.msra.mxu0 0
    %952 = vmatprep.subr.bf16.mxu0 0
    %953 = vmatpush1.bf16.msra.mxu0 0
    %954 = vmatprep.subr.bf16.mxu0 0
    %955 = vmatpush1.bf16.msra.mxu0 0
    %956 = vmatprep.mubr.bf16.mxu0 0
    %957 = vmatmul.mubr.bf16.gmra.mrb[0].mxu0 %v875
    %v958 = vpop.f32.mrb[0].mxu0
    %v959 = vadd.f32 %v881, %v958
    %v960 = vpop.f32.mrb[0].mxu0
    %v961 = vadd.f32 %v882, %v960
    %v962 = vpop.f32.mrb[0].mxu0
    %v963 = vpop.f32.mrb[0].mxu0
    %964 = vdwg.mxu0
    %v965 = vtanh.pop %v918
    %v966 = vtanh.pop %v920
    %v967 = vtanh.pop %v959
    %v968 = vtanh.pop %v961
    %v969 = vmul.f32 %v965, 0.5
    %v970 = vmul.f32 %v966, 0.5
    %v971 = vmul.f32 %v967, 0.5
    %v972 = vadd.f32 %v969, 0.5
    %v973 = vadd.f32 %v970, 0.5
    %v974 = vadd.f32 %v971, 0.5
    %v975 = vmul.f32 %v973, %v872
    %v976 = vmul.f32 %v972, %v968
    %v977 = vadd.f32 %v975, %v976
    %v978 = vtanh.pop %v977
    %v979 = vmul.f32 %v974, %v978
    %v980 = vpack.c.bf16 %v979, %v979
    %s981 = scalar_lea.vmem [#allocation4], 32
    %v982 = vld [vmem:[%s981] sm:$0xff]
    %v983 = vld [vmem:[%s981 + $0x8] sm:$0xff]
    %v984 = vunpack.c.l.bf16 %v982
    %v985 = vunpack.c.h.bf16 %v982
    %v986 = vunpack.c.l.bf16 %v983
    %v987 = vunpack.c.h.bf16 %v983
    %988 = vmatprep.subr.bf16.mxu0 %v715
    %989 = vmatpush1.bf16.msra.mxu0 %v714
    %990 = vmatprep.subr.bf16.mxu0 %v719
    %991 = vmatpush1.bf16.msra.mxu0 %v718
    %992 = vmatprep.subr.bf16.mxu0 %v723
    %993 = vmatpush1.bf16.msra.mxu0 %v722
    %994 = vmatprep.subr.bf16.mxu0 %v727
    %995 = vmatpush1.bf16.msra.mxu0 %v726
    %996 = vmatprep.subr.bf16.mxu0 %v731
    %997 = vmatpush1.bf16.msra.mxu0 %v730
    %998 = vmatprep.subr.bf16.mxu0 %v735
    %999 = vmatpush1.bf16.msra.mxu0 %v734
    %1000 = vmatprep.subr.bf16.mxu0 %v739
    %1001 = vmatpush1.bf16.msra.mxu0 %v738
    %1002 = vmatprep.subr.bf16.mxu0 %v743
    %1003 = vmatpush1.bf16.msra.mxu0 %v742
    %1004 = vmatprep.subr.bf16.mxu0 0
    %1005 = vmatpush1.bf16.msra.mxu0 0
    %1006 = vmatprep.subr.bf16.mxu0 0
    %1007 = vmatpush1.bf16.msra.mxu0 0
    %1008 = vmatprep.subr.bf16.mxu0 0
    %1009 = vmatpush1.bf16.msra.mxu0 0
    %1010 = vmatprep.subr.bf16.mxu0 0
    %1011 = vmatpush1.bf16.msra.mxu0 0
    %1012 = vmatprep.subr.bf16.mxu0 0
    %1013 = vmatpush1.bf16.msra.mxu0 0
    %1014 = vmatprep.subr.bf16.mxu0 0
    %1015 = vmatpush1.bf16.msra.mxu0 0
    %1016 = vmatprep.subr.bf16.mxu0 0
    %1017 = vmatpush1.bf16.msra.mxu0 0
    %1018 = vmatprep.subr.bf16.mxu0 0
    %1019 = vmatpush1.bf16.msra.mxu0 0
    %1020 = vmatprep.mubr.bf16.mxu0 0
    %1021 = vmatmul.mubr.bf16.gmra.mrb[0].mxu0 %v980
    %v1022 = vpop.f32.mrb[0].mxu0
    %v1023 = vadd.f32 %v984, %v1022
    %v1024 = vpop.f32.mrb[0].mxu0
    %v1025 = vadd.f32 %v985, %v1024
    %v1026 = vpop.f32.mrb[0].mxu0
    %v1027 = vpop.f32.mrb[0].mxu0
    %1028 = vdwg.mxu0
    %1029 = vmatprep.subr.bf16.mxu0 %v717
    %1030 = vmatpush1.bf16.msra.mxu0 %v716
    %1031 = vmatprep.subr.bf16.mxu0 %v721
    %1032 = vmatpush1.bf16.msra.mxu0 %v720
    %1033 = vmatprep.subr.bf16.mxu0 %v725
    %1034 = vmatpush1.bf16.msra.mxu0 %v724
    %1035 = vmatprep.subr.bf16.mxu0 %v729
    %1036 = vmatpush1.bf16.msra.mxu0 %v728
    %1037 = vmatprep.subr.bf16.mxu0 %v733
    %1038 = vmatpush1.bf16.msra.mxu0 %v732
    %1039 = vmatprep.subr.bf16.mxu0 %v737
    %1040 = vmatpush1.bf16.msra.mxu0 %v736
    %1041 = vmatprep.subr.bf16.mxu0 %v741
    %1042 = vmatpush1.bf16.msra.mxu0 %v740
    %1043 = vmatprep.subr.bf16.mxu0 %v745
    %1044 = vmatpush1.bf16.msra.mxu0 %v744
    %1045 = vmatprep.subr.bf16.mxu0 0
    %1046 = vmatpush1.bf16.msra.mxu0 0
    %1047 = vmatprep.subr.bf16.mxu0 0
    %1048 = vmatpush1.bf16.msra.mxu0 0
    %1049 = vmatprep.subr.bf16.mxu0 0
    %1050 = vmatpush1.bf16.msra.mxu0 0
    %1051 = vmatprep.subr.bf16.mxu0 0
    %1052 = vmatpush1.bf16.msra.mxu0 0
    %1053 = vmatprep.subr.bf16.mxu0 0
    %1054 = vmatpush1.bf16.msra.mxu0 0
    %1055 = vmatprep.subr.bf16.mxu0 0
    %1056 = vmatpush1.bf16.msra.mxu0 0
    %1057 = vmatprep.subr.bf16.mxu0 0
    %1058 = vmatpush1.bf16.msra.mxu0 0
    %1059 = vmatprep.subr.bf16.mxu0 0
    %1060 = vmatpush1.bf16.msra.mxu0 0
    %1061 = vmatprep.mubr.bf16.mxu0 0
    %1062 = vmatmul.mubr.bf16.gmra.mrb[0].mxu0 %v980
    %v1063 = vpop.f32.mrb[0].mxu0
    %v1064 = vadd.f32 %v986, %v1063
    %v1065 = vpop.f32.mrb[0].mxu0
    %v1066 = vadd.f32 %v987, %v1065
    %v1067 = vpop.f32.mrb[0].mxu0
    %v1068 = vpop.f32.mrb[0].mxu0
    %1069 = vdwg.mxu0
    %v1070 = vtanh.pop %v1023
    %v1071 = vtanh.pop %v1025
    %v1072 = vtanh.pop %v1064
    %v1073 = vtanh.pop %v1066
    %v1074 = vmul.f32 %v1070, 0.5
    %v1075 = vmul.f32 %v1071, 0.5
    %v1076 = vmul.f32 %v1072, 0.5
    %v1077 = vadd.f32 %v1074, 0.5
    %v1078 = vadd.f32 %v1075, 0.5
    %v1079 = vadd.f32 %v1076, 0.5
    %v1080 = vmul.f32 %v1078, %v977
    %v1081 = vmul.f32 %v1077, %v1073
    %v1082 = vadd.f32 %v1080, %v1081
    %v1083 = vtanh.pop %v1082
    %v1084 = vmul.f32 %v1079, %v1083
    %v1085 = vpack.c.bf16 %v1084, %v1084
    %s1086 = scalar_lea.vmem [#allocation4], 48
    %v1087 = vld [vmem:[%s1086] sm:$0xff]
    %v1088 = vld [vmem:[%s1086 + $0x8] sm:$0xff]
    %v1089 = vunpack.c.l.bf16 %v1087
    %v1090 = vunpack.c.h.bf16 %v1087
    %v1091 = vunpack.c.l.bf16 %v1088
    %v1092 = vunpack.c.h.bf16 %v1088
    %1093 = vmatprep.subr.bf16.mxu0 %v715
    %1094 = vmatpush1.bf16.msra.mxu0 %v714
    %1095 = vmatprep.subr.bf16.mxu0 %v719
    %1096 = vmatpush1.bf16.msra.mxu0 %v718
    %1097 = vmatprep.subr.bf16.mxu0 %v723
    %1098 = vmatpush1.bf16.msra.mxu0 %v722
    %1099 = vmatprep.subr.bf16.mxu0 %v727
    %1100 = vmatpush1.bf16.msra.mxu0 %v726
    %1101 = vmatprep.subr.bf16.mxu0 %v731
    %1102 = vmatpush1.bf16.msra.mxu0 %v730
    %1103 = vmatprep.subr.bf16.mxu0 %v735
    %1104 = vmatpush1.bf16.msra.mxu0 %v734
    %1105 = vmatprep.subr.bf16.mxu0 %v739
    %1106 = vmatpush1.bf16.msra.mxu0 %v738
    %1107 = vmatprep.subr.bf16.mxu0 %v743
    %1108 = vmatpush1.bf16.msra.mxu0 %v742
    %1109 = vmatprep.subr.bf16.mxu0 0
    %1110 = vmatpush1.bf16.msra.mxu0 0
    %1111 = vmatprep.subr.bf16.mxu0 0
    %1112 = vmatpush1.bf16.msra.mxu0 0
    %1113 = vmatprep.subr.bf16.mxu0 0
    %1114 = vmatpush1.bf16.msra.mxu0 0
    %1115 = vmatprep.subr.bf16.mxu0 0
    %1116 = vmatpush1.bf16.msra.mxu0 0
    %1117 = vmatprep.subr.bf16.mxu0 0
    %1118 = vmatpush1.bf16.msra.mxu0 0
    %1119 = vmatprep.subr.bf16.mxu0 0
    %1120 = vmatpush1.bf16.msra.mxu0 0
    %1121 = vmatprep.subr.bf16.mxu0 0
    %1122 = vmatpush1.bf16.msra.mxu0 0
    %1123 = vmatprep.subr.bf16.mxu0 0
    %1124 = vmatpush1.bf16.msra.mxu0 0
    %1125 = vmatprep.mubr.bf16.mxu0 0
    %1126 = vmatmul.mubr.bf16.gmra.mrb[0].mxu0 %v1085
    %v1127 = vpop.f32.mrb[0].mxu0
    %v1128 = vadd.f32 %v1089, %v1127
    %v1129 = vpop.f32.mrb[0].mxu0
    %v1130 = vadd.f32 %v1090, %v1129
    %v1131 = vpop.f32.mrb[0].mxu0
    %v1132 = vpop.f32.mrb[0].mxu0
    %1133 = vdwg.mxu0
    %1134 = vmatprep.subr.bf16.mxu0 %v717
    %1135 = vmatpush1.bf16.msra.mxu0 %v716
    %1136 = vmatprep.subr.bf16.mxu0 %v721
    %1137 = vmatpush1.bf16.msra.mxu0 %v720
    %1138 = vmatprep.subr.bf16.mxu0 %v725
    %1139 = vmatpush1.bf16.msra.mxu0 %v724
    %1140 = vmatprep.subr.bf16.mxu0 %v729
    %1141 = vmatpush1.bf16.msra.mxu0 %v728
    %1142 = vmatprep.subr.bf16.mxu0 %v733
    %1143 = vmatpush1.bf16.msra.mxu0 %v732
    %1144 = vmatprep.subr.bf16.mxu0 %v737
    %1145 = vmatpush1.bf16.msra.mxu0 %v736
    %1146 = vmatprep.subr.bf16.mxu0 %v741
    %1147 = vmatpush1.bf16.msra.mxu0 %v740
    %1148 = vmatprep.subr.bf16.mxu0 %v745
    %1149 = vmatpush1.bf16.msra.mxu0 %v744
    %1150 = vmatprep.subr.bf16.mxu0 0
    %1151 = vmatpush1.bf16.msra.mxu0 0
    %1152 = vmatprep.subr.bf16.mxu0 0
    %1153 = vmatpush1.bf16.msra.mxu0 0
    %1154 = vmatprep.subr.bf16.mxu0 0
    %1155 = vmatpush1.bf16.msra.mxu0 0
    %1156 = vmatprep.subr.bf16.mxu0 0
    %1157 = vmatpush1.bf16.msra.mxu0 0
    %1158 = vmatprep.subr.bf16.mxu0 0
    %1159 = vmatpush1.bf16.msra.mxu0 0
    %1160 = vmatprep.subr.bf16.mxu0 0
    %1161 = vmatpush1.bf16.msra.mxu0 0
    %1162 = vmatprep.subr.bf16.mxu0 0
    %1163 = vmatpush1.bf16.msra.mxu0 0
    %1164 = vmatprep.subr.bf16.mxu0 0
    %1165 = vmatpush1.bf16.msra.mxu0 0
    %1166 = vmatprep.mubr.bf16.mxu0 0
    %1167 = vmatmul.mubr.bf16.gmra.mrb[0].mxu0 %v1085
    %v1168 = vpop.f32.mrb[0].mxu0
    %v1169 = vadd.f32 %v1091, %v1168
    %v1170 = vpop.f32.mrb[0].mxu0
    %v1171 = vadd.f32 %v1092, %v1170
    %v1172 = vpop.f32.mrb[0].mxu0
    %v1173 = vpop.f32.mrb[0].mxu0
    %1174 = vdwg.mxu0
    %v1175 = vtanh.pop %v1128
    %v1176 = vtanh.pop %v1130
    %v1177 = vtanh.pop %v1169
    %v1178 = vtanh.pop %v1171
    %v1179 = vmul.f32 %v1175, 0.5
    %v1180 = vmul.f32 %v1176, 0.5
    %v1181 = vmul.f32 %v1177, 0.5
    %v1182 = vadd.f32 %v1179, 0.5
    %v1183 = vadd.f32 %v1180, 0.5
    %v1184 = vadd.f32 %v1181, 0.5
    %v1185 = vmul.f32 %v1183, %v1082
    %v1186 = vmul.f32 %v1182, %v1178
    %v1187 = vadd.f32 %v1185, %v1186
    %v1188 = vtanh.pop %v1187
    %v1189 = vmul.f32 %v1184, %v1188
    %v1190 = vpack.c.bf16 %v1189, %v1189
    %s1191 = scalar_lea.vmem [#allocation4], 64
    %v1192 = vld [vmem:[%s1191] sm:$0xff]
    %v1193 = vld [vmem:[%s1191 + $0x8] sm:$0xff]
    %v1194 = vunpack.c.l.bf16 %v1192
    %v1195 = vunpack.c.h.bf16 %v1192
    %v1196 = vunpack.c.l.bf16 %v1193
    %v1197 = vunpack.c.h.bf16 %v1193
    %1198 = vmatprep.subr.bf16.mxu0 %v715
    %1199 = vmatpush1.bf16.msra.mxu0 %v714
    %1200 = vmatprep.subr.bf16.mxu0 %v719
    %1201 = vmatpush1.bf16.msra.mxu0 %v718
    %1202 = vmatprep.subr.bf16.mxu0 %v723
    %1203 = vmatpush1.bf16.msra.mxu0 %v722
    %1204 = vmatprep.subr.bf16.mxu0 %v727
    %1205 = vmatpush1.bf16.msra.mxu0 %v726
    %1206 = vmatprep.subr.bf16.mxu0 %v731
    %1207 = vmatpush1.bf16.msra.mxu0 %v730
    %1208 = vmatprep.subr.bf16.mxu0 %v735
    %1209 = vmatpush1.bf16.msra.mxu0 %v734
    %1210 = vmatprep.subr.bf16.mxu0 %v739
    %1211 = vmatpush1.bf16.msra.mxu0 %v738
    %1212 = vmatprep.subr.bf16.mxu0 %v743
    %1213 = vmatpush1.bf16.msra.mxu0 %v742
    %1214 = vmatprep.subr.bf16.mxu0 0
    %1215 = vmatpush1.bf16.msra.mxu0 0
    %1216 = vmatprep.subr.bf16.mxu0 0
    %1217 = vmatpush1.bf16.msra.mxu0 0
    %1218 = vmatprep.subr.bf16.mxu0 0
    %1219 = vmatpush1.bf16.msra.mxu0 0
    %1220 = vmatprep.subr.bf16.mxu0 0
    %1221 = vmatpush1.bf16.msra.mxu0 0
    %1222 = vmatprep.subr.bf16.mxu0 0
    %1223 = vmatpush1.bf16.msra.mxu0 0
    %1224 = vmatprep.subr.bf16.mxu0 0
    %1225 = vmatpush1.bf16.msra.mxu0 0
    %1226 = vmatprep.subr.bf16.mxu0 0
    %1227 = vmatpush1.bf16.msra.mxu0 0
    %1228 = vmatprep.subr.bf16.mxu0 0
    %1229 = vmatpush1.bf16.msra.mxu0 0
    %1230 = vmatprep.mubr.bf16.mxu0 0
    %1231 = vmatmul.mubr.bf16.gmra.mrb[0].mxu0 %v1190
    %v1232 = vpop.f32.mrb[0].mxu0
    %v1233 = vadd.f32 %v1194, %v1232
    %v1234 = vpop.f32.mrb[0].mxu0
    %v1235 = vadd.f32 %v1195, %v1234
    %v1236 = vpop.f32.mrb[0].mxu0
    %v1237 = vpop.f32.mrb[0].mxu0
    %1238 = vdwg.mxu0
    %1239 = vmatprep.subr.bf16.mxu0 %v717
    %1240 = vmatpush1.bf16.msra.mxu0 %v716
    %1241 = vmatprep.subr.bf16.mxu0 %v721
    %1242 = vmatpush1.bf16.msra.mxu0 %v720
    %1243 = vmatprep.subr.bf16.mxu0 %v725
    %1244 = vmatpush1.bf16.msra.mxu0 %v724
    %1245 = vmatprep.subr.bf16.mxu0 %v729
    %1246 = vmatpush1.bf16.msra.mxu0 %v728
    %1247 = vmatprep.subr.bf16.mxu0 %v733
    %1248 = vmatpush1.bf16.msra.mxu0 %v732
    %1249 = vmatprep.subr.bf16.mxu0 %v737
    %1250 = vmatpush1.bf16.msra.mxu0 %v736
    %1251 = vmatprep.subr.bf16.mxu0 %v741
    %1252 = vmatpush1.bf16.msra.mxu0 %v740
    %1253 = vmatprep.subr.bf16.mxu0 %v745
    %1254 = vmatpush1.bf16.msra.mxu0 %v744
    %1255 = vmatprep.subr.bf16.mxu0 0
    %1256 = vmatpush1.bf16.msra.mxu0 0
    %1257 = vmatprep.subr.bf16.mxu0 0
    %1258 = vmatpush1.bf16.msra.mxu0 0
    %1259 = vmatprep.subr.bf16.mxu0 0
    %1260 = vmatpush1.bf16.msra.mxu0 0
    %1261 = vmatprep.subr.bf16.mxu0 0
    %1262 = vmatpush1.bf16.msra.mxu0 0
    %1263 = vmatprep.subr.bf16.mxu0 0
    %1264 = vmatpush1.bf16.msra.mxu0 0
    %1265 = vmatprep.subr.bf16.mxu0 0
    %1266 = vmatpush1.bf16.msra.mxu0 0
    %1267 = vmatprep.subr.bf16.mxu0 0
    %1268 = vmatpush1.bf16.msra.mxu0 0
    %1269 = vmatprep.subr.bf16.mxu0 0
    %1270 = vmatpush1.bf16.msra.mxu0 0
    %1271 = vmatprep.mubr.bf16.mxu0 0
    %1272 = vmatmul.mubr.bf16.gmra.mrb[0].mxu0 %v1190
    %v1273 = vpop.f32.mrb[0].mxu0
    %v1274 = vadd.f32 %v1196, %v1273
    %v1275 = vpop.f32.mrb[0].mxu0
    %v1276 = vadd.f32 %v1197, %v1275
    %v1277 = vpop.f32.mrb[0].mxu0
    %v1278 = vpop.f32.mrb[0].mxu0
    %1279 = vdwg.mxu0
    %v1280 = vtanh.pop %v1233
    %v1281 = vtanh.pop %v1235
    %v1282 = vtanh.pop %v1274
    %v1283 = vtanh.pop %v1276
    %v1284 = vmul.f32 %v1280, 0.5
    %v1285 = vmul.f32 %v1281, 0.5
    %v1286 = vmul.f32 %v1282, 0.5
    %v1287 = vadd.f32 %v1284, 0.5
    %v1288 = vadd.f32 %v1285, 0.5
    %v1289 = vadd.f32 %v1286, 0.5
    %v1290 = vmul.f32 %v1288, %v1187
    %v1291 = vmul.f32 %v1287, %v1283
    %v1292 = vadd.f32 %v1290, %v1291
    %v1293 = vtanh.pop %v1292
    %v1294 = vmul.f32 %v1289, %v1293
    %v1295 = vpack.c.bf16 %v1294, %v1294
    %s1296 = scalar_lea.vmem [#allocation4], 80
    %v1297 = vld [vmem:[%s1296] sm:$0xff]
    %v1298 = vld [vmem:[%s1296 + $0x8] sm:$0xff]
    %v1299 = vunpack.c.l.bf16 %v1297
    %v1300 = vunpack.c.h.bf16 %v1297
    %v1301 = vunpack.c.l.bf16 %v1298
    %v1302 = vunpack.c.h.bf16 %v1298
    %1303 = vmatprep.subr.bf16.mxu0 %v715
    %1304 = vmatpush1.bf16.msra.mxu0 %v714
    %1305 = vmatprep.subr.bf16.mxu0 %v719
    %1306 = vmatpush1.bf16.msra.mxu0 %v718
    %1307 = vmatprep.subr.bf16.mxu0 %v723
    %1308 = vmatpush1.bf16.msra.mxu0 %v722
    %1309 = vmatprep.subr.bf16.mxu0 %v727
    %1310 = vmatpush1.bf16.msra.mxu0 %v726
    %1311 = vmatprep.subr.bf16.mxu0 %v731
    %1312 = vmatpush1.bf16.msra.mxu0 %v730
    %1313 = vmatprep.subr.bf16.mxu0 %v735
    %1314 = vmatpush1.bf16.msra.mxu0 %v734
    %1315 = vmatprep.subr.bf16.mxu0 %v739
    %1316 = vmatpush1.bf16.msra.mxu0 %v738
    %1317 = vmatprep.subr.bf16.mxu0 %v743
    %1318 = vmatpush1.bf16.msra.mxu0 %v742
    %1319 = vmatprep.subr.bf16.mxu0 0
    %1320 = vmatpush1.bf16.msra.mxu0 0
    %1321 = vmatprep.subr.bf16.mxu0 0
    %1322 = vmatpush1.bf16.msra.mxu0 0
    %1323 = vmatprep.subr.bf16.mxu0 0
    %1324 = vmatpush1.bf16.msra.mxu0 0
    %1325 = vmatprep.subr.bf16.mxu0 0
    %1326 = vmatpush1.bf16.msra.mxu0 0
    %1327 = vmatprep.subr.bf16.mxu0 0
    %1328 = vmatpush1.bf16.msra.mxu0 0
    %1329 = vmatprep.subr.bf16.mxu0 0
    %1330 = vmatpush1.bf16.msra.mxu0 0
    %1331 = vmatprep.subr.bf16.mxu0 0
    %1332 = vmatpush1.bf16.msra.mxu0 0
    %1333 = vmatprep.subr.bf16.mxu0 0
    %1334 = vmatpush1.bf16.msra.mxu0 0
    %1335 = vmatprep.mubr.bf16.mxu0 0
    %1336 = vmatmul.mubr.bf16.gmra.mrb[0].mxu0 %v1295
    %v1337 = vpop.f32.mrb[0].mxu0
    %v1338 = vadd.f32 %v1299, %v1337
    %v1339 = vpop.f32.mrb[0].mxu0
    %v1340 = vadd.f32 %v1300, %v1339
    %v1341 = vpop.f32.mrb[0].mxu0
    %v1342 = vpop.f32.mrb[0].mxu0
    %1343 = vdwg.mxu0
    %1344 = vmatprep.subr.bf16.mxu0 %v717
    %1345 = vmatpush1.bf16.msra.mxu0 %v716
    %1346 = vmatprep.subr.bf16.mxu0 %v721
    %1347 = vmatpush1.bf16.msra.mxu0 %v720
    %1348 = vmatprep.subr.bf16.mxu0 %v725
    %1349 = vmatpush1.bf16.msra.mxu0 %v724
    %1350 = vmatprep.subr.bf16.mxu0 %v729
    %1351 = vmatpush1.bf16.msra.mxu0 %v728
    %1352 = vmatprep.subr.bf16.mxu0 %v733
    %1353 = vmatpush1.bf16.msra.mxu0 %v732
    %1354 = vmatprep.subr.bf16.mxu0 %v737
    %1355 = vmatpush1.bf16.msra.mxu0 %v736
    %1356 = vmatprep.subr.bf16.mxu0 %v741
    %1357 = vmatpush1.bf16.msra.mxu0 %v740
    %1358 = vmatprep.subr.bf16.mxu0 %v745
    %1359 = vmatpush1.bf16.msra.mxu0 %v744
    %1360 = vmatprep.subr.bf16.mxu0 0
    %1361 = vmatpush1.bf16.msra.mxu0 0
    %1362 = vmatprep.subr.bf16.mxu0 0
    %1363 = vmatpush1.bf16.msra.mxu0 0
    %1364 = vmatprep.subr.bf16.mxu0 0
    %1365 = vmatpush1.bf16.msra.mxu0 0
    %1366 = vmatprep.subr.bf16.mxu0 0
    %1367 = vmatpush1.bf16.msra.mxu0 0
    %1368 = vmatprep.subr.bf16.mxu0 0
    %1369 = vmatpush1.bf16.msra.mxu0 0
    %1370 = vmatprep.subr.bf16.mxu0 0
    %1371 = vmatpush1.bf16.msra.mxu0 0
    %1372 = vmatprep.subr.bf16.mxu0 0
    %1373 = vmatpush1.bf16.msra.mxu0 0
    %1374 = vmatprep.subr.bf16.mxu0 0
    %1375 = vmatpush1.bf16.msra.mxu0 0
    %1376 = vmatprep.mubr.bf16.mxu0 0
    %1377 = vmatmul.mubr.bf16.gmra.mrb[0].mxu0 %v1295
    %v1378 = vpop.f32.mrb[0].mxu0
    %v1379 = vadd.f32 %v1301, %v1378
    %v1380 = vpop.f32.mrb[0].mxu0
    %v1381 = vadd.f32 %v1302, %v1380
    %v1382 = vpop.f32.mrb[0].mxu0
    %v1383 = vpop.f32.mrb[0].mxu0
    %1384 = vdwg.mxu0
    %v1385 = vtanh.pop %v1338
    %v1386 = vtanh.pop %v1340
    %v1387 = vtanh.pop %v1379
    %v1388 = vtanh.pop %v1381
    %v1389 = vmul.f32 %v1385, 0.5
    %v1390 = vmul.f32 %v1386, 0.5
    %v1391 = vmul.f32 %v1387, 0.5
    %v1392 = vadd.f32 %v1389, 0.5
    %v1393 = vadd.f32 %v1390, 0.5
    %v1394 = vadd.f32 %v1391, 0.5
    %v1395 = vmul.f32 %v1393, %v1292
    %v1396 = vmul.f32 %v1392, %v1388
    %v1397 = vadd.f32 %v1395, %v1396
    %v1398 = vtanh.pop %v1397
    %v1399 = vmul.f32 %v1394, %v1398
    %v1400 = vpack.c.bf16 %v1399, %v1399
    %s1401 = scalar_lea.vmem [#allocation4], 96
    %v1402 = vld [vmem:[%s1401] sm:$0xff]
    %v1403 = vld [vmem:[%s1401 + $0x8] sm:$0xff]
    %v1404 = vunpack.c.l.bf16 %v1402
    %v1405 = vunpack.c.h.bf16 %v1402
    %v1406 = vunpack.c.l.bf16 %v1403
    %v1407 = vunpack.c.h.bf16 %v1403
    %1408 = vmatprep.subr.bf16.mxu0 %v715
    %1409 = vmatpush1.bf16.msra.mxu0 %v714
    %1410 = vmatprep.subr.bf16.mxu0 %v719
    %1411 = vmatpush1.bf16.msra.mxu0 %v718
    %1412 = vmatprep.subr.bf16.mxu0 %v723
    %1413 = vmatpush1.bf16.msra.mxu0 %v722
    %1414 = vmatprep.subr.bf16.mxu0 %v727
    %1415 = vmatpush1.bf16.msra.mxu0 %v726
    %1416 = vmatprep.subr.bf16.mxu0 %v731
    %1417 = vmatpush1.bf16.msra.mxu0 %v730
    %1418 = vmatprep.subr.bf16.mxu0 %v735
    %1419 = vmatpush1.bf16.msra.mxu0 %v734
    %1420 = vmatprep.subr.bf16.mxu0 %v739
    %1421 = vmatpush1.bf16.msra.mxu0 %v738
    %1422 = vmatprep.subr.bf16.mxu0 %v743
    %1423 = vmatpush1.bf16.msra.mxu0 %v742
    %1424 = vmatprep.subr.bf16.mxu0 0
    %1425 = vmatpush1.bf16.msra.mxu0 0
    %1426 = vmatprep.subr.bf16.mxu0 0
    %1427 = vmatpush1.bf16.msra.mxu0 0
    %1428 = vmatprep.subr.bf16.mxu0 0
    %1429 = vmatpush1.bf16.msra.mxu0 0
    %1430 = vmatprep.subr.bf16.mxu0 0
    %1431 = vmatpush1.bf16.msra.mxu0 0
    %1432 = vmatprep.subr.bf16.mxu0 0
    %1433 = vmatpush1.bf16.msra.mxu0 0
    %1434 = vmatprep.subr.bf16.mxu0 0
    %1435 = vmatpush1.bf16.msra.mxu0 0
    %1436 = vmatprep.subr.bf16.mxu0 0
    %1437 = vmatpush1.bf16.msra.mxu0 0
    %1438 = vmatprep.subr.bf16.mxu0 0
    %1439 = vmatpush1.bf16.msra.mxu0 0
    %1440 = vmatprep.mubr.bf16.mxu0 0
    %1441 = vmatmul.mubr.bf16.gmra.mrb[0].mxu0 %v1400
    %v1442 = vpop.f32.mrb[0].mxu0
    %v1443 = vadd.f32 %v1404, %v1442
    %v1444 = vpop.f32.mrb[0].mxu0
    %v1445 = vadd.f32 %v1405, %v1444
    %v1446 = vpop.f32.mrb[0].mxu0
    %v1447 = vpop.f32.mrb[0].mxu0
    %1448 = vdwg.mxu0
    %1449 = vmatprep.subr.bf16.mxu0 %v717
    %1450 = vmatpush1.bf16.msra.mxu0 %v716
    %1451 = vmatprep.subr.bf16.mxu0 %v721
    %1452 = vmatpush1.bf16.msra.mxu0 %v720
    %1453 = vmatprep.subr.bf16.mxu0 %v725
    %1454 = vmatpush1.bf16.msra.mxu0 %v724
    %1455 = vmatprep.subr.bf16.mxu0 %v729
    %1456 = vmatpush1.bf16.msra.mxu0 %v728
    %1457 = vmatprep.subr.bf16.mxu0 %v733
    %1458 = vmatpush1.bf16.msra.mxu0 %v732
    %1459 = vmatprep.subr.bf16.mxu0 %v737
    %1460 = vmatpush1.bf16.msra.mxu0 %v736
    %1461 = vmatprep.subr.bf16.mxu0 %v741
    %1462 = vmatpush1.bf16.msra.mxu0 %v740
    %1463 = vmatprep.subr.bf16.mxu0 %v745
    %1464 = vmatpush1.bf16.msra.mxu0 %v744
    %1465 = vmatprep.subr.bf16.mxu0 0
    %1466 = vmatpush1.bf16.msra.mxu0 0
    %1467 = vmatprep.subr.bf16.mxu0 0
    %1468 = vmatpush1.bf16.msra.mxu0 0
    %1469 = vmatprep.subr.bf16.mxu0 0
    %1470 = vmatpush1.bf16.msra.mxu0 0
    %1471 = vmatprep.subr.bf16.mxu0 0
    %1472 = vmatpush1.bf16.msra.mxu0 0
    %1473 = vmatprep.subr.bf16.mxu0 0
    %1474 = vmatpush1.bf16.msra.mxu0 0
    %1475 = vmatprep.subr.bf16.mxu0 0
    %1476 = vmatpush1.bf16.msra.mxu0 0
    %1477 = vmatprep.subr.bf16.mxu0 0
    %1478 = vmatpush1.bf16.msra.mxu0 0
    %1479 = vmatprep.subr.bf16.mxu0 0
    %1480 = vmatpush1.bf16.msra.mxu0 0
    %1481 = vmatprep.mubr.bf16.mxu0 0
    %1482 = vmatmul.mubr.bf16.gmra.mrb[0].mxu0 %v1400
    %v1483 = vpop.f32.mrb[0].mxu0
    %v1484 = vadd.f32 %v1406, %v1483
    %v1485 = vpop.f32.mrb[0].mxu0
    %v1486 = vadd.f32 %v1407, %v1485
    %v1487 = vpop.f32.mrb[0].mxu0
    %v1488 = vpop.f32.mrb[0].mxu0
    %1489 = vdwg.mxu0
    %v1490 = vtanh.pop %v1443
    %v1491 = vtanh.pop %v1445
    %v1492 = vtanh.pop %v1484
    %v1493 = vtanh.pop %v1486
    %v1494 = vmul.f32 %v1490, 0.5
    %v1495 = vmul.f32 %v1491, 0.5
    %v1496 = vmul.f32 %v1492, 0.5
    %v1497 = vadd.f32 %v1494, 0.5
    %v1498 = vadd.f32 %v1495, 0.5
    %v1499 = vadd.f32 %v1496, 0.5
    %v1500 = vmul.f32 %v1498, %v1397
    %v1501 = vmul.f32 %v1497, %v1493
    %v1502 = vadd.f32 %v1500, %v1501
    %v1503 = vtanh.pop %v1502
    %v1504 = vmul.f32 %v1499, %v1503
    %v1505 = vpack.c.bf16 %v1504, %v1504
    %s1506 = scalar_lea.vmem [#allocation4], 112
    %v1507 = vld [vmem:[%s1506] sm:$0xff]
    %v1508 = vld [vmem:[%s1506 + $0x8] sm:$0xff]
    %v1509 = vunpack.c.l.bf16 %v1507
    %v1510 = vunpack.c.h.bf16 %v1507
    %v1511 = vunpack.c.l.bf16 %v1508
    %v1512 = vunpack.c.h.bf16 %v1508
    %1513 = vmatprep.subr.bf16.mxu0 %v715
    %1514 = vmatpush1.bf16.msra.mxu0 %v714
    %1515 = vmatprep.subr.bf16.mxu0 %v719
    %1516 = vmatpush1.bf16.msra.mxu0 %v718
    %1517 = vmatprep.subr.bf16.mxu0 %v723
    %1518 = vmatpush1.bf16.msra.mxu0 %v722
    %1519 = vmatprep.subr.bf16.mxu0 %v727
    %1520 = vmatpush1.bf16.msra.mxu0 %v726
    %1521 = vmatprep.subr.bf16.mxu0 %v731
    %1522 = vmatpush1.bf16.msra.mxu0 %v730
    %1523 = vmatprep.subr.bf16.mxu0 %v735
    %1524 = vmatpush1.bf16.msra.mxu0 %v734
    %1525 = vmatprep.subr.bf16.mxu0 %v739
    %1526 = vmatpush1.bf16.msra.mxu0 %v738
    %1527 = vmatprep.subr.bf16.mxu0 %v743
    %1528 = vmatpush1.bf16.msra.mxu0 %v742
    %1529 = vmatprep.subr.bf16.mxu0 0
    %1530 = vmatpush1.bf16.msra.mxu0 0
    %1531 = vmatprep.subr.bf16.mxu0 0
    %1532 = vmatpush1.bf16.msra.mxu0 0
    %1533 = vmatprep.subr.bf16.mxu0 0
    %1534 = vmatpush1.bf16.msra.mxu0 0
    %1535 = vmatprep.subr.bf16.mxu0 0
    %1536 = vmatpush1.bf16.msra.mxu0 0
    %1537 = vmatprep.subr.bf16.mxu0 0
    %1538 = vmatpush1.bf16.msra.mxu0 0
    %1539 = vmatprep.subr.bf16.mxu0 0
    %1540 = vmatpush1.bf16.msra.mxu0 0
    %1541 = vmatprep.subr.bf16.mxu0 0
    %1542 = vmatpush1.bf16.msra.mxu0 0
    %1543 = vmatprep.subr.bf16.mxu0 0
    %1544 = vmatpush1.bf16.msra.mxu0 0
    %1545 = vmatprep.mubr.bf16.mxu0 0
    %1546 = vmatmul.mubr.bf16.gmra.mrb[0].mxu0 %v1505
    %v1547 = vpop.f32.mrb[0].mxu0
    %v1548 = vadd.f32 %v1509, %v1547
    %v1549 = vpop.f32.mrb[0].mxu0
    %v1550 = vadd.f32 %v1510, %v1549
    %v1551 = vpop.f32.mrb[0].mxu0
    %v1552 = vpop.f32.mrb[0].mxu0
    %1553 = vdwg.mxu0
    %1554 = vmatprep.subr.bf16.mxu0 %v717
    %1555 = vmatpush1.bf16.msra.mxu0 %v716
    %1556 = vmatprep.subr.bf16.mxu0 %v721
    %1557 = vmatpush1.bf16.msra.mxu0 %v720
    %1558 = vmatprep.subr.bf16.mxu0 %v725
    %1559 = vmatpush1.bf16.msra.mxu0 %v724
    %1560 = vmatprep.subr.bf16.mxu0 %v729
    %1561 = vmatpush1.bf16.msra.mxu0 %v728
    %1562 = vmatprep.subr.bf16.mxu0 %v733
    %1563 = vmatpush1.bf16.msra.mxu0 %v732
    %1564 = vmatprep.subr.bf16.mxu0 %v737
    %1565 = vmatpush1.bf16.msra.mxu0 %v736
    %1566 = vmatprep.subr.bf16.mxu0 %v741
    %1567 = vmatpush1.bf16.msra.mxu0 %v740
    %1568 = vmatprep.subr.bf16.mxu0 %v745
    %1569 = vmatpush1.bf16.msra.mxu0 %v744
    %1570 = vmatprep.subr.bf16.mxu0 0
    %1571 = vmatpush1.bf16.msra.mxu0 0
    %1572 = vmatprep.subr.bf16.mxu0 0
    %1573 = vmatpush1.bf16.msra.mxu0 0
    %1574 = vmatprep.subr.bf16.mxu0 0
    %1575 = vmatpush1.bf16.msra.mxu0 0
    %1576 = vmatprep.subr.bf16.mxu0 0
    %1577 = vmatpush1.bf16.msra.mxu0 0
    %1578 = vmatprep.subr.bf16.mxu0 0
    %1579 = vmatpush1.bf16.msra.mxu0 0
    %1580 = vmatprep.subr.bf16.mxu0 0
    %1581 = vmatpush1.bf16.msra.mxu0 0
    %1582 = vmatprep.subr.bf16.mxu0 0
    %1583 = vmatpush1.bf16.msra.mxu0 0
    %1584 = vmatprep.subr.bf16.mxu0 0
    %1585 = vmatpush1.bf16.msra.mxu0 0
    %1586 = vmatprep.mubr.bf16.mxu0 0
    %1587 = vmatmul.mubr.bf16.gmra.mrb[0].mxu0 %v1505
    %v1588 = vpop.f32.mrb[0].mxu0
    %v1589 = vadd.f32 %v1511, %v1588
    %v1590 = vpop.f32.mrb[0].mxu0
    %v1591 = vadd.f32 %v1512, %v1590
    %v1592 = vpop.f32.mrb[0].mxu0
    %v1593 = vpop.f32.mrb[0].mxu0
    %1594 = vdwg.mxu0
    %v1595 = vtanh.pop %v1548
    %v1596 = vtanh.pop %v1550
    %v1597 = vtanh.pop %v1589
    %v1598 = vtanh.pop %v1591
    %v1599 = vmul.f32 %v1595, 0.5
    %v1600 = vmul.f32 %v1596, 0.5
    %v1601 = vmul.f32 %v1597, 0.5
    %v1602 = vadd.f32 %v1599, 0.5
    %v1603 = vadd.f32 %v1600, 0.5
    %v1604 = vadd.f32 %v1601, 0.5
    %v1605 = vmul.f32 %v1603, %v1502
    %v1606 = vmul.f32 %v1602, %v1598
    %v1607 = vadd.f32 %v1605, %v1606
    %v1608 = vtanh.pop %v1607
    %v1609 = vmul.f32 %v1604, %v1608
    %v1610 = vpack.c.bf16 %v1609, %v1609
    %1611 = vst [vmem:[#allocation2] sm:$0xf] %v1610
    %1612 = vst [vmem:[#allocation3] sm:$0xff] %v1607
    // Predicated region
    $region34: #{lstm_model_forward.3} parent=1 // pred_check
      %p1613 = pneg %p36
    $region35: #{lstm_model_forward.3} parent=1 // pred_check_branch
      %1615 = sbr.rel (%p1613) target = $region37
    $region36: #{lstm_model_forward.3} parent=1 // pred_region
      %v1616 = vld [vmem:[%s4] sm:$0xf]
      %v1617 = vld [vmem:[%s4 + $0x4] sm:$0xf]
      %v1618 = vld [vmem:[%s4 + $0x8] sm:$0xf]
      %v1619 = vld [vmem:[%s4 + $0xc] sm:$0xf]
      %v1620 = vld [vmem:[%s4 + $0x10] sm:$0xf]
      %v1621 = vld [vmem:[%s4 + $0x14] sm:$0xf]
      %v1622 = vld [vmem:[%s4 + $0x18] sm:$0xf]
      %v1623 = vld [vmem:[%s4 + $0x1c] sm:$0xf]
      %v1624 = vld [vmem:[%s4 + $0x20] sm:$0xf]
      %v1625 = vld [vmem:[%s4 + $0x24] sm:$0xf]
      %v1626 = vld [vmem:[%s4 + $0x28] sm:$0xf]
      %v1627 = vld [vmem:[%s4 + $0x2c] sm:$0xf]
      %v1628 = vld [vmem:[%s4 + $0x30] sm:$0xf]
      %v1629 = vld [vmem:[%s4 + $0x34] sm:$0xf]
      %v1630 = vld [vmem:[%s4 + $0x38] sm:$0xf]
      %v1631 = vld [vmem:[%s4 + $0x3c] sm:$0xf]
      %v1632 = vld [vmem:[#allocation5] sm:$0x1]
      %v1634 = vlaneseq
      %v1635 = vshrl.u32 %v1634, 7
      %v1636 = vsub.s32 0, %v1635
      %v1637 = vrot.slane %v1632, %v1636
      %v1655 = vunpack.c.l.b16 %v1616
      %v1656 = vunpack.c.l.b16 %v1617
      %v1657 = vunpack.c.l.b16 %v1618
      %v1658 = vunpack.c.l.b16 %v1619
      %v1659 = vunpack.c.l.b16 %v1620
      %v1660 = vunpack.c.l.b16 %v1621
      %v1661 = vunpack.c.l.b16 %v1622
      %v1662 = vunpack.c.l.b16 %v1623
      %v1663 = vunpack.c.l.b16 %v1624
      %v1664 = vunpack.c.l.b16 %v1625
      %v1665 = vunpack.c.l.b16 %v1626
      %v1666 = vunpack.c.l.b16 %v1627
      %v1667 = vunpack.c.l.b16 %v1628
      %v1668 = vunpack.c.l.b16 %v1629
      %v1669 = vunpack.c.l.b16 %v1630
      %v1670 = vunpack.c.l.b16 %v1631
      %v1671 = vpack.c.b16 %v1656, %v1655
      %v1672 = vpack.c.b16 %v1658, %v1657
      %v1673 = vpack.c.b16 %v1660, %v1659
      %v1674 = vpack.c.b16 %v1662, %v1661
      %v1675 = vpack.c.b16 %v1664, %v1663
      %v1676 = vpack.c.b16 %v1666, %v1665
      %v1677 = vpack.c.b16 %v1668, %v1667
      %v1678 = vpack.c.b16 %v1670, %v1669
      %1687 = vmatprep.subr.bf16.mxu0 0
      %1688 = vmatpush1.bf16.msra.mxu0 %v1671
      %1689 = vmatprep.subr.bf16.mxu0 0
      %1690 = vmatpush1.bf16.msra.mxu0 %v1672
      %1691 = vmatprep.subr.bf16.mxu0 0
      %1692 = vmatpush1.bf16.msra.mxu0 %v1673
      %1693 = vmatprep.subr.bf16.mxu0 0
      %1694 = vmatpush1.bf16.msra.mxu0 %v1674
      %1695 = vmatprep.subr.bf16.mxu0 0
      %1696 = vmatpush1.bf16.msra.mxu0 %v1675
      %1697 = vmatprep.subr.bf16.mxu0 0
      %1698 = vmatpush1.bf16.msra.mxu0 %v1676
      %1699 = vmatprep.subr.bf16.mxu0 0
      %1700 = vmatpush1.bf16.msra.mxu0 %v1677
      %1701 = vmatprep.subr.bf16.mxu0 0
      %1702 = vmatpush1.bf16.msra.mxu0 %v1678
      %1703 = vmatprep.subr.bf16.mxu0 0
      %1704 = vmatpush1.bf16.msra.mxu0 0
      %1705 = vmatprep.subr.bf16.mxu0 0
      %1706 = vmatpush1.bf16.msra.mxu0 0
      %1707 = vmatprep.subr.bf16.mxu0 0
      %1708 = vmatpush1.bf16.msra.mxu0 0
      %1709 = vmatprep.subr.bf16.mxu0 0
      %1710 = vmatpush1.bf16.msra.mxu0 0
      %1711 = vmatprep.subr.bf16.mxu0 0
      %1712 = vmatpush1.bf16.msra.mxu0 0
      %1713 = vmatprep.subr.bf16.mxu0 0
      %1714 = vmatpush1.bf16.msra.mxu0 0
      %1715 = vmatprep.subr.bf16.mxu0 0
      %1716 = vmatpush1.bf16.msra.mxu0 0
      %1717 = vmatprep.subr.bf16.mxu0 0
      %1718 = vmatpush1.bf16.msra.mxu0 0
      %1719 = vmatprep.mubr.bf16.mxu0 0
      %1720 = vmatmul.mubr.bf16.gmra.mrb[0].mxu0 %v1610
      %v1721 = vpop.f32.mrb[0].mxu0
      %v1722 = vadd.f32 %v1637, %v1721
      %v1723 = vpop.f32.mrb[0].mxu0
      %v1724 = vpop.f32.mrb[0].mxu0
      %v1725 = vpop.f32.mrb[0].mxu0
      %1726 = vdwg.mxu0
      %vm1727 = vcmask 31744
      %1728 = vst.msk [vmem:[%s6] sm:$0xff] %vm1727, %v1722
    $region37: #{lstm_model_forward.3} parent=1 // pred_fallthru
      _
    // Predicated region
    $region38: #{lstm_model_forward.3} parent=1 // pred_check
      _
    $region39: #{lstm_model_forward.3} parent=1 // pred_check_branch
      %1730 = sbr.rel (0) target = $region41
    $region40: #{lstm_model_forward.3} parent=1 // pred_region
      _
    $region41: #{lstm_model_forward.3} parent=1 // pred_fallthru
      _
    // Predicated region
    $region42: #{lstm_model_forward.3} parent=1 // pred_check
      _
    $region43: #{lstm_model_forward.3} parent=1 // pred_check_branch
      %1732 = sbr.rel (0) target = $region45
    $region44: #{lstm_model_forward.3} parent=1 // pred_region
      _
    $region45: #{lstm_model_forward.3} parent=1 // pred_fallthru
      _
    %1733 = vsyncpa [#allocation6], 1

// kernel: lstm_model_forward.2
$region0: #{lstm_model_forward.2}
  #allocation0 [shape = 'u32[]', space=smem, size = 0x4, offset = 0x4, fixed_abs, tag = 'smem constant byte address 0x4 - core index']
  #allocation1 [shape = 'u32[144,128]{1,0:T(1,128)}', space=vmem, size = 0x12000, scoped, tag = 'internal scratch']
  #allocation2 [shape = 'bf16[8,128]{1,0:T(8,128)(2,1)}', space=vmem, size = 0x800, scoped, tag = 'scratch operand']
  #allocation3 [shape = 'f32[8,128]{1,0:T(8,128)}', space=vmem, size = 0x1000, scoped, tag = 'scratch operand']
  #allocation4 [shape = 'bf16[8,8,512]{2,1,0:T(8,128)(2,1)}', space=vmem, size = 0x10000, scoped, tag = 'scratch operand']
  %s0 = inlined_call_operand.vmem [shape: bf16[8,8,16], index: 0, kind: input, shape index: {}]
  %s1 = inlined_call_operand.hbm [shape: bf16[16,512], index: 1, kind: input, shape index: {}]
  %s2 = inlined_call_operand.hbm [shape: bf16[128,512], index: 2, kind: input, shape index: {}]
  %s3 = inlined_call_operand.hbm [shape: f32[1,512], index: 3, kind: input, shape index: {}]
  %s4 = inlined_call_operand.vmem [shape: bf16[8,8,128], index: 4, kind: output, shape index: {}]
  %s5 = sld [smem:[#allocation0]]
  $region42: #{lstm_model_forward.2} parent=0
    _
  %s7 = ssub.s32 1, %s5
  %s8 = scalar_select 0, %s7, %s5
  $region1: #{lstm_model_forward.2} parent=0
    #allocation5 [shape = 'u8[16384]{0}', space=vmem, size = 0x4000, scoped, tag = 'input window, operand 1, single buffered']
    #allocation6 [shape = 's32[1]{0}', space=sflag, size = 0x4, scoped, tag = 'scoped memory for lstm_model_forward.2']
    #allocation7 [shape = 'u8[131072]{0}', space=vmem, size = 0x20000, scoped, tag = 'input window, operand 2, single buffered']
    #allocation8 [shape = 's32[1]{0}', space=sflag, size = 0x4, scoped, tag = 'scoped memory for lstm_model_forward.2']
    #allocation9 [shape = 'u8[2048]{0}', space=vmem, size = 0x800, scoped, tag = 'input window, operand 3, single buffered']
    %9 = vsyncpa [#allocation6], 0
    %10 = vsyncpa [#allocation8], 0
    // Predicated region
    $region2: #{lstm_model_forward.2} parent=1 // pred_check
      _
    $region3: #{lstm_model_forward.2} parent=1 // pred_check_branch
      %12 = sbr.rel (0) target = $region5
    $region4: #{lstm_model_forward.2} parent=1 // pred_region
      _
    $region5: #{lstm_model_forward.2} parent=1 // pred_fallthru
      _
    // Predicated region
    $region6: #{lstm_model_forward.2} parent=1 // pred_check
      _
    $region7: #{lstm_model_forward.2} parent=1 // pred_check_branch
      %14 = sbr.rel (0) target = $region9
    $region8: #{lstm_model_forward.2} parent=1 // pred_region
      %s16 = ssub.s32 512, 512
      %17 = vsyncadd [#allocation6], %s16
      %s18 = sshll.u32 [#allocation5], 4
      %s19 = int_to_ptr.vmem [resolvable:$true] %s18
      %24 = dma.hbm_to_vmem [thread:$0]  %s1, 512, %s19, [#allocation6], 256, 256, 16
    $region9: #{lstm_model_forward.2} parent=1 // pred_fallthru
      _
    // Predicated region
    $region10: #{lstm_model_forward.2} parent=1 // pred_check
      _
    $region11: #{lstm_model_forward.2} parent=1 // pred_check_branch
      %26 = sbr.rel (0) target = $region13
    $region12: #{lstm_model_forward.2} parent=1 // pred_region
      %s28 = ssub.s32 4096, 4096
      %29 = vsyncadd [#allocation8], %s28
      %s30 = sshll.u32 [#allocation7], 4
      %s31 = int_to_ptr.vmem [resolvable:$true] %s30
      %36 = dma.hbm_to_vmem [thread:$0]  %s2, 4096, %s31, [#allocation8], 256, 256, 16
    $region13: #{lstm_model_forward.2} parent=1 // pred_fallthru
      _
    // Predicated region
    $region14: #{lstm_model_forward.2} parent=1 // pred_check
      _
    $region15: #{lstm_model_forward.2} parent=1 // pred_check_branch
      %38 = sbr.rel (0) target = $region17
    $region16: #{lstm_model_forward.2} parent=1 // pred_region
      %s40 = ssub.s32 64, 64
      %41 = vsyncadd [#allocation8], %s40
      %s43 = sshll.u32 [#allocation9], 4
      %s44 = int_to_ptr.vmem [resolvable:$true] %s43
      %46 = dma.hbm_to_vmem [thread:$0]  %s3, 64, %s44, [#allocation8]
    $region17: #{lstm_model_forward.2} parent=1 // pred_fallthru
      _
    // Predicated region
    $region18: #{lstm_model_forward.2} parent=1 // pred_check
      _
    $region19: #{lstm_model_forward.2} parent=1 // pred_check_branch
      %48 = sbr.rel (0) target = $region21
    $region20: #{lstm_model_forward.2} parent=1 // pred_region
      %49 = dma.done [#allocation6], 512
    $region21: #{lstm_model_forward.2} parent=1 // pred_fallthru
      _
    // Predicated region
    $region22: #{lstm_model_forward.2} parent=1 // pred_check
      _
    $region23: #{lstm_model_forward.2} parent=1 // pred_check_branch
      %51 = sbr.rel (0) target = $region25
    $region24: #{lstm_model_forward.2} parent=1 // pred_region
      %52 = dma.done [#allocation8], 4096
    $region25: #{lstm_model_forward.2} parent=1 // pred_fallthru
      _
    // Predicated region
    $region26: #{lstm_model_forward.2} parent=1 // pred_check
      _
    $region27: #{lstm_model_forward.2} parent=1 // pred_check_branch
      %54 = sbr.rel (0) target = $region29
    $region28: #{lstm_model_forward.2} parent=1 // pred_region
      %55 = dma.done [#allocation8], 64
    $region29: #{lstm_model_forward.2} parent=1 // pred_fallthru
      _
    %p57 = scmp.eq.s32.totalorder 0, 0
    // Predicated region
    $region30: #{lstm_model_forward.2} parent=1 // pred_check
      %p58 = pneg %p57
    $region31: #{lstm_model_forward.2} parent=1 // pred_check_branch
      %60 = sbr.rel (%p58) target = $region33
    $region32: #{lstm_model_forward.2} parent=1 // pred_region
      %61 = vst [vmem:[#allocation2] sm:$0xf] 0
      %62 = vst [vmem:[#allocation3] sm:$0xff] 0.0
    $region33: #{lstm_model_forward.2} parent=1 // pred_fallthru
      _
    %v63 = vld [vmem:[%s0] sm:$0xf]
    %v64 = vld [vmem:[%s0 + $0x4] sm:$0xf]
    %v65 = vld [vmem:[%s0 + $0x8] sm:$0xf]
    %v66 = vld [vmem:[%s0 + $0xc] sm:$0xf]
    %v67 = vld [vmem:[%s0 + $0x10] sm:$0xf]
    %v68 = vld [vmem:[%s0 + $0x14] sm:$0xf]
    %v69 = vld [vmem:[%s0 + $0x18] sm:$0xf]
    %v70 = vld [vmem:[%s0 + $0x1c] sm:$0xf]
    %v71 = vld [vmem:[#allocation5] sm:$0xff]
    %v72 = vld [vmem:[#allocation5 + $0x8] sm:$0xff]
    %v73 = vld [vmem:[#allocation5 + $0x10] sm:$0xff]
    %v74 = vld [vmem:[#allocation5 + $0x18] sm:$0xff]
    %v75 = vld [vmem:[#allocation9] sm:$0xf]
    %v77 = vlaneseq
    %v78 = vshrl.u32 %v77, 7
    %v79 = vsub.s32 0, %v78
    %v80 = vrot.slane %v75, %v79
    %v81 = vlaneseq
    %v82 = vshrl.u32 %v81, 7
    %v83 = vsub.s32 1, %v82
    %v84 = vrot.slane %v75, %v83
    %v85 = vlaneseq
    %v86 = vshrl.u32 %v85, 7
    %v87 = vsub.s32 2, %v86
    %v88 = vrot.slane %v75, %v87
    %v89 = vlaneseq
    %v90 = vshrl.u32 %v89, 7
    %v91 = vsub.s32 3, %v90
    %v92 = vrot.slane %v75, %v91
    %v105 = vunpack.c.l.b16 %v63
    %v106 = vunpack.c.l.b16 %v64
    %v107 = vunpack.c.l.b16 %v65
    %v108 = vunpack.c.l.b16 %v66
    %v109 = vunpack.c.l.b16 %v67
    %v110 = vunpack.c.l.b16 %v68
    %v111 = vunpack.c.l.b16 %v69
    %v112 = vunpack.c.l.b16 %v70
    %v113 = vpack.c.b16 %v106, %v105
    %v114 = vpack.c.b16 %v108, %v107
    %v115 = vpack.c.b16 %v110, %v109
    %v116 = vpack.c.b16 %v112, %v111
    %v121 = vunpack.c.l.b16 %v71
    %v122 = vunpack.c.h.b16 %v71
    %v123 = vunpack.c.l.b16 %v72
    %v124 = vunpack.c.h.b16 %v72
    %v125 = vunpack.c.l.b16 %v73
    %v126 = vunpack.c.h.b16 %v73
    %v127 = vunpack.c.l.b16 %v74
    %v128 = vunpack.c.h.b16 %v74
    %v129 = vpack.c.b16 %v125, %v121
    %v130 = vpack.c.b16 %v126, %v122
    %v131 = vpack.c.b16 %v127, %v123
    %v132 = vpack.c.b16 %v128, %v124
    %vm137 = vcmask 130048
    %v139 = vsel %vm137, %v113, 0
    %v142 = vsel %vm137, %v114, 0
    %v145 = vsel %vm137, %v115, 0
    %v148 = vsel %vm137, %v116, 0
    %150 = vmatprep.subr.bf16.mxu0 %v130
    %151 = vmatpush1.bf16.msra.mxu0 %v129
    %152 = vmatprep.subr.bf16.mxu0 0
    %153 = vmatpush1.bf16.msra.mxu0 0
    %154 = vmatprep.subr.bf16.mxu0 0
    %155 = vmatpush1.bf16.msra.mxu0 0
    %156 = vmatprep.subr.bf16.mxu0 0
    %157 = vmatpush1.bf16.msra.mxu0 0
    %158 = vmatprep.subr.bf16.mxu0 0
    %159 = vmatpush1.bf16.msra.mxu0 0
    %160 = vmatprep.subr.bf16.mxu0 0
    %161 = vmatpush1.bf16.msra.mxu0 0
    %162 = vmatprep.subr.bf16.mxu0 0
    %163 = vmatpush1.bf16.msra.mxu0 0
    %164 = vmatprep.subr.bf16.mxu0 0
    %165 = vmatpush1.bf16.msra.mxu0 0
    %166 = vmatprep.subr.bf16.mxu0 0
    %167 = vmatpush1.bf16.msra.mxu0 0
    %168 = vmatprep.subr.bf16.mxu0 0
    %169 = vmatpush1.bf16.msra.mxu0 0
    %170 = vmatprep.subr.bf16.mxu0 0
    %171 = vmatpush1.bf16.msra.mxu0 0
    %172 = vmatprep.subr.bf16.mxu0 0
    %173 = vmatpush1.bf16.msra.mxu0 0
    %174 = vmatprep.subr.bf16.mxu0 0
    %175 = vmatpush1.bf16.msra.mxu0 0
    %176 = vmatprep.subr.bf16.mxu0 0
    %177 = vmatpush1.bf16.msra.mxu0 0
    %178 = vmatprep.subr.bf16.mxu0 0
    %179 = vmatpush1.bf16.msra.mxu0 0
    %180 = vmatprep.subr.bf16.mxu0 0
    %181 = vmatpush1.bf16.msra.mxu0 0
    %182 = vmatprep.mubr.bf16.mxu0 0
    %183 = vmatmul.mubr.bf16.gmra.mrb[0].mxu0 %v139
    %v184 = vpop.f32.mrb[0].mxu0
    %v185 = vadd.f32 %v80, %v184
    %v186 = vpop.f32.mrb[0].mxu0
    %v187 = vadd.f32 %v84, %v186
    %v188 = vpop.f32.mrb[0].mxu0
    %v189 = vadd.f32 %v80, %v188
    %v190 = vpop.f32.mrb[0].mxu0
    %v191 = vadd.f32 %v84, %v190
    %192 = vmatprep.mubr.bf16.mxu0 0
    %193 = vmatmul.mubr.bf16.gmra.mrb[0].mxu0 %v142
    %v194 = vpop.f32.mrb[0].mxu0
    %v195 = vadd.f32 %v80, %v194
    %v196 = vpop.f32.mrb[0].mxu0
    %v197 = vadd.f32 %v84, %v196
    %v198 = vpop.f32.mrb[0].mxu0
    %v199 = vadd.f32 %v80, %v198
    %v200 = vpop.f32.mrb[0].mxu0
    %v201 = vadd.f32 %v84, %v200
    %202 = vmatprep.mubr.bf16.mxu0 0
    %203 = vmatmul.mubr.bf16.gmra.mrb[0].mxu0 %v145
    %v204 = vpop.f32.mrb[0].mxu0
    %v205 = vadd.f32 %v80, %v204
    %v206 = vpop.f32.mrb[0].mxu0
    %v207 = vadd.f32 %v84, %v206
    %v208 = vpop.f32.mrb[0].mxu0
    %v209 = vadd.f32 %v80, %v208
    %v210 = vpop.f32.mrb[0].mxu0
    %v211 = vadd.f32 %v84, %v210
    %212 = vmatprep.mubr.bf16.mxu0 0
    %213 = vmatmul.mubr.bf16.gmra.mrb[0].mxu0 %v148
    %v214 = vpop.f32.mrb[0].mxu0
    %v215 = vadd.f32 %v80, %v214
    %v216 = vpop.f32.mrb[0].mxu0
    %v217 = vadd.f32 %v84, %v216
    %v218 = vpop.f32.mrb[0].mxu0
    %v219 = vadd.f32 %v80, %v218
    %v220 = vpop.f32.mrb[0].mxu0
    %v221 = vadd.f32 %v84, %v220
    %222 = vdwg.mxu0
    %223 = vmatprep.subr.bf16.mxu0 %v132
    %224 = vmatpush1.bf16.msra.mxu0 %v131
    %225 = vmatprep.subr.bf16.mxu0 0
    %226 = vmatpush1.bf16.msra.mxu0 0
    %227 = vmatprep.subr.bf16.mxu0 0
    %228 = vmatpush1.bf16.msra.mxu0 0
    %229 = vmatprep.subr.bf16.mxu0 0
    %230 = vmatpush1.bf16.msra.mxu0 0
    %231 = vmatprep.subr.bf16.mxu0 0
    %232 = vmatpush1.bf16.msra.mxu0 0
    %233 = vmatprep.subr.bf16.mxu0 0
    %234 = vmatpush1.bf16.msra.mxu0 0
    %235 = vmatprep.subr.bf16.mxu0 0
    %236 = vmatpush1.bf16.msra.mxu0 0
    %237 = vmatprep.subr.bf16.mxu0 0
    %238 = vmatpush1.bf16.msra.mxu0 0
    %239 = vmatprep.subr.bf16.mxu0 0
    %240 = vmatpush1.bf16.msra.mxu0 0
    %241 = vmatprep.subr.bf16.mxu0 0
    %242 = vmatpush1.bf16.msra.mxu0 0
    %243 = vmatprep.subr.bf16.mxu0 0
    %244 = vmatpush1.bf16.msra.mxu0 0
    %245 = vmatprep.subr.bf16.mxu0 0
    %246 = vmatpush1.bf16.msra.mxu0 0
    %247 = vmatprep.subr.bf16.mxu0 0
    %248 = vmatpush1.bf16.msra.mxu0 0
    %249 = vmatprep.subr.bf16.mxu0 0
    %250 = vmatpush1.bf16.msra.mxu0 0
    %251 = vmatprep.subr.bf16.mxu0 0
    %252 = vmatpush1.bf16.msra.mxu0 0
    %253 = vmatprep.subr.bf16.mxu0 0
    %254 = vmatpush1.bf16.msra.mxu0 0
    %255 = vmatprep.mubr.bf16.mxu0 0
    %256 = vmatmul.mubr.bf16.gmra.mrb[0].mxu0 %v139
    %v257 = vpop.f32.mrb[0].mxu0
    %v258 = vadd.f32 %v88, %v257
    %v259 = vpop.f32.mrb[0].mxu0
    %v260 = vadd.f32 %v92, %v259
    %v261 = vpop.f32.mrb[0].mxu0
    %v262 = vadd.f32 %v88, %v261
    %v263 = vpop.f32.mrb[0].mxu0
    %v264 = vadd.f32 %v92, %v263
    %265 = vmatprep.mubr.bf16.mxu0 0
    %266 = vmatmul.mubr.bf16.gmra.mrb[0].mxu0 %v142
    %v267 = vpop.f32.mrb[0].mxu0
    %v268 = vadd.f32 %v88, %v267
    %v269 = vpop.f32.mrb[0].mxu0
    %v270 = vadd.f32 %v92, %v269
    %v271 = vpop.f32.mrb[0].mxu0
    %v272 = vadd.f32 %v88, %v271
    %v273 = vpop.f32.mrb[0].mxu0
    %v274 = vadd.f32 %v92, %v273
    %275 = vmatprep.mubr.bf16.mxu0 0
    %276 = vmatmul.mubr.bf16.gmra.mrb[0].mxu0 %v145
    %v277 = vpop.f32.mrb[0].mxu0
    %v278 = vadd.f32 %v88, %v277
    %v279 = vpop.f32.mrb[0].mxu0
    %v280 = vadd.f32 %v92, %v279
    %v281 = vpop.f32.mrb[0].mxu0
    %v282 = vadd.f32 %v88, %v281
    %v283 = vpop.f32.mrb[0].mxu0
    %v284 = vadd.f32 %v92, %v283
    %285 = vmatprep.mubr.bf16.mxu0 0
    %286 = vmatmul.mubr.bf16.gmra.mrb[0].mxu0 %v148
    %v287 = vpop.f32.mrb[0].mxu0
    %v288 = vadd.f32 %v88, %v287
    %v289 = vpop.f32.mrb[0].mxu0
    %v290 = vadd.f32 %v92, %v289
    %v291 = vpop.f32.mrb[0].mxu0
    %v292 = vadd.f32 %v88, %v291
    %v293 = vpop.f32.mrb[0].mxu0
    %v294 = vadd.f32 %v92, %v293
    %295 = vdwg.mxu0
    %v296 = vpack.c.bf16 %v185, %v185
    %v297 = vpack.c.bf16 %v187, %v187
    %v298 = vpack.c.bf16 %v258, %v258
    %v299 = vpack.c.bf16 %v260, %v260
    %v300 = vpack.c.bf16 %v189, %v189
    %v301 = vpack.c.bf16 %v191, %v191
    %v302 = vpack.c.bf16 %v262, %v262
    %v303 = vpack.c.bf16 %v264, %v264
    %v304 = vpack.c.bf16 %v195, %v195
    %v305 = vpack.c.bf16 %v197, %v197
    %v306 = vpack.c.bf16 %v268, %v268
    %v307 = vpack.c.bf16 %v270, %v270
    %v308 = vpack.c.bf16 %v199, %v199
    %v309 = vpack.c.bf16 %v201, %v201
    %v310 = vpack.c.bf16 %v272, %v272
    %v311 = vpack.c.bf16 %v274, %v274
    %v312 = vpack.c.bf16 %v205, %v205
    %v313 = vpack.c.bf16 %v207, %v207
    %v314 = vpack.c.bf16 %v278, %v278
    %v315 = vpack.c.bf16 %v280, %v280
    %v316 = vpack.c.bf16 %v209, %v209
    %v317 = vpack.c.bf16 %v211, %v211
    %v318 = vpack.c.bf16 %v282, %v282
    %v319 = vpack.c.bf16 %v284, %v284
    %v320 = vpack.c.bf16 %v215, %v215
    %v321 = vpack.c.bf16 %v217, %v217
    %v322 = vpack.c.bf16 %v288, %v288
    %v323 = vpack.c.bf16 %v290, %v290
    %v324 = vpack.c.bf16 %v219, %v219
    %v325 = vpack.c.bf16 %v221, %v221
    %v326 = vpack.c.bf16 %v292, %v292
    %v327 = vpack.c.bf16 %v294, %v294
    %v360 = vunpack.c.l.b16 %v296
    %v361 = vunpack.c.l.b16 %v297
    %v362 = vunpack.c.l.b16 %v298
    %v363 = vunpack.c.l.b16 %v299
    %v364 = vunpack.c.l.b16 %v300
    %v365 = vunpack.c.l.b16 %v301
    %v366 = vunpack.c.l.b16 %v302
    %v367 = vunpack.c.l.b16 %v303
    %v368 = vunpack.c.l.b16 %v304
    %v369 = vunpack.c.l.b16 %v305
    %v370 = vunpack.c.l.b16 %v306
    %v371 = vunpack.c.l.b16 %v307
    %v372 = vunpack.c.l.b16 %v308
    %v373 = vunpack.c.l.b16 %v309
    %v374 = vunpack.c.l.b16 %v310
    %v375 = vunpack.c.l.b16 %v311
    %v376 = vunpack.c.l.b16 %v312
    %v377 = vunpack.c.l.b16 %v313
    %v378 = vunpack.c.l.b16 %v314
    %v379 = vunpack.c.l.b16 %v315
    %v380 = vunpack.c.l.b16 %v316
    %v381 = vunpack.c.l.b16 %v317
    %v382 = vunpack.c.l.b16 %v318
    %v383 = vunpack.c.l.b16 %v319
    %v384 = vunpack.c.l.b16 %v320
    %v385 = vunpack.c.l.b16 %v321
    %v386 = vunpack.c.l.b16 %v322
    %v387 = vunpack.c.l.b16 %v323
    %v388 = vunpack.c.l.b16 %v324
    %v389 = vunpack.c.l.b16 %v325
    %v390 = vunpack.c.l.b16 %v326
    %v391 = vunpack.c.l.b16 %v327
    %v392 = vpack.c.b16 %v361, %v360
    %v393 = vpack.c.b16 %v363, %v362
    %v394 = vpack.c.b16 %v365, %v364
    %v395 = vpack.c.b16 %v367, %v366
    %v396 = vpack.c.b16 %v369, %v368
    %v397 = vpack.c.b16 %v371, %v370
    %v398 = vpack.c.b16 %v373, %v372
    %v399 = vpack.c.b16 %v375, %v374
    %v400 = vpack.c.b16 %v377, %v376
    %v401 = vpack.c.b16 %v379, %v378
    %v402 = vpack.c.b16 %v381, %v380
    %v403 = vpack.c.b16 %v383, %v382
    %v404 = vpack.c.b16 %v385, %v384
    %v405 = vpack.c.b16 %v387, %v386
    %v406 = vpack.c.b16 %v389, %v388
    %v407 = vpack.c.b16 %v391, %v390
    %424 = vst [vmem:[#allocation4] sm:$0xff] %v392
    %425 = vst [vmem:[#allocation4 + $0x8] sm:$0xff] %v393
    %426 = vst [vmem:[#allocation4 + $0x10] sm:$0xff] %v394
    %427 = vst [vmem:[#allocation4 + $0x18] sm:$0xff] %v395
    %428 = vst [vmem:[#allocation4 + $0x20] sm:$0xff] %v396
    %429 = vst [vmem:[#allocation4 + $0x28] sm:$0xff] %v397
    %430 = vst [vmem:[#allocation4 + $0x30] sm:$0xff] %v398
    %431 = vst [vmem:[#allocation4 + $0x38] sm:$0xff] %v399
    %432 = vst [vmem:[#allocation4 + $0x40] sm:$0xff] %v400
    %433 = vst [vmem:[#allocation4 + $0x48] sm:$0xff] %v401
    %434 = vst [vmem:[#allocation4 + $0x50] sm:$0xff] %v402
    %435 = vst [vmem:[#allocation4 + $0x58] sm:$0xff] %v403
    %436 = vst [vmem:[#allocation4 + $0x60] sm:$0xff] %v404
    %437 = vst [vmem:[#allocation4 + $0x68] sm:$0xff] %v405
    %438 = vst [vmem:[#allocation4 + $0x70] sm:$0xff] %v406
    %439 = vst [vmem:[#allocation4 + $0x78] sm:$0xff] %v407
    %v440 = vld [vmem:[#allocation2] sm:$0xf]
    %v441 = vld [vmem:[#allocation3] sm:$0xff]
    %v442 = vld [vmem:[#allocation7] sm:$0xff]
    %v443 = vld [vmem:[#allocation7 + $0x8] sm:$0xff]
    %v444 = vld [vmem:[#allocation7 + $0x10] sm:$0xff]
    %v445 = vld [vmem:[#allocation7 + $0x18] sm:$0xff]
    %v446 = vld [vmem:[#allocation7 + $0x20] sm:$0xff]
    %v447 = vld [vmem:[#allocation7 + $0x28] sm:$0xff]
    %v448 = vld [vmem:[#allocation7 + $0x30] sm:$0xff]
    %v449 = vld [vmem:[#allocation7 + $0x38] sm:$0xff]
    %v450 = vld [vmem:[#allocation7 + $0x40] sm:$0xff]
    %v451 = vld [vmem:[#allocation7 + $0x48] sm:$0xff]
    %v452 = vld [vmem:[#allocation7 + $0x50] sm:$0xff]
    %v453 = vld [vmem:[#allocation7 + $0x58] sm:$0xff]
    %v454 = vld [vmem:[#allocation7 + $0x60] sm:$0xff]
    %v455 = vld [vmem:[#allocation7 + $0x68] sm:$0xff]
    %v456 = vld [vmem:[#allocation7 + $0x70] sm:$0xff]
    %v457 = vld [vmem:[#allocation7 + $0x78] sm:$0xff]
    %v458 = vld [vmem:[#allocation7 + $0x80] sm:$0xff]
    %v459 = vld [vmem:[#allocation7 + $0x88] sm:$0xff]
    %v460 = vld [vmem:[#allocation7 + $0x90] sm:$0xff]
    %v461 = vld [vmem:[#allocation7 + $0x98] sm:$0xff]
    %v462 = vld [vmem:[#allocation7 + $0xa0] sm:$0xff]
    %v463 = vld [vmem:[#allocation7 + $0xa8] sm:$0xff]
    %v464 = vld [vmem:[#allocation7 + $0xb0] sm:$0xff]
    %v465 = vld [vmem:[#allocation7 + $0xb8] sm:$0xff]
    %v466 = vld [vmem:[#allocation7 + $0xc0] sm:$0xff]
    %v467 = vld [vmem:[#allocation7 + $0xc8] sm:$0xff]
    %v468 = vld [vmem:[#allocation7 + $0xd0] sm:$0xff]
    %v469 = vld [vmem:[#allocation7 + $0xd8] sm:$0xff]
    %v470 = vld [vmem:[#allocation7 + $0xe0] sm:$0xff]
    %v471 = vld [vmem:[#allocation7 + $0xe8] sm:$0xff]
    %v472 = vld [vmem:[#allocation7 + $0xf0] sm:$0xff]
    %v473 = vld [vmem:[#allocation7 + $0xf8] sm:$0xff]
    %v474 = vld [vmem:[#allocation4] sm:$0xff]
    %v475 = vld [vmem:[#allocation4 + $0x8] sm:$0xff]
    %v476 = vunpack.c.l.bf16 %v474
    %v477 = vunpack.c.h.bf16 %v474
    %v478 = vunpack.c.l.bf16 %v475
    %v479 = vunpack.c.h.bf16 %v475
    %v512 = vunpack.c.l.b16 %v442
    %v513 = vunpack.c.h.b16 %v442
    %v514 = vunpack.c.l.b16 %v443
    %v515 = vunpack.c.h.b16 %v443
    %v516 = vunpack.c.l.b16 %v444
    %v517 = vunpack.c.h.b16 %v444
    %v518 = vunpack.c.l.b16 %v445
    %v519 = vunpack.c.h.b16 %v445
    %v520 = vunpack.c.l.b16 %v446
    %v521 = vunpack.c.h.b16 %v446
    %v522 = vunpack.c.l.b16 %v447
    %v523 = vunpack.c.h.b16 %v447
    %v524 = vunpack.c.l.b16 %v448
    %v525 = vunpack.c.h.b16 %v448
    %v526 = vunpack.c.l.b16 %v449
    %v527 = vunpack.c.h.b16 %v449
    %v528 = vunpack.c.l.b16 %v450
    %v529 = vunpack.c.h.b16 %v450
    %v530 = vunpack.c.l.b16 %v451
    %v531 = vunpack.c.h.b16 %v451
    %v532 = vunpack.c.l.b16 %v452
    %v533 = vunpack.c.h.b16 %v452
    %v534 = vunpack.c.l.b16 %v453
    %v535 = vunpack.c.h.b16 %v453
    %v536 = vunpack.c.l.b16 %v454
    %v537 = vunpack.c.h.b16 %v454
    %v538 = vunpack.c.l.b16 %v455
    %v539 = vunpack.c.h.b16 %v455
    %v540 = vunpack.c.l.b16 %v456
    %v541 = vunpack.c.h.b16 %v456
    %v542 = vunpack.c.l.b16 %v457
    %v543 = vunpack.c.h.b16 %v457
    %v544 = vunpack.c.l.b16 %v458
    %v545 = vunpack.c.h.b16 %v458
    %v546 = vunpack.c.l.b16 %v459
    %v547 = vunpack.c.h.b16 %v459
    %v548 = vunpack.c.l.b16 %v460
    %v549 = vunpack.c.h.b16 %v460
    %v550 = vunpack.c.l.b16 %v461
    %v551 = vunpack.c.h.b16 %v461
    %v552 = vunpack.c.l.b16 %v462
    %v553 = vunpack.c.h.b16 %v462
    %v554 = vunpack.c.l.b16 %v463
    %v555 = vunpack.c.h.b16 %v463
    %v556 = vunpack.c.l.b16 %v464
    %v557 = vunpack.c.h.b16 %v464
    %v558 = vunpack.c.l.b16 %v465
    %v559 = vunpack.c.h.b16 %v465
    %v560 = vunpack.c.l.b16 %v466
    %v561 = vunpack.c.h.b16 %v466
    %v562 = vunpack.c.l.b16 %v467
    %v563 = vunpack.c.h.b16 %v467
    %v564 = vunpack.c.l.b16 %v468
    %v565 = vunpack.c.h.b16 %v468
    %v566 = vunpack.c.l.b16 %v469
    %v567 = vunpack.c.h.b16 %v469
    %v568 = vunpack.c.l.b16 %v470
    %v569 = vunpack.c.h.b16 %v470
    %v570 = vunpack.c.l.b16 %v471
    %v571 = vunpack.c.h.b16 %v471
    %v572 = vunpack.c.l.b16 %v472
    %v573 = vunpack.c.h.b16 %v472
    %v574 = vunpack.c.l.b16 %v473
    %v575 = vunpack.c.h.b16 %v473
    %v576 = vpack.c.b16 %v516, %v512
    %v577 = vpack.c.b16 %v517, %v513
    %v578 = vpack.c.b16 %v518, %v514
    %v579 = vpack.c.b16 %v519, %v515
    %v580 = vpack.c.b16 %v524, %v520
    %v581 = vpack.c.b16 %v525, %v521
    %v582 = vpack.c.b16 %v526, %v522
    %v583 = vpack.c.b16 %v527, %v523
    %v584 = vpack.c.b16 %v532, %v528
    %v585 = vpack.c.b16 %v533, %v529
    %v586 = vpack.c.b16 %v534, %v530
    %v587 = vpack.c.b16 %v535, %v531
    %v588 = vpack.c.b16 %v540, %v536
    %v589 = vpack.c.b16 %v541, %v537
    %v590 = vpack.c.b16 %v542, %v538
    %v591 = vpack.c.b16 %v543, %v539
    %v592 = vpack.c.b16 %v548, %v544
    %v593 = vpack.c.b16 %v549, %v545
    %v594 = vpack.c.b16 %v550, %v546
    %v595 = vpack.c.b16 %v551, %v547
    %v596 = vpack.c.b16 %v556, %v552
    %v597 = vpack.c.b16 %v557, %v553
    %v598 = vpack.c.b16 %v558, %v554
    %v599 = vpack.c.b16 %v559, %v555
    %v600 = vpack.c.b16 %v564, %v560
    %v601 = vpack.c.b16 %v565, %v561
    %v602 = vpack.c.b16 %v566, %v562
    %v603 = vpack.c.b16 %v567, %v563
    %v604 = vpack.c.b16 %v572, %v568
    %v605 = vpack.c.b16 %v573, %v569
    %v606 = vpack.c.b16 %v574, %v570
    %v607 = vpack.c.b16 %v575, %v571
    %640 = vmatprep.subr.bf16.mxu0 %v577
    %641 = vmatpush1.bf16.msra.mxu0 %v576
    %642 = vmatprep.subr.bf16.mxu0 %v581
    %643 = vmatpush1.bf16.msra.mxu0 %v580
    %644 = vmatprep.subr.bf16.mxu0 %v585
    %645 = vmatpush1.bf16.msra.mxu0 %v584
    %646 = vmatprep.subr.bf16.mxu0 %v589
    %647 = vmatpush1.bf16.msra.mxu0 %v588
    %648 = vmatprep.subr.bf16.mxu0 %v593
    %649 = vmatpush1.bf16.msra.mxu0 %v592
    %650 = vmatprep.subr.bf16.mxu0 %v597
    %651 = vmatpush1.bf16.msra.mxu0 %v596
    %652 = vmatprep.subr.bf16.mxu0 %v601
    %653 = vmatpush1.bf16.msra.mxu0 %v600
    %654 = vmatprep.subr.bf16.mxu0 %v605
    %655 = vmatpush1.bf16.msra.mxu0 %v604
    %656 = vmatprep.subr.bf16.mxu0 0
    %657 = vmatpush1.bf16.msra.mxu0 0
    %658 = vmatprep.subr.bf16.mxu0 0
    %659 = vmatpush1.bf16.msra.mxu0 0
    %660 = vmatprep.subr.bf16.mxu0 0
    %661 = vmatpush1.bf16.msra.mxu0 0
    %662 = vmatprep.subr.bf16.mxu0 0
    %663 = vmatpush1.bf16.msra.mxu0 0
    %664 = vmatprep.subr.bf16.mxu0 0
    %665 = vmatpush1.bf16.msra.mxu0 0
    %666 = vmatprep.subr.bf16.mxu0 0
    %667 = vmatpush1.bf16.msra.mxu0 0
    %668 = vmatprep.subr.bf16.mxu0 0
    %669 = vmatpush1.bf16.msra.mxu0 0
    %670 = vmatprep.subr.bf16.mxu0 0
    %671 = vmatpush1.bf16.msra.mxu0 0
    %672 = vmatprep.mubr.bf16.mxu0 0
    %673 = vmatmul.mubr.bf16.gmra.mrb[0].mxu0 %v440
    %v674 = vpop.f32.mrb[0].mxu0
    %v675 = vadd.f32 %v476, %v674
    %v676 = vpop.f32.mrb[0].mxu0
    %v677 = vadd.f32 %v477, %v676
    %v678 = vpop.f32.mrb[0].mxu0
    %v679 = vpop.f32.mrb[0].mxu0
    %680 = vdwg.mxu0
    %681 = vmatprep.subr.bf16.mxu0 %v579
    %682 = vmatpush1.bf16.msra.mxu0 %v578
    %683 = vmatprep.subr.bf16.mxu0 %v583
    %684 = vmatpush1.bf16.msra.mxu0 %v582
    %685 = vmatprep.subr.bf16.mxu0 %v587
    %686 = vmatpush1.bf16.msra.mxu0 %v586
    %687 = vmatprep.subr.bf16.mxu0 %v591
    %688 = vmatpush1.bf16.msra.mxu0 %v590
    %689 = vmatprep.subr.bf16.mxu0 %v595
    %690 = vmatpush1.bf16.msra.mxu0 %v594
    %691 = vmatprep.subr.bf16.mxu0 %v599
    %692 = vmatpush1.bf16.msra.mxu0 %v598
    %693 = vmatprep.subr.bf16.mxu0 %v603
    %694 = vmatpush1.bf16.msra.mxu0 %v602
    %695 = vmatprep.subr.bf16.mxu0 %v607
    %696 = vmatpush1.bf16.msra.mxu0 %v606
    %697 = vmatprep.subr.bf16.mxu0 0
    %698 = vmatpush1.bf16.msra.mxu0 0
    %699 = vmatprep.subr.bf16.mxu0 0
    %700 = vmatpush1.bf16.msra.mxu0 0
    %701 = vmatprep.subr.bf16.mxu0 0
    %702 = vmatpush1.bf16.msra.mxu0 0
    %703 = vmatprep.subr.bf16.mxu0 0
    %704 = vmatpush1.bf16.msra.mxu0 0
    %705 = vmatprep.subr.bf16.mxu0 0
    %706 = vmatpush1.bf16.msra.mxu0 0
    %707 = vmatprep.subr.bf16.mxu0 0
    %708 = vmatpush1.bf16.msra.mxu0 0
    %709 = vmatprep.subr.bf16.mxu0 0
    %710 = vmatpush1.bf16.msra.mxu0 0
    %711 = vmatprep.subr.bf16.mxu0 0
    %712 = vmatpush1.bf16.msra.mxu0 0
    %713 = vmatprep.mubr.bf16.mxu0 0
    %714 = vmatmul.mubr.bf16.gmra.mrb[0].mxu0 %v440
    %v715 = vpop.f32.mrb[0].mxu0
    %v716 = vadd.f32 %v478, %v715
    %v717 = vpop.f32.mrb[0].mxu0
    %v718 = vadd.f32 %v479, %v717
    %v719 = vpop.f32.mrb[0].mxu0
    %v720 = vpop.f32.mrb[0].mxu0
    %721 = vdwg.mxu0
    %v722 = vtanh.pop %v675
    %v723 = vtanh.pop %v677
    %v724 = vtanh.pop %v716
    %v725 = vtanh.pop %v718
    %v726 = vmul.f32 %v722, 0.5
    %v727 = vmul.f32 %v723, 0.5
    %v728 = vmul.f32 %v724, 0.5
    %v729 = vadd.f32 %v726, 0.5
    %v730 = vadd.f32 %v727, 0.5
    %v731 = vadd.f32 %v728, 0.5
    %v732 = vmul.f32 %v730, %v441
    %v733 = vmul.f32 %v729, %v725
    %v734 = vadd.f32 %v732, %v733
    %v735 = vtanh.pop %v734
    %v736 = vmul.f32 %v731, %v735
    %v737 = vpack.c.bf16 %v736, %v736
    %738 = vst [vmem:[%s4] sm:$0xf] %v737
    %v739 = vld [vmem:[#allocation7] sm:$0xff]
    %v740 = vld [vmem:[#allocation7 + $0x8] sm:$0xff]
    %v741 = vld [vmem:[#allocation7 + $0x10] sm:$0xff]
    %v742 = vld [vmem:[#allocation7 + $0x18] sm:$0xff]
    %v743 = vld [vmem:[#allocation7 + $0x20] sm:$0xff]
    %v744 = vld [vmem:[#allocation7 + $0x28] sm:$0xff]
    %v745 = vld [vmem:[#allocation7 + $0x30] sm:$0xff]
    %v746 = vld [vmem:[#allocation7 + $0x38] sm:$0xff]
    %v747 = vld [vmem:[#allocation7 + $0x40] sm:$0xff]
    %v748 = vld [vmem:[#allocation7 + $0x48] sm:$0xff]
    %v749 = vld [vmem:[#allocation7 + $0x50] sm:$0xff]
    %v750 = vld [vmem:[#allocation7 + $0x58] sm:$0xff]
    %v751 = vld [vmem:[#allocation7 + $0x60] sm:$0xff]
    %v752 = vld [vmem:[#allocation7 + $0x68] sm:$0xff]
    %v753 = vld [vmem:[#allocation7 + $0x70] sm:$0xff]
    %v754 = vld [vmem:[#allocation7 + $0x78] sm:$0xff]
    %v755 = vld [vmem:[#allocation7 + $0x80] sm:$0xff]
    %v756 = vld [vmem:[#allocation7 + $0x88] sm:$0xff]
    %v757 = vld [vmem:[#allocation7 + $0x90] sm:$0xff]
    %v758 = vld [vmem:[#allocation7 + $0x98] sm:$0xff]
    %v759 = vld [vmem:[#allocation7 + $0xa0] sm:$0xff]
    %v760 = vld [vmem:[#allocation7 + $0xa8] sm:$0xff]
    %v761 = vld [vmem:[#allocation7 + $0xb0] sm:$0xff]
    %v762 = vld [vmem:[#allocation7 + $0xb8] sm:$0xff]
    %v763 = vld [vmem:[#allocation7 + $0xc0] sm:$0xff]
    %v764 = vld [vmem:[#allocation7 + $0xc8] sm:$0xff]
    %v765 = vld [vmem:[#allocation7 + $0xd0] sm:$0xff]
    %v766 = vld [vmem:[#allocation7 + $0xd8] sm:$0xff]
    %v767 = vld [vmem:[#allocation7 + $0xe0] sm:$0xff]
    %v768 = vld [vmem:[#allocation7 + $0xe8] sm:$0xff]
    %v769 = vld [vmem:[#allocation7 + $0xf0] sm:$0xff]
    %v770 = vld [vmem:[#allocation7 + $0xf8] sm:$0xff]
    %s771 = scalar_lea.vmem [#allocation4], 16
    %v772 = vld [vmem:[%s771] sm:$0xff]
    %v773 = vld [vmem:[%s771 + $0x8] sm:$0xff]
    %v774 = vunpack.c.l.bf16 %v772
    %v775 = vunpack.c.h.bf16 %v772
    %v776 = vunpack.c.l.bf16 %v773
    %v777 = vunpack.c.h.bf16 %v773
    %v810 = vunpack.c.l.b16 %v739
    %v811 = vunpack.c.h.b16 %v739
    %v812 = vunpack.c.l.b16 %v740
    %v813 = vunpack.c.h.b16 %v740
    %v814 = vunpack.c.l.b16 %v741
    %v815 = vunpack.c.h.b16 %v741
    %v816 = vunpack.c.l.b16 %v742
    %v817 = vunpack.c.h.b16 %v742
    %v818 = vunpack.c.l.b16 %v743
    %v819 = vunpack.c.h.b16 %v743
    %v820 = vunpack.c.l.b16 %v744
    %v821 = vunpack.c.h.b16 %v744
    %v822 = vunpack.c.l.b16 %v745
    %v823 = vunpack.c.h.b16 %v745
    %v824 = vunpack.c.l.b16 %v746
    %v825 = vunpack.c.h.b16 %v746
    %v826 = vunpack.c.l.b16 %v747
    %v827 = vunpack.c.h.b16 %v747
    %v828 = vunpack.c.l.b16 %v748
    %v829 = vunpack.c.h.b16 %v748
    %v830 = vunpack.c.l.b16 %v749
    %v831 = vunpack.c.h.b16 %v749
    %v832 = vunpack.c.l.b16 %v750
    %v833 = vunpack.c.h.b16 %v750
    %v834 = vunpack.c.l.b16 %v751
    %v835 = vunpack.c.h.b16 %v751
    %v836 = vunpack.c.l.b16 %v752
    %v837 = vunpack.c.h.b16 %v752
    %v838 = vunpack.c.l.b16 %v753
    %v839 = vunpack.c.h.b16 %v753
    %v840 = vunpack.c.l.b16 %v754
    %v841 = vunpack.c.h.b16 %v754
    %v842 = vunpack.c.l.b16 %v755
    %v843 = vunpack.c.h.b16 %v755
    %v844 = vunpack.c.l.b16 %v756
    %v845 = vunpack.c.h.b16 %v756
    %v846 = vunpack.c.l.b16 %v757
    %v847 = vunpack.c.h.b16 %v757
    %v848 = vunpack.c.l.b16 %v758
    %v849 = vunpack.c.h.b16 %v758
    %v850 = vunpack.c.l.b16 %v759
    %v851 = vunpack.c.h.b16 %v759
    %v852 = vunpack.c.l.b16 %v760
    %v853 = vunpack.c.h.b16 %v760
    %v854 = vunpack.c.l.b16 %v761
    %v855 = vunpack.c.h.b16 %v761
    %v856 = vunpack.c.l.b16 %v762
    %v857 = vunpack.c.h.b16 %v762
    %v858 = vunpack.c.l.b16 %v763
    %v859 = vunpack.c.h.b16 %v763
    %v860 = vunpack.c.l.b16 %v764
    %v861 = vunpack.c.h.b16 %v764
    %v862 = vunpack.c.l.b16 %v765
    %v863 = vunpack.c.h.b16 %v765
    %v864 = vunpack.c.l.b16 %v766
    %v865 = vunpack.c.h.b16 %v766
    %v866 = vunpack.c.l.b16 %v767
    %v867 = vunpack.c.h.b16 %v767
    %v868 = vunpack.c.l.b16 %v768
    %v869 = vunpack.c.h.b16 %v768
    %v870 = vunpack.c.l.b16 %v769
    %v871 = vunpack.c.h.b16 %v769
    %v872 = vunpack.c.l.b16 %v770
    %v873 = vunpack.c.h.b16 %v770
    %v874 = vpack.c.b16 %v814, %v810
    %v875 = vpack.c.b16 %v815, %v811
    %v876 = vpack.c.b16 %v816, %v812
    %v877 = vpack.c.b16 %v817, %v813
    %v878 = vpack.c.b16 %v822, %v818
    %v879 = vpack.c.b16 %v823, %v819
    %v880 = vpack.c.b16 %v824, %v820
    %v881 = vpack.c.b16 %v825, %v821
    %v882 = vpack.c.b16 %v830, %v826
    %v883 = vpack.c.b16 %v831, %v827
    %v884 = vpack.c.b16 %v832, %v828
    %v885 = vpack.c.b16 %v833, %v829
    %v886 = vpack.c.b16 %v838, %v834
    %v887 = vpack.c.b16 %v839, %v835
    %v888 = vpack.c.b16 %v840, %v836
    %v889 = vpack.c.b16 %v841, %v837
    %v890 = vpack.c.b16 %v846, %v842
    %v891 = vpack.c.b16 %v847, %v843
    %v892 = vpack.c.b16 %v848, %v844
    %v893 = vpack.c.b16 %v849, %v845
    %v894 = vpack.c.b16 %v854, %v850
    %v895 = vpack.c.b16 %v855, %v851
    %v896 = vpack.c.b16 %v856, %v852
    %v897 = vpack.c.b16 %v857, %v853
    %v898 = vpack.c.b16 %v862, %v858
    %v899 = vpack.c.b16 %v863, %v859
    %v900 = vpack.c.b16 %v864, %v860
    %v901 = vpack.c.b16 %v865, %v861
    %v902 = vpack.c.b16 %v870, %v866
    %v903 = vpack.c.b16 %v871, %v867
    %v904 = vpack.c.b16 %v872, %v868
    %v905 = vpack.c.b16 %v873, %v869
    %938 = vmatprep.subr.bf16.mxu0 %v875
    %939 = vmatpush1.bf16.msra.mxu0 %v874
    %940 = vmatprep.subr.bf16.mxu0 %v879
    %941 = vmatpush1.bf16.msra.mxu0 %v878
    %942 = vmatprep.subr.bf16.mxu0 %v883
    %943 = vmatpush1.bf16.msra.mxu0 %v882
    %944 = vmatprep.subr.bf16.mxu0 %v887
    %945 = vmatpush1.bf16.msra.mxu0 %v886
    %946 = vmatprep.subr.bf16.mxu0 %v891
    %947 = vmatpush1.bf16.msra.mxu0 %v890
    %948 = vmatprep.subr.bf16.mxu0 %v895
    %949 = vmatpush1.bf16.msra.mxu0 %v894
    %950 = vmatprep.subr.bf16.mxu0 %v899
    %951 = vmatpush1.bf16.msra.mxu0 %v898
    %952 = vmatprep.subr.bf16.mxu0 %v903
    %953 = vmatpush1.bf16.msra.mxu0 %v902
    %954 = vmatprep.subr.bf16.mxu0 0
    %955 = vmatpush1.bf16.msra.mxu0 0
    %956 = vmatprep.subr.bf16.mxu0 0
    %957 = vmatpush1.bf16.msra.mxu0 0
    %958 = vmatprep.subr.bf16.mxu0 0
    %959 = vmatpush1.bf16.msra.mxu0 0
    %960 = vmatprep.subr.bf16.mxu0 0
    %961 = vmatpush1.bf16.msra.mxu0 0
    %962 = vmatprep.subr.bf16.mxu0 0
    %963 = vmatpush1.bf16.msra.mxu0 0
    %964 = vmatprep.subr.bf16.mxu0 0
    %965 = vmatpush1.bf16.msra.mxu0 0
    %966 = vmatprep.subr.bf16.mxu0 0
    %967 = vmatpush1.bf16.msra.mxu0 0
    %968 = vmatprep.subr.bf16.mxu0 0
    %969 = vmatpush1.bf16.msra.mxu0 0
    %970 = vmatprep.mubr.bf16.mxu0 0
    %971 = vmatmul.mubr.bf16.gmra.mrb[0].mxu0 %v737
    %v972 = vpop.f32.mrb[0].mxu0
    %v973 = vadd.f32 %v774, %v972
    %v974 = vpop.f32.mrb[0].mxu0
    %v975 = vadd.f32 %v775, %v974
    %v976 = vpop.f32.mrb[0].mxu0
    %v977 = vpop.f32.mrb[0].mxu0
    %978 = vdwg.mxu0
    %979 = vmatprep.subr.bf16.mxu0 %v877
    %980 = vmatpush1.bf16.msra.mxu0 %v876
    %981 = vmatprep.subr.bf16.mxu0 %v881
    %982 = vmatpush1.bf16.msra.mxu0 %v880
    %983 = vmatprep.subr.bf16.mxu0 %v885
    %984 = vmatpush1.bf16.msra.mxu0 %v884
    %985 = vmatprep.subr.bf16.mxu0 %v889
    %986 = vmatpush1.bf16.msra.mxu0 %v888
    %987 = vmatprep.subr.bf16.mxu0 %v893
    %988 = vmatpush1.bf16.msra.mxu0 %v892
    %989 = vmatprep.subr.bf16.mxu0 %v897
    %990 = vmatpush1.bf16.msra.mxu0 %v896
    %991 = vmatprep.subr.bf16.mxu0 %v901
    %992 = vmatpush1.bf16.msra.mxu0 %v900
    %993 = vmatprep.subr.bf16.mxu0 %v905
    %994 = vmatpush1.bf16.msra.mxu0 %v904
    %995 = vmatprep.subr.bf16.mxu0 0
    %996 = vmatpush1.bf16.msra.mxu0 0
    %997 = vmatprep.subr.bf16.mxu0 0
    %998 = vmatpush1.bf16.msra.mxu0 0
    %999 = vmatprep.subr.bf16.mxu0 0
    %1000 = vmatpush1.bf16.msra.mxu0 0
    %1001 = vmatprep.subr.bf16.mxu0 0
    %1002 = vmatpush1.bf16.msra.mxu0 0
    %1003 = vmatprep.subr.bf16.mxu0 0
    %1004 = vmatpush1.bf16.msra.mxu0 0
    %1005 = vmatprep.subr.bf16.mxu0 0
    %1006 = vmatpush1.bf16.msra.mxu0 0
    %1007 = vmatprep.subr.bf16.mxu0 0
    %1008 = vmatpush1.bf16.msra.mxu0 0
    %1009 = vmatprep.subr.bf16.mxu0 0
    %1010 = vmatpush1.bf16.msra.mxu0 0
    %1011 = vmatprep.mubr.bf16.mxu0 0
    %1012 = vmatmul.mubr.bf16.gmra.mrb[0].mxu0 %v737
    %v1013 = vpop.f32.mrb[0].mxu0
    %v1014 = vadd.f32 %v776, %v1013
    %v1015 = vpop.f32.mrb[0].mxu0
    %v1016 = vadd.f32 %v777, %v1015
    %v1017 = vpop.f32.mrb[0].mxu0
    %v1018 = vpop.f32.mrb[0].mxu0
    %1019 = vdwg.mxu0
    %v1020 = vtanh.pop %v973
    %v1021 = vtanh.pop %v975
    %v1022 = vtanh.pop %v1014
    %v1023 = vtanh.pop %v1016
    %v1024 = vmul.f32 %v1020, 0.5
    %v1025 = vmul.f32 %v1021, 0.5
    %v1026 = vmul.f32 %v1022, 0.5
    %v1027 = vadd.f32 %v1024, 0.5
    %v1028 = vadd.f32 %v1025, 0.5
    %v1029 = vadd.f32 %v1026, 0.5
    %v1030 = vmul.f32 %v1028, %v734
    %v1031 = vmul.f32 %v1027, %v1023
    %v1032 = vadd.f32 %v1030, %v1031
    %v1033 = vtanh.pop %v1032
    %v1034 = vmul.f32 %v1029, %v1033
    %v1035 = vpack.c.bf16 %v1034, %v1034
    %s1036 = scalar_lea.vmem %s4, 4
    %1037 = vst [vmem:[%s1036] sm:$0xf] %v1035
    %v1038 = vld [vmem:[#allocation7] sm:$0xff]
    %v1039 = vld [vmem:[#allocation7 + $0x8] sm:$0xff]
    %v1040 = vld [vmem:[#allocation7 + $0x10] sm:$0xff]
    %v1041 = vld [vmem:[#allocation7 + $0x18] sm:$0xff]
    %v1042 = vld [vmem:[#allocation7 + $0x20] sm:$0xff]
    %v1043 = vld [vmem:[#allocation7 + $0x28] sm:$0xff]
    %v1044 = vld [vmem:[#allocation7 + $0x30] sm:$0xff]
    %v1045 = vld [vmem:[#allocation7 + $0x38] sm:$0xff]
    %v1046 = vld [vmem:[#allocation7 + $0x40] sm:$0xff]
    %v1047 = vld [vmem:[#allocation7 + $0x48] sm:$0xff]
    %v1048 = vld [vmem:[#allocation7 + $0x50] sm:$0xff]
    %v1049 = vld [vmem:[#allocation7 + $0x58] sm:$0xff]
    %v1050 = vld [vmem:[#allocation7 + $0x60] sm:$0xff]
    %v1051 = vld [vmem:[#allocation7 + $0x68] sm:$0xff]
    %v1052 = vld [vmem:[#allocation7 + $0x70] sm:$0xff]
    %v1053 = vld [vmem:[#allocation7 + $0x78] sm:$0xff]
    %v1054 = vld [vmem:[#allocation7 + $0x80] sm:$0xff]
    %v1055 = vld [vmem:[#allocation7 + $0x88] sm:$0xff]
    %v1056 = vld [vmem:[#allocation7 + $0x90] sm:$0xff]
    %v1057 = vld [vmem:[#allocation7 + $0x98] sm:$0xff]
    %v1058 = vld [vmem:[#allocation7 + $0xa0] sm:$0xff]
    %v1059 = vld [vmem:[#allocation7 + $0xa8] sm:$0xff]
    %v1060 = vld [vmem:[#allocation7 + $0xb0] sm:$0xff]
    %v1061 = vld [vmem:[#allocation7 + $0xb8] sm:$0xff]
    %v1062 = vld [vmem:[#allocation7 + $0xc0] sm:$0xff]
    %v1063 = vld [vmem:[#allocation7 + $0xc8] sm:$0xff]
    %v1064 = vld [vmem:[#allocation7 + $0xd0] sm:$0xff]
    %v1065 = vld [vmem:[#allocation7 + $0xd8] sm:$0xff]
    %v1066 = vld [vmem:[#allocation7 + $0xe0] sm:$0xff]
    %v1067 = vld [vmem:[#allocation7 + $0xe8] sm:$0xff]
    %v1068 = vld [vmem:[#allocation7 + $0xf0] sm:$0xff]
    %v1069 = vld [vmem:[#allocation7 + $0xf8] sm:$0xff]
    %s1070 = scalar_lea.vmem [#allocation4], 32
    %v1071 = vld [vmem:[%s1070] sm:$0xff]
    %v1072 = vld [vmem:[%s1070 + $0x8] sm:$0xff]
    %v1073 = vunpack.c.l.bf16 %v1071
    %v1074 = vunpack.c.h.bf16 %v1071
    %v1075 = vunpack.c.l.bf16 %v1072
    %v1076 = vunpack.c.h.bf16 %v1072
    %v1109 = vunpack.c.l.b16 %v1038
    %v1110 = vunpack.c.h.b16 %v1038
    %v1111 = vunpack.c.l.b16 %v1039
    %v1112 = vunpack.c.h.b16 %v1039
    %v1113 = vunpack.c.l.b16 %v1040
    %v1114 = vunpack.c.h.b16 %v1040
    %v1115 = vunpack.c.l.b16 %v1041
    %v1116 = vunpack.c.h.b16 %v1041
    %v1117 = vunpack.c.l.b16 %v1042
    %v1118 = vunpack.c.h.b16 %v1042
    %v1119 = vunpack.c.l.b16 %v1043
    %v1120 = vunpack.c.h.b16 %v1043
    %v1121 = vunpack.c.l.b16 %v1044
    %v1122 = vunpack.c.h.b16 %v1044
    %v1123 = vunpack.c.l.b16 %v1045
    %v1124 = vunpack.c.h.b16 %v1045
    %v1125 = vunpack.c.l.b16 %v1046
    %v1126 = vunpack.c.h.b16 %v1046
    %v1127 = vunpack.c.l.b16 %v1047
    %v1128 = vunpack.c.h.b16 %v1047
    %v1129 = vunpack.c.l.b16 %v1048
    %v1130 = vunpack.c.h.b16 %v1048
    %v1131 = vunpack.c.l.b16 %v1049
    %v1132 = vunpack.c.h.b16 %v1049
    %v1133 = vunpack.c.l.b16 %v1050
    %v1134 = vunpack.c.h.b16 %v1050
    %v1135 = vunpack.c.l.b16 %v1051
    %v1136 = vunpack.c.h.b16 %v1051
    %v1137 = vunpack.c.l.b16 %v1052
    %v1138 = vunpack.c.h.b16 %v1052
    %v1139 = vunpack.c.l.b16 %v1053
    %v1140 = vunpack.c.h.b16 %v1053
    %v1141 = vunpack.c.l.b16 %v1054
    %v1142 = vunpack.c.h.b16 %v1054
    %v1143 = vunpack.c.l.b16 %v1055
    %v1144 = vunpack.c.h.b16 %v1055
    %v1145 = vunpack.c.l.b16 %v1056
    %v1146 = vunpack.c.h.b16 %v1056
    %v1147 = vunpack.c.l.b16 %v1057
    %v1148 = vunpack.c.h.b16 %v1057
    %v1149 = vunpack.c.l.b16 %v1058
    %v1150 = vunpack.c.h.b16 %v1058
    %v1151 = vunpack.c.l.b16 %v1059
    %v1152 = vunpack.c.h.b16 %v1059
    %v1153 = vunpack.c.l.b16 %v1060
    %v1154 = vunpack.c.h.b16 %v1060
    %v1155 = vunpack.c.l.b16 %v1061
    %v1156 = vunpack.c.h.b16 %v1061
    %v1157 = vunpack.c.l.b16 %v1062
    %v1158 = vunpack.c.h.b16 %v1062
    %v1159 = vunpack.c.l.b16 %v1063
    %v1160 = vunpack.c.h.b16 %v1063
    %v1161 = vunpack.c.l.b16 %v1064
    %v1162 = vunpack.c.h.b16 %v1064
    %v1163 = vunpack.c.l.b16 %v1065
    %v1164 = vunpack.c.h.b16 %v1065
    %v1165 = vunpack.c.l.b16 %v1066
    %v1166 = vunpack.c.h.b16 %v1066
    %v1167 = vunpack.c.l.b16 %v1067
    %v1168 = vunpack.c.h.b16 %v1067
    %v1169 = vunpack.c.l.b16 %v1068
    %v1170 = vunpack.c.h.b16 %v1068
    %v1171 = vunpack.c.l.b16 %v1069
    %v1172 = vunpack.c.h.b16 %v1069
    %v1173 = vpack.c.b16 %v1113, %v1109
    %v1174 = vpack.c.b16 %v1114, %v1110
    %v1175 = vpack.c.b16 %v1115, %v1111
    %v1176 = vpack.c.b16 %v1116, %v1112
    %v1177 = vpack.c.b16 %v1121, %v1117
    %v1178 = vpack.c.b16 %v1122, %v1118
    %v1179 = vpack.c.b16 %v1123, %v1119
    %v1180 = vpack.c.b16 %v1124, %v1120
    %v1181 = vpack.c.b16 %v1129, %v1125
    %v1182 = vpack.c.b16 %v1130, %v1126
    %v1183 = vpack.c.b16 %v1131, %v1127
    %v1184 = vpack.c.b16 %v1132, %v1128
    %v1185 = vpack.c.b16 %v1137, %v1133
    %v1186 = vpack.c.b16 %v1138, %v1134
    %v1187 = vpack.c.b16 %v1139, %v1135
    %v1188 = vpack.c.b16 %v1140, %v1136
    %v1189 = vpack.c.b16 %v1145, %v1141
    %v1190 = vpack.c.b16 %v1146, %v1142
    %v1191 = vpack.c.b16 %v1147, %v1143
    %v1192 = vpack.c.b16 %v1148, %v1144
    %v1193 = vpack.c.b16 %v1153, %v1149
    %v1194 = vpack.c.b16 %v1154, %v1150
    %v1195 = vpack.c.b16 %v1155, %v1151
    %v1196 = vpack.c.b16 %v1156, %v1152
    %v1197 = vpack.c.b16 %v1161, %v1157
    %v1198 = vpack.c.b16 %v1162, %v1158
    %v1199 = vpack.c.b16 %v1163, %v1159
    %v1200 = vpack.c.b16 %v1164, %v1160
    %v1201 = vpack.c.b16 %v1169, %v1165
    %v1202 = vpack.c.b16 %v1170, %v1166
    %v1203 = vpack.c.b16 %v1171, %v1167
    %v1204 = vpack.c.b16 %v1172, %v1168
    %1237 = vmatprep.subr.bf16.mxu0 %v1174
    %1238 = vmatpush1.bf16.msra.mxu0 %v1173
    %1239 = vmatprep.subr.bf16.mxu0 %v1178
    %1240 = vmatpush1.bf16.msra.mxu0 %v1177
    %1241 = vmatprep.subr.bf16.mxu0 %v1182
    %1242 = vmatpush1.bf16.msra.mxu0 %v1181
    %1243 = vmatprep.subr.bf16.mxu0 %v1186
    %1244 = vmatpush1.bf16.msra.mxu0 %v1185
    %1245 = vmatprep.subr.bf16.mxu0 %v1190
    %1246 = vmatpush1.bf16.msra.mxu0 %v1189
    %1247 = vmatprep.subr.bf16.mxu0 %v1194
    %1248 = vmatpush1.bf16.msra.mxu0 %v1193
    %1249 = vmatprep.subr.bf16.mxu0 %v1198
    %1250 = vmatpush1.bf16.msra.mxu0 %v1197
    %1251 = vmatprep.subr.bf16.mxu0 %v1202
    %1252 = vmatpush1.bf16.msra.mxu0 %v1201
    %1253 = vmatprep.subr.bf16.mxu0 0
    %1254 = vmatpush1.bf16.msra.mxu0 0
    %1255 = vmatprep.subr.bf16.mxu0 0
    %1256 = vmatpush1.bf16.msra.mxu0 0
    %1257 = vmatprep.subr.bf16.mxu0 0
    %1258 = vmatpush1.bf16.msra.mxu0 0
    %1259 = vmatprep.subr.bf16.mxu0 0
    %1260 = vmatpush1.bf16.msra.mxu0 0
    %1261 = vmatprep.subr.bf16.mxu0 0
    %1262 = vmatpush1.bf16.msra.mxu0 0
    %1263 = vmatprep.subr.bf16.mxu0 0
    %1264 = vmatpush1.bf16.msra.mxu0 0
    %1265 = vmatprep.subr.bf16.mxu0 0
    %1266 = vmatpush1.bf16.msra.mxu0 0
    %1267 = vmatprep.subr.bf16.mxu0 0
    %1268 = vmatpush1.bf16.msra.mxu0 0
    %1269 = vmatprep.mubr.bf16.mxu0 0
    %1270 = vmatmul.mubr.bf16.gmra.mrb[0].mxu0 %v1035
    %v1271 = vpop.f32.mrb[0].mxu0
    %v1272 = vadd.f32 %v1073, %v1271
    %v1273 = vpop.f32.mrb[0].mxu0
    %v1274 = vadd.f32 %v1074, %v1273
    %v1275 = vpop.f32.mrb[0].mxu0
    %v1276 = vpop.f32.mrb[0].mxu0
    %1277 = vdwg.mxu0
    %1278 = vmatprep.subr.bf16.mxu0 %v1176
    %1279 = vmatpush1.bf16.msra.mxu0 %v1175
    %1280 = vmatprep.subr.bf16.mxu0 %v1180
    %1281 = vmatpush1.bf16.msra.mxu0 %v1179
    %1282 = vmatprep.subr.bf16.mxu0 %v1184
    %1283 = vmatpush1.bf16.msra.mxu0 %v1183
    %1284 = vmatprep.subr.bf16.mxu0 %v1188
    %1285 = vmatpush1.bf16.msra.mxu0 %v1187
    %1286 = vmatprep.subr.bf16.mxu0 %v1192
    %1287 = vmatpush1.bf16.msra.mxu0 %v1191
    %1288 = vmatprep.subr.bf16.mxu0 %v1196
    %1289 = vmatpush1.bf16.msra.mxu0 %v1195
    %1290 = vmatprep.subr.bf16.mxu0 %v1200
    %1291 = vmatpush1.bf16.msra.mxu0 %v1199
    %1292 = vmatprep.subr.bf16.mxu0 %v1204
    %1293 = vmatpush1.bf16.msra.mxu0 %v1203
    %1294 = vmatprep.subr.bf16.mxu0 0
    %1295 = vmatpush1.bf16.msra.mxu0 0
    %1296 = vmatprep.subr.bf16.mxu0 0
    %1297 = vmatpush1.bf16.msra.mxu0 0
    %1298 = vmatprep.subr.bf16.mxu0 0
    %1299 = vmatpush1.bf16.msra.mxu0 0
    %1300 = vmatprep.subr.bf16.mxu0 0
    %1301 = vmatpush1.bf16.msra.mxu0 0
    %1302 = vmatprep.subr.bf16.mxu0 0
    %1303 = vmatpush1.bf16.msra.mxu0 0
    %1304 = vmatprep.subr.bf16.mxu0 0
    %1305 = vmatpush1.bf16.msra.mxu0 0
    %1306 = vmatprep.subr.bf16.mxu0 0
    %1307 = vmatpush1.bf16.msra.mxu0 0
    %1308 = vmatprep.subr.bf16.mxu0 0
    %1309 = vmatpush1.bf16.msra.mxu0 0
    %1310 = vmatprep.mubr.bf16.mxu0 0
    %1311 = vmatmul.mubr.bf16.gmra.mrb[0].mxu0 %v1035
    %v1312 = vpop.f32.mrb[0].mxu0
    %v1313 = vadd.f32 %v1075, %v1312
    %v1314 = vpop.f32.mrb[0].mxu0
    %v1315 = vadd.f32 %v1076, %v1314
    %v1316 = vpop.f32.mrb[0].mxu0
    %v1317 = vpop.f32.mrb[0].mxu0
    %1318 = vdwg.mxu0
    %v1319 = vtanh.pop %v1272
    %v1320 = vtanh.pop %v1274
    %v1321 = vtanh.pop %v1313
    %v1322 = vtanh.pop %v1315
    %v1323 = vmul.f32 %v1319, 0.5
    %v1324 = vmul.f32 %v1320, 0.5
    %v1325 = vmul.f32 %v1321, 0.5
    %v1326 = vadd.f32 %v1323, 0.5
    %v1327 = vadd.f32 %v1324, 0.5
    %v1328 = vadd.f32 %v1325, 0.5
    %v1329 = vmul.f32 %v1327, %v1032
    %v1330 = vmul.f32 %v1326, %v1322
    %v1331 = vadd.f32 %v1329, %v1330
    %v1332 = vtanh.pop %v1331
    %v1333 = vmul.f32 %v1328, %v1332
    %v1334 = vpack.c.bf16 %v1333, %v1333
    %s1335 = scalar_lea.vmem %s4, 8
    %1336 = vst [vmem:[%s1335] sm:$0xf] %v1334
    %v1337 = vld [vmem:[#allocation7] sm:$0xff]
    %v1338 = vld [vmem:[#allocation7 + $0x8] sm:$0xff]
    %v1339 = vld [vmem:[#allocation7 + $0x10] sm:$0xff]
    %v1340 = vld [vmem:[#allocation7 + $0x18] sm:$0xff]
    %v1341 = vld [vmem:[#allocation7 + $0x20] sm:$0xff]
    %v1342 = vld [vmem:[#allocation7 + $0x28] sm:$0xff]
    %v1343 = vld [vmem:[#allocation7 + $0x30] sm:$0xff]
    %v1344 = vld [vmem:[#allocation7 + $0x38] sm:$0xff]
    %v1345 = vld [vmem:[#allocation7 + $0x40] sm:$0xff]
    %v1346 = vld [vmem:[#allocation7 + $0x48] sm:$0xff]
    %v1347 = vld [vmem:[#allocation7 + $0x50] sm:$0xff]
    %v1348 = vld [vmem:[#allocation7 + $0x58] sm:$0xff]
    %v1349 = vld [vmem:[#allocation7 + $0x60] sm:$0xff]
    %v1350 = vld [vmem:[#allocation7 + $0x68] sm:$0xff]
    %v1351 = vld [vmem:[#allocation7 + $0x70] sm:$0xff]
    %v1352 = vld [vmem:[#allocation7 + $0x78] sm:$0xff]
    %v1353 = vld [vmem:[#allocation7 + $0x80] sm:$0xff]
    %v1354 = vld [vmem:[#allocation7 + $0x88] sm:$0xff]
    %v1355 = vld [vmem:[#allocation7 + $0x90] sm:$0xff]
    %v1356 = vld [vmem:[#allocation7 + $0x98] sm:$0xff]
    %v1357 = vld [vmem:[#allocation7 + $0xa0] sm:$0xff]
    %v1358 = vld [vmem:[#allocation7 + $0xa8] sm:$0xff]
    %v1359 = vld [vmem:[#allocation7 + $0xb0] sm:$0xff]
    %v1360 = vld [vmem:[#allocation7 + $0xb8] sm:$0xff]
    %v1361 = vld [vmem:[#allocation7 + $0xc0] sm:$0xff]
    %v1362 = vld [vmem:[#allocation7 + $0xc8] sm:$0xff]
    %v1363 = vld [vmem:[#allocation7 + $0xd0] sm:$0xff]
    %v1364 = vld [vmem:[#allocation7 + $0xd8] sm:$0xff]
    %v1365 = vld [vmem:[#allocation7 + $0xe0] sm:$0xff]
    %v1366 = vld [vmem:[#allocation7 + $0xe8] sm:$0xff]
    %v1367 = vld [vmem:[#allocation7 + $0xf0] sm:$0xff]
    %v1368 = vld [vmem:[#allocation7 + $0xf8] sm:$0xff]
    %s1369 = scalar_lea.vmem [#allocation4], 48
    %v1370 = vld [vmem:[%s1369] sm:$0xff]
    %v1371 = vld [vmem:[%s1369 + $0x8] sm:$0xff]
    %v1372 = vunpack.c.l.bf16 %v1370
    %v1373 = vunpack.c.h.bf16 %v1370
    %v1374 = vunpack.c.l.bf16 %v1371
    %v1375 = vunpack.c.h.bf16 %v1371
    %v1408 = vunpack.c.l.b16 %v1337
    %v1409 = vunpack.c.h.b16 %v1337
    %v1410 = vunpack.c.l.b16 %v1338
    %v1411 = vunpack.c.h.b16 %v1338
    %v1412 = vunpack.c.l.b16 %v1339
    %v1413 = vunpack.c.h.b16 %v1339
    %v1414 = vunpack.c.l.b16 %v1340
    %v1415 = vunpack.c.h.b16 %v1340
    %v1416 = vunpack.c.l.b16 %v1341
    %v1417 = vunpack.c.h.b16 %v1341
    %v1418 = vunpack.c.l.b16 %v1342
    %v1419 = vunpack.c.h.b16 %v1342
    %v1420 = vunpack.c.l.b16 %v1343
    %v1421 = vunpack.c.h.b16 %v1343
    %v1422 = vunpack.c.l.b16 %v1344
    %v1423 = vunpack.c.h.b16 %v1344
    %v1424 = vunpack.c.l.b16 %v1345
    %v1425 = vunpack.c.h.b16 %v1345
    %v1426 = vunpack.c.l.b16 %v1346
    %v1427 = vunpack.c.h.b16 %v1346
    %v1428 = vunpack.c.l.b16 %v1347
    %v1429 = vunpack.c.h.b16 %v1347
    %v1430 = vunpack.c.l.b16 %v1348
    %v1431 = vunpack.c.h.b16 %v1348
    %v1432 = vunpack.c.l.b16 %v1349
    %v1433 = vunpack.c.h.b16 %v1349
    %v1434 = vunpack.c.l.b16 %v1350
    %v1435 = vunpack.c.h.b16 %v1350
    %v1436 = vunpack.c.l.b16 %v1351
    %v1437 = vunpack.c.h.b16 %v1351
    %v1438 = vunpack.c.l.b16 %v1352
    %v1439 = vunpack.c.h.b16 %v1352
    %v1440 = vunpack.c.l.b16 %v1353
    %v1441 = vunpack.c.h.b16 %v1353
    %v1442 = vunpack.c.l.b16 %v1354
    %v1443 = vunpack.c.h.b16 %v1354
    %v1444 = vunpack.c.l.b16 %v1355
    %v1445 = vunpack.c.h.b16 %v1355
    %v1446 = vunpack.c.l.b16 %v1356
    %v1447 = vunpack.c.h.b16 %v1356
    %v1448 = vunpack.c.l.b16 %v1357
    %v1449 = vunpack.c.h.b16 %v1357
    %v1450 = vunpack.c.l.b16 %v1358
    %v1451 = vunpack.c.h.b16 %v1358
    %v1452 = vunpack.c.l.b16 %v1359
    %v1453 = vunpack.c.h.b16 %v1359
    %v1454 = vunpack.c.l.b16 %v1360
    %v1455 = vunpack.c.h.b16 %v1360
    %v1456 = vunpack.c.l.b16 %v1361
    %v1457 = vunpack.c.h.b16 %v1361
    %v1458 = vunpack.c.l.b16 %v1362
    %v1459 = vunpack.c.h.b16 %v1362
    %v1460 = vunpack.c.l.b16 %v1363
    %v1461 = vunpack.c.h.b16 %v1363
    %v1462 = vunpack.c.l.b16 %v1364
    %v1463 = vunpack.c.h.b16 %v1364
    %v1464 = vunpack.c.l.b16 %v1365
    %v1465 = vunpack.c.h.b16 %v1365
    %v1466 = vunpack.c.l.b16 %v1366
    %v1467 = vunpack.c.h.b16 %v1366
    %v1468 = vunpack.c.l.b16 %v1367
    %v1469 = vunpack.c.h.b16 %v1367
    %v1470 = vunpack.c.l.b16 %v1368
    %v1471 = vunpack.c.h.b16 %v1368
    %v1472 = vpack.c.b16 %v1412, %v1408
    %v1473 = vpack.c.b16 %v1413, %v1409
    %v1474 = vpack.c.b16 %v1414, %v1410
    %v1475 = vpack.c.b16 %v1415, %v1411
    %v1476 = vpack.c.b16 %v1420, %v1416
    %v1477 = vpack.c.b16 %v1421, %v1417
    %v1478 = vpack.c.b16 %v1422, %v1418
    %v1479 = vpack.c.b16 %v1423, %v1419
    %v1480 = vpack.c.b16 %v1428, %v1424
    %v1481 = vpack.c.b16 %v1429, %v1425
    %v1482 = vpack.c.b16 %v1430, %v1426
    %v1483 = vpack.c.b16 %v1431, %v1427
    %v1484 = vpack.c.b16 %v1436, %v1432
    %v1485 = vpack.c.b16 %v1437, %v1433
    %v1486 = vpack.c.b16 %v1438, %v1434
    %v1487 = vpack.c.b16 %v1439, %v1435
    %v1488 = vpack.c.b16 %v1444, %v1440
    %v1489 = vpack.c.b16 %v1445, %v1441
    %v1490 = vpack.c.b16 %v1446, %v1442
    %v1491 = vpack.c.b16 %v1447, %v1443
    %v1492 = vpack.c.b16 %v1452, %v1448
    %v1493 = vpack.c.b16 %v1453, %v1449
    %v1494 = vpack.c.b16 %v1454, %v1450
    %v1495 = vpack.c.b16 %v1455, %v1451
    %v1496 = vpack.c.b16 %v1460, %v1456
    %v1497 = vpack.c.b16 %v1461, %v1457
    %v1498 = vpack.c.b16 %v1462, %v1458
    %v1499 = vpack.c.b16 %v1463, %v1459
    %v1500 = vpack.c.b16 %v1468, %v1464
    %v1501 = vpack.c.b16 %v1469, %v1465
    %v1502 = vpack.c.b16 %v1470, %v1466
    %v1503 = vpack.c.b16 %v1471, %v1467
    %1536 = vmatprep.subr.bf16.mxu0 %v1473
    %1537 = vmatpush1.bf16.msra.mxu0 %v1472
    %1538 = vmatprep.subr.bf16.mxu0 %v1477
    %1539 = vmatpush1.bf16.msra.mxu0 %v1476
    %1540 = vmatprep.subr.bf16.mxu0 %v1481
    %1541 = vmatpush1.bf16.msra.mxu0 %v1480
    %1542 = vmatprep.subr.bf16.mxu0 %v1485
    %1543 = vmatpush1.bf16.msra.mxu0 %v1484
    %1544 = vmatprep.subr.bf16.mxu0 %v1489
    %1545 = vmatpush1.bf16.msra.mxu0 %v1488
    %1546 = vmatprep.subr.bf16.mxu0 %v1493
    %1547 = vmatpush1.bf16.msra.mxu0 %v1492
    %1548 = vmatprep.subr.bf16.mxu0 %v1497
    %1549 = vmatpush1.bf16.msra.mxu0 %v1496
    %1550 = vmatprep.subr.bf16.mxu0 %v1501
    %1551 = vmatpush1.bf16.msra.mxu0 %v1500
    %1552 = vmatprep.subr.bf16.mxu0 0
    %1553 = vmatpush1.bf16.msra.mxu0 0
    %1554 = vmatprep.subr.bf16.mxu0 0
    %1555 = vmatpush1.bf16.msra.mxu0 0
    %1556 = vmatprep.subr.bf16.mxu0 0
    %1557 = vmatpush1.bf16.msra.mxu0 0
    %1558 = vmatprep.subr.bf16.mxu0 0
    %1559 = vmatpush1.bf16.msra.mxu0 0
    %1560 = vmatprep.subr.bf16.mxu0 0
    %1561 = vmatpush1.bf16.msra.mxu0 0
    %1562 = vmatprep.subr.bf16.mxu0 0
    %1563 = vmatpush1.bf16.msra.mxu0 0
    %1564 = vmatprep.subr.bf16.mxu0 0
    %1565 = vmatpush1.bf16.msra.mxu0 0
    %1566 = vmatprep.subr.bf16.mxu0 0
    %1567 = vmatpush1.bf16.msra.mxu0 0
    %1568 = vmatprep.mubr.bf16.mxu0 0
    %1569 = vmatmul.mubr.bf16.gmra.mrb[0].mxu0 %v1334
    %v1570 = vpop.f32.mrb[0].mxu0
    %v1571 = vadd.f32 %v1372, %v1570
    %v1572 = vpop.f32.mrb[0].mxu0
    %v1573 = vadd.f32 %v1373, %v1572
    %v1574 = vpop.f32.mrb[0].mxu0
    %v1575 = vpop.f32.mrb[0].mxu0
    %1576 = vdwg.mxu0
    %1577 = vmatprep.subr.bf16.mxu0 %v1475
    %1578 = vmatpush1.bf16.msra.mxu0 %v1474
    %1579 = vmatprep.subr.bf16.mxu0 %v1479
    %1580 = vmatpush1.bf16.msra.mxu0 %v1478
    %1581 = vmatprep.subr.bf16.mxu0 %v1483
    %1582 = vmatpush1.bf16.msra.mxu0 %v1482
    %1583 = vmatprep.subr.bf16.mxu0 %v1487
    %1584 = vmatpush1.bf16.msra.mxu0 %v1486
    %1585 = vmatprep.subr.bf16.mxu0 %v1491
    %1586 = vmatpush1.bf16.msra.mxu0 %v1490
    %1587 = vmatprep.subr.bf16.mxu0 %v1495
    %1588 = vmatpush1.bf16.msra.mxu0 %v1494
    %1589 = vmatprep.subr.bf16.mxu0 %v1499
    %1590 = vmatpush1.bf16.msra.mxu0 %v1498
    %1591 = vmatprep.subr.bf16.mxu0 %v1503
    %1592 = vmatpush1.bf16.msra.mxu0 %v1502
    %1593 = vmatprep.subr.bf16.mxu0 0
    %1594 = vmatpush1.bf16.msra.mxu0 0
    %1595 = vmatprep.subr.bf16.mxu0 0
    %1596 = vmatpush1.bf16.msra.mxu0 0
    %1597 = vmatprep.subr.bf16.mxu0 0
    %1598 = vmatpush1.bf16.msra.mxu0 0
    %1599 = vmatprep.subr.bf16.mxu0 0
    %1600 = vmatpush1.bf16.msra.mxu0 0
    %1601 = vmatprep.subr.bf16.mxu0 0
    %1602 = vmatpush1.bf16.msra.mxu0 0
    %1603 = vmatprep.subr.bf16.mxu0 0
    %1604 = vmatpush1.bf16.msra.mxu0 0
    %1605 = vmatprep.subr.bf16.mxu0 0
    %1606 = vmatpush1.bf16.msra.mxu0 0
    %1607 = vmatprep.subr.bf16.mxu0 0
    %1608 = vmatpush1.bf16.msra.mxu0 0
    %1609 = vmatprep.mubr.bf16.mxu0 0
    %1610 = vmatmul.mubr.bf16.gmra.mrb[0].mxu0 %v1334
    %v1611 = vpop.f32.mrb[0].mxu0
    %v1612 = vadd.f32 %v1374, %v1611
    %v1613 = vpop.f32.mrb[0].mxu0
    %v1614 = vadd.f32 %v1375, %v1613
    %v1615 = vpop.f32.mrb[0].mxu0
    %v1616 = vpop.f32.mrb[0].mxu0
    %1617 = vdwg.mxu0
    %v1618 = vtanh.pop %v1571
    %v1619 = vtanh.pop %v1573
    %v1620 = vtanh.pop %v1612
    %v1621 = vtanh.pop %v1614
    %v1622 = vmul.f32 %v1618, 0.5
    %v1623 = vmul.f32 %v1619, 0.5
    %v1624 = vmul.f32 %v1620, 0.5
    %v1625 = vadd.f32 %v1622, 0.5
    %v1626 = vadd.f32 %v1623, 0.5
    %v1627 = vadd.f32 %v1624, 0.5
    %v1628 = vmul.f32 %v1626, %v1331
    %v1629 = vmul.f32 %v1625, %v1621
    %v1630 = vadd.f32 %v1628, %v1629
    %v1631 = vtanh.pop %v1630
    %v1632 = vmul.f32 %v1627, %v1631
    %v1633 = vpack.c.bf16 %v1632, %v1632
    %s1634 = scalar_lea.vmem %s4, 12
    %1635 = vst [vmem:[%s1634] sm:$0xf] %v1633
    %v1636 = vld [vmem:[#allocation7] sm:$0xff]
    %v1637 = vld [vmem:[#allocation7 + $0x8] sm:$0xff]
    %v1638 = vld [vmem:[#allocation7 + $0x10] sm:$0xff]
    %v1639 = vld [vmem:[#allocation7 + $0x18] sm:$0xff]
    %v1640 = vld [vmem:[#allocation7 + $0x20] sm:$0xff]
    %v1641 = vld [vmem:[#allocation7 + $0x28] sm:$0xff]
    %v1642 = vld [vmem:[#allocation7 + $0x30] sm:$0xff]
    %v1643 = vld [vmem:[#allocation7 + $0x38] sm:$0xff]
    %v1644 = vld [vmem:[#allocation7 + $0x40] sm:$0xff]
    %v1645 = vld [vmem:[#allocation7 + $0x48] sm:$0xff]
    %v1646 = vld [vmem:[#allocation7 + $0x50] sm:$0xff]
    %v1647 = vld [vmem:[#allocation7 + $0x58] sm:$0xff]
    %v1648 = vld [vmem:[#allocation7 + $0x60] sm:$0xff]
    %v1649 = vld [vmem:[#allocation7 + $0x68] sm:$0xff]
    %v1650 = vld [vmem:[#allocation7 + $0x70] sm:$0xff]
    %v1651 = vld [vmem:[#allocation7 + $0x78] sm:$0xff]
    %v1652 = vld [vmem:[#allocation7 + $0x80] sm:$0xff]
    %v1653 = vld [vmem:[#allocation7 + $0x88] sm:$0xff]
    %v1654 = vld [vmem:[#allocation7 + $0x90] sm:$0xff]
    %v1655 = vld [vmem:[#allocation7 + $0x98] sm:$0xff]
    %v1656 = vld [vmem:[#allocation7 + $0xa0] sm:$0xff]
    %v1657 = vld [vmem:[#allocation7 + $0xa8] sm:$0xff]
    %v1658 = vld [vmem:[#allocation7 + $0xb0] sm:$0xff]
    %v1659 = vld [vmem:[#allocation7 + $0xb8] sm:$0xff]
    %v1660 = vld [vmem:[#allocation7 + $0xc0] sm:$0xff]
    %v1661 = vld [vmem:[#allocation7 + $0xc8] sm:$0xff]
    %v1662 = vld [vmem:[#allocation7 + $0xd0] sm:$0xff]
    %v1663 = vld [vmem:[#allocation7 + $0xd8] sm:$0xff]
    %v1664 = vld [vmem:[#allocation7 + $0xe0] sm:$0xff]
    %v1665 = vld [vmem:[#allocation7 + $0xe8] sm:$0xff]
    %v1666 = vld [vmem:[#allocation7 + $0xf0] sm:$0xff]
    %v1667 = vld [vmem:[#allocation7 + $0xf8] sm:$0xff]
    %s1668 = scalar_lea.vmem [#allocation4], 64
    %v1669 = vld [vmem:[%s1668] sm:$0xff]
    %v1670 = vld [vmem:[%s1668 + $0x8] sm:$0xff]
    %v1671 = vunpack.c.l.bf16 %v1669
    %v1672 = vunpack.c.h.bf16 %v1669
    %v1673 = vunpack.c.l.bf16 %v1670
    %v1674 = vunpack.c.h.bf16 %v1670
    %v1707 = vunpack.c.l.b16 %v1636
    %v1708 = vunpack.c.h.b16 %v1636
    %v1709 = vunpack.c.l.b16 %v1637
    %v1710 = vunpack.c.h.b16 %v1637
    %v1711 = vunpack.c.l.b16 %v1638
    %v1712 = vunpack.c.h.b16 %v1638
    %v1713 = vunpack.c.l.b16 %v1639
    %v1714 = vunpack.c.h.b16 %v1639
    %v1715 = vunpack.c.l.b16 %v1640
    %v1716 = vunpack.c.h.b16 %v1640
    %v1717 = vunpack.c.l.b16 %v1641
    %v1718 = vunpack.c.h.b16 %v1641
    %v1719 = vunpack.c.l.b16 %v1642
    %v1720 = vunpack.c.h.b16 %v1642
    %v1721 = vunpack.c.l.b16 %v1643
    %v1722 = vunpack.c.h.b16 %v1643
    %v1723 = vunpack.c.l.b16 %v1644
    %v1724 = vunpack.c.h.b16 %v1644
    %v1725 = vunpack.c.l.b16 %v1645
    %v1726 = vunpack.c.h.b16 %v1645
    %v1727 = vunpack.c.l.b16 %v1646
    %v1728 = vunpack.c.h.b16 %v1646
    %v1729 = vunpack.c.l.b16 %v1647
    %v1730 = vunpack.c.h.b16 %v1647
    %v1731 = vunpack.c.l.b16 %v1648
    %v1732 = vunpack.c.h.b16 %v1648
    %v1733 = vunpack.c.l.b16 %v1649
    %v1734 = vunpack.c.h.b16 %v1649
    %v1735 = vunpack.c.l.b16 %v1650
    %v1736 = vunpack.c.h.b16 %v1650
    %v1737 = vunpack.c.l.b16 %v1651
    %v1738 = vunpack.c.h.b16 %v1651
    %v1739 = vunpack.c.l.b16 %v1652
    %v1740 = vunpack.c.h.b16 %v1652
    %v1741 = vunpack.c.l.b16 %v1653
    %v1742 = vunpack.c.h.b16 %v1653
    %v1743 = vunpack.c.l.b16 %v1654
    %v1744 = vunpack.c.h.b16 %v1654
    %v1745 = vunpack.c.l.b16 %v1655
    %v1746 = vunpack.c.h.b16 %v1655
    %v1747 = vunpack.c.l.b16 %v1656
    %v1748 = vunpack.c.h.b16 %v1656
    %v1749 = vunpack.c.l.b16 %v1657
    %v1750 = vunpack.c.h.b16 %v1657
    %v1751 = vunpack.c.l.b16 %v1658
    %v1752 = vunpack.c.h.b16 %v1658
    %v1753 = vunpack.c.l.b16 %v1659
    %v1754 = vunpack.c.h.b16 %v1659
    %v1755 = vunpack.c.l.b16 %v1660
    %v1756 = vunpack.c.h.b16 %v1660
    %v1757 = vunpack.c.l.b16 %v1661
    %v1758 = vunpack.c.h.b16 %v1661
    %v1759 = vunpack.c.l.b16 %v1662
    %v1760 = vunpack.c.h.b16 %v1662
    %v1761 = vunpack.c.l.b16 %v1663
    %v1762 = vunpack.c.h.b16 %v1663
    %v1763 = vunpack.c.l.b16 %v1664
    %v1764 = vunpack.c.h.b16 %v1664
    %v1765 = vunpack.c.l.b16 %v1665
    %v1766 = vunpack.c.h.b16 %v1665
    %v1767 = vunpack.c.l.b16 %v1666
    %v1768 = vunpack.c.h.b16 %v1666
    %v1769 = vunpack.c.l.b16 %v1667
    %v1770 = vunpack.c.h.b16 %v1667
    %v1771 = vpack.c.b16 %v1711, %v1707
    %v1772 = vpack.c.b16 %v1712, %v1708
    %v1773 = vpack.c.b16 %v1713, %v1709
    %v1774 = vpack.c.b16 %v1714, %v1710
    %v1775 = vpack.c.b16 %v1719, %v1715
    %v1776 = vpack.c.b16 %v1720, %v1716
    %v1777 = vpack.c.b16 %v1721, %v1717
    %v1778 = vpack.c.b16 %v1722, %v1718
    %v1779 = vpack.c.b16 %v1727, %v1723
    %v1780 = vpack.c.b16 %v1728, %v1724
    %v1781 = vpack.c.b16 %v1729, %v1725
    %v1782 = vpack.c.b16 %v1730, %v1726
    %v1783 = vpack.c.b16 %v1735, %v1731
    %v1784 = vpack.c.b16 %v1736, %v1732
    %v1785 = vpack.c.b16 %v1737, %v1733
    %v1786 = vpack.c.b16 %v1738, %v1734
    %v1787 = vpack.c.b16 %v1743, %v1739
    %v1788 = vpack.c.b16 %v1744, %v1740
    %v1789 = vpack.c.b16 %v1745, %v1741
    %v1790 = vpack.c.b16 %v1746, %v1742
    %v1791 = vpack.c.b16 %v1751, %v1747
    %v1792 = vpack.c.b16 %v1752, %v1748
    %v1793 = vpack.c.b16 %v1753, %v1749
    %v1794 = vpack.c.b16 %v1754, %v1750
    %v1795 = vpack.c.b16 %v1759, %v1755
    %v1796 = vpack.c.b16 %v1760, %v1756
    %v1797 = vpack.c.b16 %v1761, %v1757
    %v1798 = vpack.c.b16 %v1762, %v1758
    %v1799 = vpack.c.b16 %v1767, %v1763
    %v1800 = vpack.c.b16 %v1768, %v1764
    %v1801 = vpack.c.b16 %v1769, %v1765
    %v1802 = vpack.c.b16 %v1770, %v1766
    %1835 = vmatprep.subr.bf16.mxu0 %v1772
    %1836 = vmatpush1.bf16.msra.mxu0 %v1771
    %1837 = vmatprep.subr.bf16.mxu0 %v1776
    %1838 = vmatpush1.bf16.msra.mxu0 %v1775
    %1839 = vmatprep.subr.bf16.mxu0 %v1780
    %1840 = vmatpush1.bf16.msra.mxu0 %v1779
    %1841 = vmatprep.subr.bf16.mxu0 %v1784
    %1842 = vmatpush1.bf16.msra.mxu0 %v1783
    %1843 = vmatprep.subr.bf16.mxu0 %v1788
    %1844 = vmatpush1.bf16.msra.mxu0 %v1787
    %1845 = vmatprep.subr.bf16.mxu0 %v1792
    %1846 = vmatpush1.bf16.msra.mxu0 %v1791
    %1847 = vmatprep.subr.bf16.mxu0 %v1796
    %1848 = vmatpush1.bf16.msra.mxu0 %v1795
    %1849 = vmatprep.subr.bf16.mxu0 %v1800
    %1850 = vmatpush1.bf16.msra.mxu0 %v1799
    %1851 = vmatprep.subr.bf16.mxu0 0
    %1852 = vmatpush1.bf16.msra.mxu0 0
    %1853 = vmatprep.subr.bf16.mxu0 0
    %1854 = vmatpush1.bf16.msra.mxu0 0
    %1855 = vmatprep.subr.bf16.mxu0 0
    %1856 = vmatpush1.bf16.msra.mxu0 0
    %1857 = vmatprep.subr.bf16.mxu0 0
    %1858 = vmatpush1.bf16.msra.mxu0 0
    %1859 = vmatprep.subr.bf16.mxu0 0
    %1860 = vmatpush1.bf16.msra.mxu0 0
    %1861 = vmatprep.subr.bf16.mxu0 0
    %1862 = vmatpush1.bf16.msra.mxu0 0
    %1863 = vmatprep.subr.bf16.mxu0 0
    %1864 = vmatpush1.bf16.msra.mxu0 0
    %1865 = vmatprep.subr.bf16.mxu0 0
    %1866 = vmatpush1.bf16.msra.mxu0 0
    %1867 = vmatprep.mubr.bf16.mxu0 0
    %1868 = vmatmul.mubr.bf16.gmra.mrb[0].mxu0 %v1633
    %v1869 = vpop.f32.mrb[0].mxu0
    %v1870 = vadd.f32 %v1671, %v1869
    %v1871 = vpop.f32.mrb[0].mxu0
    %v1872 = vadd.f32 %v1672, %v1871
    %v1873 = vpop.f32.mrb[0].mxu0
    %v1874 = vpop.f32.mrb[0].mxu0
    %1875 = vdwg.mxu0
    %1876 = vmatprep.subr.bf16.mxu0 %v1774
    %1877 = vmatpush1.bf16.msra.mxu0 %v1773
    %1878 = vmatprep.subr.bf16.mxu0 %v1778
    %1879 = vmatpush1.bf16.msra.mxu0 %v1777
    %1880 = vmatprep.subr.bf16.mxu0 %v1782
    %1881 = vmatpush1.bf16.msra.mxu0 %v1781
    %1882 = vmatprep.subr.bf16.mxu0 %v1786
    %1883 = vmatpush1.bf16.msra.mxu0 %v1785
    %1884 = vmatprep.subr.bf16.mxu0 %v1790
    %1885 = vmatpush1.bf16.msra.mxu0 %v1789
    %1886 = vmatprep.subr.bf16.mxu0 %v1794
    %1887 = vmatpush1.bf16.msra.mxu0 %v1793
    %1888 = vmatprep.subr.bf16.mxu0 %v1798
    %1889 = vmatpush1.bf16.msra.mxu0 %v1797
    %1890 = vmatprep.subr.bf16.mxu0 %v1802
    %1891 = vmatpush1.bf16.msra.mxu0 %v1801
    %1892 = vmatprep.subr.bf16.mxu0 0
    %1893 = vmatpush1.bf16.msra.mxu0 0
    %1894 = vmatprep.subr.bf16.mxu0 0
    %1895 = vmatpush1.bf16.msra.mxu0 0
    %1896 = vmatprep.subr.bf16.mxu0 0
    %1897 = vmatpush1.bf16.msra.mxu0 0
    %1898 = vmatprep.subr.bf16.mxu0 0
    %1899 = vmatpush1.bf16.msra.mxu0 0
    %1900 = vmatprep.subr.bf16.mxu0 0
    %1901 = vmatpush1.bf16.msra.mxu0 0
    %1902 = vmatprep.subr.bf16.mxu0 0
    %1903 = vmatpush1.bf16.msra.mxu0 0
    %1904 = vmatprep.subr.bf16.mxu0 0
    %1905 = vmatpush1.bf16.msra.mxu0 0
    %1906 = vmatprep.subr.bf16.mxu0 0
    %1907 = vmatpush1.bf16.msra.mxu0 0
    %1908 = vmatprep.mubr.bf16.mxu0 0
    %1909 = vmatmul.mubr.bf16.gmra.mrb[0].mxu0 %v1633
    %v1910 = vpop.f32.mrb[0].mxu0
    %v1911 = vadd.f32 %v1673, %v1910
    %v1912 = vpop.f32.mrb[0].mxu0
    %v1913 = vadd.f32 %v1674, %v1912
    %v1914 = vpop.f32.mrb[0].mxu0
    %v1915 = vpop.f32.mrb[0].mxu0
    %1916 = vdwg.mxu0
    %v1917 = vtanh.pop %v1870
    %v1918 = vtanh.pop %v1872
    %v1919 = vtanh.pop %v1911
    %v1920 = vtanh.pop %v1913
    %v1921 = vmul.f32 %v1917, 0.5
    %v1922 = vmul.f32 %v1918, 0.5
    %v1923 = vmul.f32 %v1919, 0.5
    %v1924 = vadd.f32 %v1921, 0.5
    %v1925 = vadd.f32 %v1922, 0.5
    %v1926 = vadd.f32 %v1923, 0.5
    %v1927 = vmul.f32 %v1925, %v1630
    %v1928 = vmul.f32 %v1924, %v1920
    %v1929 = vadd.f32 %v1927, %v1928
    %v1930 = vtanh.pop %v1929
    %v1931 = vmul.f32 %v1926, %v1930
    %v1932 = vpack.c.bf16 %v1931, %v1931
    %s1933 = scalar_lea.vmem %s4, 16
    %1934 = vst [vmem:[%s1933] sm:$0xf] %v1932
    %v1935 = vld [vmem:[#allocation7] sm:$0xff]
    %v1936 = vld [vmem:[#allocation7 + $0x8] sm:$0xff]
    %v1937 = vld [vmem:[#allocation7 + $0x10] sm:$0xff]
    %v1938 = vld [vmem:[#allocation7 + $0x18] sm:$0xff]
    %v1939 = vld [vmem:[#allocation7 + $0x20] sm:$0xff]
    %v1940 = vld [vmem:[#allocation7 + $0x28] sm:$0xff]
    %v1941 = vld [vmem:[#allocation7 + $0x30] sm:$0xff]
    %v1942 = vld [vmem:[#allocation7 + $0x38] sm:$0xff]
    %v1943 = vld [vmem:[#allocation7 + $0x40] sm:$0xff]
    %v1944 = vld [vmem:[#allocation7 + $0x48] sm:$0xff]
    %v1945 = vld [vmem:[#allocation7 + $0x50] sm:$0xff]
    %v1946 = vld [vmem:[#allocation7 + $0x58] sm:$0xff]
    %v1947 = vld [vmem:[#allocation7 + $0x60] sm:$0xff]
    %v1948 = vld [vmem:[#allocation7 + $0x68] sm:$0xff]
    %v1949 = vld [vmem:[#allocation7 + $0x70] sm:$0xff]
    %v1950 = vld [vmem:[#allocation7 + $0x78] sm:$0xff]
    %v1951 = vld [vmem:[#allocation7 + $0x80] sm:$0xff]
    %v1952 = vld [vmem:[#allocation7 + $0x88] sm:$0xff]
    %v1953 = vld [vmem:[#allocation7 + $0x90] sm:$0xff]
    %v1954 = vld [vmem:[#allocation7 + $0x98] sm:$0xff]
    %v1955 = vld [vmem:[#allocation7 + $0xa0] sm:$0xff]
    %v1956 = vld [vmem:[#allocation7 + $0xa8] sm:$0xff]
    %v1957 = vld [vmem:[#allocation7 + $0xb0] sm:$0xff]
    %v1958 = vld [vmem:[#allocation7 + $0xb8] sm:$0xff]
    %v1959 = vld [vmem:[#allocation7 + $0xc0] sm:$0xff]
    %v1960 = vld [vmem:[#allocation7 + $0xc8] sm:$0xff]
    %v1961 = vld [vmem:[#allocation7 + $0xd0] sm:$0xff]
    %v1962 = vld [vmem:[#allocation7 + $0xd8] sm:$0xff]
    %v1963 = vld [vmem:[#allocation7 + $0xe0] sm:$0xff]
    %v1964 = vld [vmem:[#allocation7 + $0xe8] sm:$0xff]
    %v1965 = vld [vmem:[#allocation7 + $0xf0] sm:$0xff]
    %v1966 = vld [vmem:[#allocation7 + $0xf8] sm:$0xff]
    %s1967 = scalar_lea.vmem [#allocation4], 80
    %v1968 = vld [vmem:[%s1967] sm:$0xff]
    %v1969 = vld [vmem:[%s1967 + $0x8] sm:$0xff]
    %v1970 = vunpack.c.l.bf16 %v1968
    %v1971 = vunpack.c.h.bf16 %v1968
    %v1972 = vunpack.c.l.bf16 %v1969
    %v1973 = vunpack.c.h.bf16 %v1969
    %v2006 = vunpack.c.l.b16 %v1935
    %v2007 = vunpack.c.h.b16 %v1935
    %v2008 = vunpack.c.l.b16 %v1936
    %v2009 = vunpack.c.h.b16 %v1936
    %v2010 = vunpack.c.l.b16 %v1937
    %v2011 = vunpack.c.h.b16 %v1937
    %v2012 = vunpack.c.l.b16 %v1938
    %v2013 = vunpack.c.h.b16 %v1938
    %v2014 = vunpack.c.l.b16 %v1939
    %v2015 = vunpack.c.h.b16 %v1939
    %v2016 = vunpack.c.l.b16 %v1940
    %v2017 = vunpack.c.h.b16 %v1940
    %v2018 = vunpack.c.l.b16 %v1941
    %v2019 = vunpack.c.h.b16 %v1941
    %v2020 = vunpack.c.l.b16 %v1942
    %v2021 = vunpack.c.h.b16 %v1942
    %v2022 = vunpack.c.l.b16 %v1943
    %v2023 = vunpack.c.h.b16 %v1943
    %v2024 = vunpack.c.l.b16 %v1944
    %v2025 = vunpack.c.h.b16 %v1944
    %v2026 = vunpack.c.l.b16 %v1945
    %v2027 = vunpack.c.h.b16 %v1945
    %v2028 = vunpack.c.l.b16 %v1946
    %v2029 = vunpack.c.h.b16 %v1946
    %v2030 = vunpack.c.l.b16 %v1947
    %v2031 = vunpack.c.h.b16 %v1947
    %v2032 = vunpack.c.l.b16 %v1948
    %v2033 = vunpack.c.h.b16 %v1948
    %v2034 = vunpack.c.l.b16 %v1949
    %v2035 = vunpack.c.h.b16 %v1949
    %v2036 = vunpack.c.l.b16 %v1950
    %v2037 = vunpack.c.h.b16 %v1950
    %v2038 = vunpack.c.l.b16 %v1951
    %v2039 = vunpack.c.h.b16 %v1951
    %v2040 = vunpack.c.l.b16 %v1952
    %v2041 = vunpack.c.h.b16 %v1952
    %v2042 = vunpack.c.l.b16 %v1953
    %v2043 = vunpack.c.h.b16 %v1953
    %v2044 = vunpack.c.l.b16 %v1954
    %v2045 = vunpack.c.h.b16 %v1954
    %v2046 = vunpack.c.l.b16 %v1955
    %v2047 = vunpack.c.h.b16 %v1955
    %v2048 = vunpack.c.l.b16 %v1956
    %v2049 = vunpack.c.h.b16 %v1956
    %v2050 = vunpack.c.l.b16 %v1957
    %v2051 = vunpack.c.h.b16 %v1957
    %v2052 = vunpack.c.l.b16 %v1958
    %v2053 = vunpack.c.h.b16 %v1958
    %v2054 = vunpack.c.l.b16 %v1959
    %v2055 = vunpack.c.h.b16 %v1959
    %v2056 = vunpack.c.l.b16 %v1960
    %v2057 = vunpack.c.h.b16 %v1960
    %v2058 = vunpack.c.l.b16 %v1961
    %v2059 = vunpack.c.h.b16 %v1961
    %v2060 = vunpack.c.l.b16 %v1962
    %v2061 = vunpack.c.h.b16 %v1962
    %v2062 = vunpack.c.l.b16 %v1963
    %v2063 = vunpack.c.h.b16 %v1963
    %v2064 = vunpack.c.l.b16 %v1964
    %v2065 = vunpack.c.h.b16 %v1964
    %v2066 = vunpack.c.l.b16 %v1965
    %v2067 = vunpack.c.h.b16 %v1965
    %v2068 = vunpack.c.l.b16 %v1966
    %v2069 = vunpack.c.h.b16 %v1966
    %v2070 = vpack.c.b16 %v2010, %v2006
    %v2071 = vpack.c.b16 %v2011, %v2007
    %v2072 = vpack.c.b16 %v2012, %v2008
    %v2073 = vpack.c.b16 %v2013, %v2009
    %v2074 = vpack.c.b16 %v2018, %v2014
    %v2075 = vpack.c.b16 %v2019, %v2015
    %v2076 = vpack.c.b16 %v2020, %v2016
    %v2077 = vpack.c.b16 %v2021, %v2017
    %v2078 = vpack.c.b16 %v2026, %v2022
    %v2079 = vpack.c.b16 %v2027, %v2023
    %v2080 = vpack.c.b16 %v2028, %v2024
    %v2081 = vpack.c.b16 %v2029, %v2025
    %v2082 = vpack.c.b16 %v2034, %v2030
    %v2083 = vpack.c.b16 %v2035, %v2031
    %v2084 = vpack.c.b16 %v2036, %v2032
    %v2085 = vpack.c.b16 %v2037, %v2033
    %v2086 = vpack.c.b16 %v2042, %v2038
    %v2087 = vpack.c.b16 %v2043, %v2039
    %v2088 = vpack.c.b16 %v2044, %v2040
    %v2089 = vpack.c.b16 %v2045, %v2041
    %v2090 = vpack.c.b16 %v2050, %v2046
    %v2091 = vpack.c.b16 %v2051, %v2047
    %v2092 = vpack.c.b16 %v2052, %v2048
    %v2093 = vpack.c.b16 %v2053, %v2049
    %v2094 = vpack.c.b16 %v2058, %v2054
    %v2095 = vpack.c.b16 %v2059, %v2055
    %v2096 = vpack.c.b16 %v2060, %v2056
    %v2097 = vpack.c.b16 %v2061, %v2057
    %v2098 = vpack.c.b16 %v2066, %v2062
    %v2099 = vpack.c.b16 %v2067, %v2063
    %v2100 = vpack.c.b16 %v2068, %v2064
    %v2101 = vpack.c.b16 %v2069, %v2065
    %2134 = vmatprep.subr.bf16.mxu0 %v2071
    %2135 = vmatpush1.bf16.msra.mxu0 %v2070
    %2136 = vmatprep.subr.bf16.mxu0 %v2075
    %2137 = vmatpush1.bf16.msra.mxu0 %v2074
    %2138 = vmatprep.subr.bf16.mxu0 %v2079
    %2139 = vmatpush1.bf16.msra.mxu0 %v2078
    %2140 = vmatprep.subr.bf16.mxu0 %v2083
    %2141 = vmatpush1.bf16.msra.mxu0 %v2082
    %2142 = vmatprep.subr.bf16.mxu0 %v2087
    %2143 = vmatpush1.bf16.msra.mxu0 %v2086
    %2144 = vmatprep.subr.bf16.mxu0 %v2091
    %2145 = vmatpush1.bf16.msra.mxu0 %v2090
    %2146 = vmatprep.subr.bf16.mxu0 %v2095
    %2147 = vmatpush1.bf16.msra.mxu0 %v2094
    %2148 = vmatprep.subr.bf16.mxu0 %v2099
    %2149 = vmatpush1.bf16.msra.mxu0 %v2098
    %2150 = vmatprep.subr.bf16.mxu0 0
    %2151 = vmatpush1.bf16.msra.mxu0 0
    %2152 = vmatprep.subr.bf16.mxu0 0
    %2153 = vmatpush1.bf16.msra.mxu0 0
    %2154 = vmatprep.subr.bf16.mxu0 0
    %2155 = vmatpush1.bf16.msra.mxu0 0
    %2156 = vmatprep.subr.bf16.mxu0 0
    %2157 = vmatpush1.bf16.msra.mxu0 0
    %2158 = vmatprep.subr.bf16.mxu0 0
    %2159 = vmatpush1.bf16.msra.mxu0 0
    %2160 = vmatprep.subr.bf16.mxu0 0
    %2161 = vmatpush1.bf16.msra.mxu0 0
    %2162 = vmatprep.subr.bf16.mxu0 0
    %2163 = vmatpush1.bf16.msra.mxu0 0
    %2164 = vmatprep.subr.bf16.mxu0 0
    %2165 = vmatpush1.bf16.msra.mxu0 0
    %2166 = vmatprep.mubr.bf16.mxu0 0
    %2167 = vmatmul.mubr.bf16.gmra.mrb[0].mxu0 %v1932
    %v2168 = vpop.f32.mrb[0].mxu0
    %v2169 = vadd.f32 %v1970, %v2168
    %v2170 = vpop.f32.mrb[0].mxu0
    %v2171 = vadd.f32 %v1971, %v2170
    %v2172 = vpop.f32.mrb[0].mxu0
    %v2173 = vpop.f32.mrb[0].mxu0
    %2174 = vdwg.mxu0
    %2175 = vmatprep.subr.bf16.mxu0 %v2073
    %2176 = vmatpush1.bf16.msra.mxu0 %v2072
    %2177 = vmatprep.subr.bf16.mxu0 %v2077
    %2178 = vmatpush1.bf16.msra.mxu0 %v2076
    %2179 = vmatprep.subr.bf16.mxu0 %v2081
    %2180 = vmatpush1.bf16.msra.mxu0 %v2080
    %2181 = vmatprep.subr.bf16.mxu0 %v2085
    %2182 = vmatpush1.bf16.msra.mxu0 %v2084
    %2183 = vmatprep.subr.bf16.mxu0 %v2089
    %2184 = vmatpush1.bf16.msra.mxu0 %v2088
    %2185 = vmatprep.subr.bf16.mxu0 %v2093
    %2186 = vmatpush1.bf16.msra.mxu0 %v2092
    %2187 = vmatprep.subr.bf16.mxu0 %v2097
    %2188 = vmatpush1.bf16.msra.mxu0 %v2096
    %2189 = vmatprep.subr.bf16.mxu0 %v2101
    %2190 = vmatpush1.bf16.msra.mxu0 %v2100
    %2191 = vmatprep.subr.bf16.mxu0 0
    %2192 = vmatpush1.bf16.msra.mxu0 0
    %2193 = vmatprep.subr.bf16.mxu0 0
    %2194 = vmatpush1.bf16.msra.mxu0 0
    %2195 = vmatprep.subr.bf16.mxu0 0
    %2196 = vmatpush1.bf16.msra.mxu0 0
    %2197 = vmatprep.subr.bf16.mxu0 0
    %2198 = vmatpush1.bf16.msra.mxu0 0
    %2199 = vmatprep.subr.bf16.mxu0 0
    %2200 = vmatpush1.bf16.msra.mxu0 0
    %2201 = vmatprep.subr.bf16.mxu0 0
    %2202 = vmatpush1.bf16.msra.mxu0 0
    %2203 = vmatprep.subr.bf16.mxu0 0
    %2204 = vmatpush1.bf16.msra.mxu0 0
    %2205 = vmatprep.subr.bf16.mxu0 0
    %2206 = vmatpush1.bf16.msra.mxu0 0
    %2207 = vmatprep.mubr.bf16.mxu0 0
    %2208 = vmatmul.mubr.bf16.gmra.mrb[0].mxu0 %v1932
    %v2209 = vpop.f32.mrb[0].mxu0
    %v2210 = vadd.f32 %v1972, %v2209
    %v2211 = vpop.f32.mrb[0].mxu0
    %v2212 = vadd.f32 %v1973, %v2211
    %v2213 = vpop.f32.mrb[0].mxu0
    %v2214 = vpop.f32.mrb[0].mxu0
    %2215 = vdwg.mxu0
    %v2216 = vtanh.pop %v2169
    %v2217 = vtanh.pop %v2171
    %v2218 = vtanh.pop %v2210
    %v2219 = vtanh.pop %v2212
    %v2220 = vmul.f32 %v2216, 0.5
    %v2221 = vmul.f32 %v2217, 0.5
    %v2222 = vmul.f32 %v2218, 0.5
    %v2223 = vadd.f32 %v2220, 0.5
    %v2224 = vadd.f32 %v2221, 0.5
    %v2225 = vadd.f32 %v2222, 0.5
    %v2226 = vmul.f32 %v2224, %v1929
    %v2227 = vmul.f32 %v2223, %v2219
    %v2228 = vadd.f32 %v2226, %v2227
    %v2229 = vtanh.pop %v2228
    %v2230 = vmul.f32 %v2225, %v2229
    %v2231 = vpack.c.bf16 %v2230, %v2230
    %s2232 = scalar_lea.vmem %s4, 20
    %2233 = vst [vmem:[%s2232] sm:$0xf] %v2231
    %v2234 = vld [vmem:[#allocation7] sm:$0xff]
    %v2235 = vld [vmem:[#allocation7 + $0x8] sm:$0xff]
    %v2236 = vld [vmem:[#allocation7 + $0x10] sm:$0xff]
    %v2237 = vld [vmem:[#allocation7 + $0x18] sm:$0xff]
    %v2238 = vld [vmem:[#allocation7 + $0x20] sm:$0xff]
    %v2239 = vld [vmem:[#allocation7 + $0x28] sm:$0xff]
    %v2240 = vld [vmem:[#allocation7 + $0x30] sm:$0xff]
    %v2241 = vld [vmem:[#allocation7 + $0x38] sm:$0xff]
    %v2242 = vld [vmem:[#allocation7 + $0x40] sm:$0xff]
    %v2243 = vld [vmem:[#allocation7 + $0x48] sm:$0xff]
    %v2244 = vld [vmem:[#allocation7 + $0x50] sm:$0xff]
    %v2245 = vld [vmem:[#allocation7 + $0x58] sm:$0xff]
    %v2246 = vld [vmem:[#allocation7 + $0x60] sm:$0xff]
    %v2247 = vld [vmem:[#allocation7 + $0x68] sm:$0xff]
    %v2248 = vld [vmem:[#allocation7 + $0x70] sm:$0xff]
    %v2249 = vld [vmem:[#allocation7 + $0x78] sm:$0xff]
    %v2250 = vld [vmem:[#allocation7 + $0x80] sm:$0xff]
    %v2251 = vld [vmem:[#allocation7 + $0x88] sm:$0xff]
    %v2252 = vld [vmem:[#allocation7 + $0x90] sm:$0xff]
    %v2253 = vld [vmem:[#allocation7 + $0x98] sm:$0xff]
    %v2254 = vld [vmem:[#allocation7 + $0xa0] sm:$0xff]
    %v2255 = vld [vmem:[#allocation7 + $0xa8] sm:$0xff]
    %v2256 = vld [vmem:[#allocation7 + $0xb0] sm:$0xff]
    %v2257 = vld [vmem:[#allocation7 + $0xb8] sm:$0xff]
    %v2258 = vld [vmem:[#allocation7 + $0xc0] sm:$0xff]
    %v2259 = vld [vmem:[#allocation7 + $0xc8] sm:$0xff]
    %v2260 = vld [vmem:[#allocation7 + $0xd0] sm:$0xff]
    %v2261 = vld [vmem:[#allocation7 + $0xd8] sm:$0xff]
    %v2262 = vld [vmem:[#allocation7 + $0xe0] sm:$0xff]
    %v2263 = vld [vmem:[#allocation7 + $0xe8] sm:$0xff]
    %v2264 = vld [vmem:[#allocation7 + $0xf0] sm:$0xff]
    %v2265 = vld [vmem:[#allocation7 + $0xf8] sm:$0xff]
    %s2266 = scalar_lea.vmem [#allocation4], 96
    %v2267 = vld [vmem:[%s2266] sm:$0xff]
    %v2268 = vld [vmem:[%s2266 + $0x8] sm:$0xff]
    %v2269 = vunpack.c.l.bf16 %v2267
    %v2270 = vunpack.c.h.bf16 %v2267
    %v2271 = vunpack.c.l.bf16 %v2268
    %v2272 = vunpack.c.h.bf16 %v2268
    %v2305 = vunpack.c.l.b16 %v2234
    %v2306 = vunpack.c.h.b16 %v2234
    %v2307 = vunpack.c.l.b16 %v2235
    %v2308 = vunpack.c.h.b16 %v2235
    %v2309 = vunpack.c.l.b16 %v2236
    %v2310 = vunpack.c.h.b16 %v2236
    %v2311 = vunpack.c.l.b16 %v2237
    %v2312 = vunpack.c.h.b16 %v2237
    %v2313 = vunpack.c.l.b16 %v2238
    %v2314 = vunpack.c.h.b16 %v2238
    %v2315 = vunpack.c.l.b16 %v2239
    %v2316 = vunpack.c.h.b16 %v2239
    %v2317 = vunpack.c.l.b16 %v2240
    %v2318 = vunpack.c.h.b16 %v2240
    %v2319 = vunpack.c.l.b16 %v2241
    %v2320 = vunpack.c.h.b16 %v2241
    %v2321 = vunpack.c.l.b16 %v2242
    %v2322 = vunpack.c.h.b16 %v2242
    %v2323 = vunpack.c.l.b16 %v2243
    %v2324 = vunpack.c.h.b16 %v2243
    %v2325 = vunpack.c.l.b16 %v2244
    %v2326 = vunpack.c.h.b16 %v2244
    %v2327 = vunpack.c.l.b16 %v2245
    %v2328 = vunpack.c.h.b16 %v2245
    %v2329 = vunpack.c.l.b16 %v2246
    %v2330 = vunpack.c.h.b16 %v2246
    %v2331 = vunpack.c.l.b16 %v2247
    %v2332 = vunpack.c.h.b16 %v2247
    %v2333 = vunpack.c.l.b16 %v2248
    %v2334 = vunpack.c.h.b16 %v2248
    %v2335 = vunpack.c.l.b16 %v2249
    %v2336 = vunpack.c.h.b16 %v2249
    %v2337 = vunpack.c.l.b16 %v2250
    %v2338 = vunpack.c.h.b16 %v2250
    %v2339 = vunpack.c.l.b16 %v2251
    %v2340 = vunpack.c.h.b16 %v2251
    %v2341 = vunpack.c.l.b16 %v2252
    %v2342 = vunpack.c.h.b16 %v2252
    %v2343 = vunpack.c.l.b16 %v2253
    %v2344 = vunpack.c.h.b16 %v2253
    %v2345 = vunpack.c.l.b16 %v2254
    %v2346 = vunpack.c.h.b16 %v2254
    %v2347 = vunpack.c.l.b16 %v2255
    %v2348 = vunpack.c.h.b16 %v2255
    %v2349 = vunpack.c.l.b16 %v2256
    %v2350 = vunpack.c.h.b16 %v2256
    %v2351 = vunpack.c.l.b16 %v2257
    %v2352 = vunpack.c.h.b16 %v2257
    %v2353 = vunpack.c.l.b16 %v2258
    %v2354 = vunpack.c.h.b16 %v2258
    %v2355 = vunpack.c.l.b16 %v2259
    %v2356 = vunpack.c.h.b16 %v2259
    %v2357 = vunpack.c.l.b16 %v2260
    %v2358 = vunpack.c.h.b16 %v2260
    %v2359 = vunpack.c.l.b16 %v2261
    %v2360 = vunpack.c.h.b16 %v2261
    %v2361 = vunpack.c.l.b16 %v2262
    %v2362 = vunpack.c.h.b16 %v2262
    %v2363 = vunpack.c.l.b16 %v2263
    %v2364 = vunpack.c.h.b16 %v2263
    %v2365 = vunpack.c.l.b16 %v2264
    %v2366 = vunpack.c.h.b16 %v2264
    %v2367 = vunpack.c.l.b16 %v2265
    %v2368 = vunpack.c.h.b16 %v2265
    %v2369 = vpack.c.b16 %v2309, %v2305
    %v2370 = vpack.c.b16 %v2310, %v2306
    %v2371 = vpack.c.b16 %v2311, %v2307
    %v2372 = vpack.c.b16 %v2312, %v2308
    %v2373 = vpack.c.b16 %v2317, %v2313
    %v2374 = vpack.c.b16 %v2318, %v2314
    %v2375 = vpack.c.b16 %v2319, %v2315
    %v2376 = vpack.c.b16 %v2320, %v2316
    %v2377 = vpack.c.b16 %v2325, %v2321
    %v2378 = vpack.c.b16 %v2326, %v2322
    %v2379 = vpack.c.b16 %v2327, %v2323
    %v2380 = vpack.c.b16 %v2328, %v2324
    %v2381 = vpack.c.b16 %v2333, %v2329
    %v2382 = vpack.c.b16 %v2334, %v2330
    %v2383 = vpack.c.b16 %v2335, %v2331
    %v2384 = vpack.c.b16 %v2336, %v2332
    %v2385 = vpack.c.b16 %v2341, %v2337
    %v2386 = vpack.c.b16 %v2342, %v2338
    %v2387 = vpack.c.b16 %v2343, %v2339
    %v2388 = vpack.c.b16 %v2344, %v2340
    %v2389 = vpack.c.b16 %v2349, %v2345
    %v2390 = vpack.c.b16 %v2350, %v2346
    %v2391 = vpack.c.b16 %v2351, %v2347
    %v2392 = vpack.c.b16 %v2352, %v2348
    %v2393 = vpack.c.b16 %v2357, %v2353
    %v2394 = vpack.c.b16 %v2358, %v2354
    %v2395 = vpack.c.b16 %v2359, %v2355
    %v2396 = vpack.c.b16 %v2360, %v2356
    %v2397 = vpack.c.b16 %v2365, %v2361
    %v2398 = vpack.c.b16 %v2366, %v2362
    %v2399 = vpack.c.b16 %v2367, %v2363
    %v2400 = vpack.c.b16 %v2368, %v2364
    %2433 = vmatprep.subr.bf16.mxu0 %v2370
    %2434 = vmatpush1.bf16.msra.mxu0 %v2369
    %2435 = vmatprep.subr.bf16.mxu0 %v2374
    %2436 = vmatpush1.bf16.msra.mxu0 %v2373
    %2437 = vmatprep.subr.bf16.mxu0 %v2378
    %2438 = vmatpush1.bf16.msra.mxu0 %v2377
    %2439 = vmatprep.subr.bf16.mxu0 %v2382
    %2440 = vmatpush1.bf16.msra.mxu0 %v2381
    %2441 = vmatprep.subr.bf16.mxu0 %v2386
    %2442 = vmatpush1.bf16.msra.mxu0 %v2385
    %2443 = vmatprep.subr.bf16.mxu0 %v2390
    %2444 = vmatpush1.bf16.msra.mxu0 %v2389
    %2445 = vmatprep.subr.bf16.mxu0 %v2394
    %2446 = vmatpush1.bf16.msra.mxu0 %v2393
    %2447 = vmatprep.subr.bf16.mxu0 %v2398
    %2448 = vmatpush1.bf16.msra.mxu0 %v2397
    %2449 = vmatprep.subr.bf16.mxu0 0
    %2450 = vmatpush1.bf16.msra.mxu0 0
    %2451 = vmatprep.subr.bf16.mxu0 0
    %2452 = vmatpush1.bf16.msra.mxu0 0
    %2453 = vmatprep.subr.bf16.mxu0 0
    %2454 = vmatpush1.bf16.msra.mxu0 0
    %2455 = vmatprep.subr.bf16.mxu0 0
    %2456 = vmatpush1.bf16.msra.mxu0 0
    %2457 = vmatprep.subr.bf16.mxu0 0
    %2458 = vmatpush1.bf16.msra.mxu0 0
    %2459 = vmatprep.subr.bf16.mxu0 0
    %2460 = vmatpush1.bf16.msra.mxu0 0
    %2461 = vmatprep.subr.bf16.mxu0 0
    %2462 = vmatpush1.bf16.msra.mxu0 0
    %2463 = vmatprep.subr.bf16.mxu0 0
    %2464 = vmatpush1.bf16.msra.mxu0 0
    %2465 = vmatprep.mubr.bf16.mxu0 0
    %2466 = vmatmul.mubr.bf16.gmra.mrb[0].mxu0 %v2231
    %v2467 = vpop.f32.mrb[0].mxu0
    %v2468 = vadd.f32 %v2269, %v2467
    %v2469 = vpop.f32.mrb[0].mxu0
    %v2470 = vadd.f32 %v2270, %v2469
    %v2471 = vpop.f32.mrb[0].mxu0
    %v2472 = vpop.f32.mrb[0].mxu0
    %2473 = vdwg.mxu0
    %2474 = vmatprep.subr.bf16.mxu0 %v2372
    %2475 = vmatpush1.bf16.msra.mxu0 %v2371
    %2476 = vmatprep.subr.bf16.mxu0 %v2376
    %2477 = vmatpush1.bf16.msra.mxu0 %v2375
    %2478 = vmatprep.subr.bf16.mxu0 %v2380
    %2479 = vmatpush1.bf16.msra.mxu0 %v2379
    %2480 = vmatprep.subr.bf16.mxu0 %v2384
    %2481 = vmatpush1.bf16.msra.mxu0 %v2383
    %2482 = vmatprep.subr.bf16.mxu0 %v2388
    %2483 = vmatpush1.bf16.msra.mxu0 %v2387
    %2484 = vmatprep.subr.bf16.mxu0 %v2392
    %2485 = vmatpush1.bf16.msra.mxu0 %v2391
    %2486 = vmatprep.subr.bf16.mxu0 %v2396
    %2487 = vmatpush1.bf16.msra.mxu0 %v2395
    %2488 = vmatprep.subr.bf16.mxu0 %v2400
    %2489 = vmatpush1.bf16.msra.mxu0 %v2399
    %2490 = vmatprep.subr.bf16.mxu0 0
    %2491 = vmatpush1.bf16.msra.mxu0 0
    %2492 = vmatprep.subr.bf16.mxu0 0
    %2493 = vmatpush1.bf16.msra.mxu0 0
    %2494 = vmatprep.subr.bf16.mxu0 0
    %2495 = vmatpush1.bf16.msra.mxu0 0
    %2496 = vmatprep.subr.bf16.mxu0 0
    %2497 = vmatpush1.bf16.msra.mxu0 0
    %2498 = vmatprep.subr.bf16.mxu0 0
    %2499 = vmatpush1.bf16.msra.mxu0 0
    %2500 = vmatprep.subr.bf16.mxu0 0
    %2501 = vmatpush1.bf16.msra.mxu0 0
    %2502 = vmatprep.subr.bf16.mxu0 0
    %2503 = vmatpush1.bf16.msra.mxu0 0
    %2504 = vmatprep.subr.bf16.mxu0 0
    %2505 = vmatpush1.bf16.msra.mxu0 0
    %2506 = vmatprep.mubr.bf16.mxu0 0
    %2507 = vmatmul.mubr.bf16.gmra.mrb[0].mxu0 %v2231
    %v2508 = vpop.f32.mrb[0].mxu0
    %v2509 = vadd.f32 %v2271, %v2508
    %v2510 = vpop.f32.mrb[0].mxu0
    %v2511 = vadd.f32 %v2272, %v2510
    %v2512 = vpop.f32.mrb[0].mxu0
    %v2513 = vpop.f32.mrb[0].mxu0
    %2514 = vdwg.mxu0
    %v2515 = vtanh.pop %v2468
    %v2516 = vtanh.pop %v2470
    %v2517 = vtanh.pop %v2509
    %v2518 = vtanh.pop %v2511
    %v2519 = vmul.f32 %v2515, 0.5
    %v2520 = vmul.f32 %v2516, 0.5
    %v2521 = vmul.f32 %v2517, 0.5
    %v2522 = vadd.f32 %v2519, 0.5
    %v2523 = vadd.f32 %v2520, 0.5
    %v2524 = vadd.f32 %v2521, 0.5
    %v2525 = vmul.f32 %v2523, %v2228
    %v2526 = vmul.f32 %v2522, %v2518
    %v2527 = vadd.f32 %v2525, %v2526
    %v2528 = vtanh.pop %v2527
    %v2529 = vmul.f32 %v2524, %v2528
    %v2530 = vpack.c.bf16 %v2529, %v2529
    %s2531 = scalar_lea.vmem %s4, 24
    %2532 = vst [vmem:[%s2531] sm:$0xf] %v2530
    %v2533 = vld [vmem:[#allocation7] sm:$0xff]
    %v2534 = vld [vmem:[#allocation7 + $0x8] sm:$0xff]
    %v2535 = vld [vmem:[#allocation7 + $0x10] sm:$0xff]
    %v2536 = vld [vmem:[#allocation7 + $0x18] sm:$0xff]
    %v2537 = vld [vmem:[#allocation7 + $0x20] sm:$0xff]
    %v2538 = vld [vmem:[#allocation7 + $0x28] sm:$0xff]
    %v2539 = vld [vmem:[#allocation7 + $0x30] sm:$0xff]
    %v2540 = vld [vmem:[#allocation7 + $0x38] sm:$0xff]
    %v2541 = vld [vmem:[#allocation7 + $0x40] sm:$0xff]
    %v2542 = vld [vmem:[#allocation7 + $0x48] sm:$0xff]
    %v2543 = vld [vmem:[#allocation7 + $0x50] sm:$0xff]
    %v2544 = vld [vmem:[#allocation7 + $0x58] sm:$0xff]
    %v2545 = vld [vmem:[#allocation7 + $0x60] sm:$0xff]
    %v2546 = vld [vmem:[#allocation7 + $0x68] sm:$0xff]
    %v2547 = vld [vmem:[#allocation7 + $0x70] sm:$0xff]
    %v2548 = vld [vmem:[#allocation7 + $0x78] sm:$0xff]
    %v2549 = vld [vmem:[#allocation7 + $0x80] sm:$0xff]
    %v2550 = vld [vmem:[#allocation7 + $0x88] sm:$0xff]
    %v2551 = vld [vmem:[#allocation7 + $0x90] sm:$0xff]
    %v2552 = vld [vmem:[#allocation7 + $0x98] sm:$0xff]
    %v2553 = vld [vmem:[#allocation7 + $0xa0] sm:$0xff]
    %v2554 = vld [vmem:[#allocation7 + $0xa8] sm:$0xff]
    %v2555 = vld [vmem:[#allocation7 + $0xb0] sm:$0xff]
    %v2556 = vld [vmem:[#allocation7 + $0xb8] sm:$0xff]
    %v2557 = vld [vmem:[#allocation7 + $0xc0] sm:$0xff]
    %v2558 = vld [vmem:[#allocation7 + $0xc8] sm:$0xff]
    %v2559 = vld [vmem:[#allocation7 + $0xd0] sm:$0xff]
    %v2560 = vld [vmem:[#allocation7 + $0xd8] sm:$0xff]
    %v2561 = vld [vmem:[#allocation7 + $0xe0] sm:$0xff]
    %v2562 = vld [vmem:[#allocation7 + $0xe8] sm:$0xff]
    %v2563 = vld [vmem:[#allocation7 + $0xf0] sm:$0xff]
    %v2564 = vld [vmem:[#allocation7 + $0xf8] sm:$0xff]
    %s2565 = scalar_lea.vmem [#allocation4], 112
    %v2566 = vld [vmem:[%s2565] sm:$0xff]
    %v2567 = vld [vmem:[%s2565 + $0x8] sm:$0xff]
    %v2568 = vunpack.c.l.bf16 %v2566
    %v2569 = vunpack.c.h.bf16 %v2566
    %v2570 = vunpack.c.l.bf16 %v2567
    %v2571 = vunpack.c.h.bf16 %v2567
    %v2604 = vunpack.c.l.b16 %v2533
    %v2605 = vunpack.c.h.b16 %v2533
    %v2606 = vunpack.c.l.b16 %v2534
    %v2607 = vunpack.c.h.b16 %v2534
    %v2608 = vunpack.c.l.b16 %v2535
    %v2609 = vunpack.c.h.b16 %v2535
    %v2610 = vunpack.c.l.b16 %v2536
    %v2611 = vunpack.c.h.b16 %v2536
    %v2612 = vunpack.c.l.b16 %v2537
    %v2613 = vunpack.c.h.b16 %v2537
    %v2614 = vunpack.c.l.b16 %v2538
    %v2615 = vunpack.c.h.b16 %v2538
    %v2616 = vunpack.c.l.b16 %v2539
    %v2617 = vunpack.c.h.b16 %v2539
    %v2618 = vunpack.c.l.b16 %v2540
    %v2619 = vunpack.c.h.b16 %v2540
    %v2620 = vunpack.c.l.b16 %v2541
    %v2621 = vunpack.c.h.b16 %v2541
    %v2622 = vunpack.c.l.b16 %v2542
    %v2623 = vunpack.c.h.b16 %v2542
    %v2624 = vunpack.c.l.b16 %v2543
    %v2625 = vunpack.c.h.b16 %v2543
    %v2626 = vunpack.c.l.b16 %v2544
    %v2627 = vunpack.c.h.b16 %v2544
    %v2628 = vunpack.c.l.b16 %v2545
    %v2629 = vunpack.c.h.b16 %v2545
    %v2630 = vunpack.c.l.b16 %v2546
    %v2631 = vunpack.c.h.b16 %v2546
    %v2632 = vunpack.c.l.b16 %v2547
    %v2633 = vunpack.c.h.b16 %v2547
    %v2634 = vunpack.c.l.b16 %v2548
    %v2635 = vunpack.c.h.b16 %v2548
    %v2636 = vunpack.c.l.b16 %v2549
    %v2637 = vunpack.c.h.b16 %v2549
    %v2638 = vunpack.c.l.b16 %v2550
    %v2639 = vunpack.c.h.b16 %v2550
    %v2640 = vunpack.c.l.b16 %v2551
    %v2641 = vunpack.c.h.b16 %v2551
    %v2642 = vunpack.c.l.b16 %v2552
    %v2643 = vunpack.c.h.b16 %v2552
    %v2644 = vunpack.c.l.b16 %v2553
    %v2645 = vunpack.c.h.b16 %v2553
    %v2646 = vunpack.c.l.b16 %v2554
    %v2647 = vunpack.c.h.b16 %v2554
    %v2648 = vunpack.c.l.b16 %v2555
    %v2649 = vunpack.c.h.b16 %v2555
    %v2650 = vunpack.c.l.b16 %v2556
    %v2651 = vunpack.c.h.b16 %v2556
    %v2652 = vunpack.c.l.b16 %v2557
    %v2653 = vunpack.c.h.b16 %v2557
    %v2654 = vunpack.c.l.b16 %v2558
    %v2655 = vunpack.c.h.b16 %v2558
    %v2656 = vunpack.c.l.b16 %v2559
    %v2657 = vunpack.c.h.b16 %v2559
    %v2658 = vunpack.c.l.b16 %v2560
    %v2659 = vunpack.c.h.b16 %v2560
    %v2660 = vunpack.c.l.b16 %v2561
    %v2661 = vunpack.c.h.b16 %v2561
    %v2662 = vunpack.c.l.b16 %v2562
    %v2663 = vunpack.c.h.b16 %v2562
    %v2664 = vunpack.c.l.b16 %v2563
    %v2665 = vunpack.c.h.b16 %v2563
    %v2666 = vunpack.c.l.b16 %v2564
    %v2667 = vunpack.c.h.b16 %v2564
    %v2668 = vpack.c.b16 %v2608, %v2604
    %v2669 = vpack.c.b16 %v2609, %v2605
    %v2670 = vpack.c.b16 %v2610, %v2606
    %v2671 = vpack.c.b16 %v2611, %v2607
    %v2672 = vpack.c.b16 %v2616, %v2612
    %v2673 = vpack.c.b16 %v2617, %v2613
    %v2674 = vpack.c.b16 %v2618, %v2614
    %v2675 = vpack.c.b16 %v2619, %v2615
    %v2676 = vpack.c.b16 %v2624, %v2620
    %v2677 = vpack.c.b16 %v2625, %v2621
    %v2678 = vpack.c.b16 %v2626, %v2622
    %v2679 = vpack.c.b16 %v2627, %v2623
    %v2680 = vpack.c.b16 %v2632, %v2628
    %v2681 = vpack.c.b16 %v2633, %v2629
    %v2682 = vpack.c.b16 %v2634, %v2630
    %v2683 = vpack.c.b16 %v2635, %v2631
    %v2684 = vpack.c.b16 %v2640, %v2636
    %v2685 = vpack.c.b16 %v2641, %v2637
    %v2686 = vpack.c.b16 %v2642, %v2638
    %v2687 = vpack.c.b16 %v2643, %v2639
    %v2688 = vpack.c.b16 %v2648, %v2644
    %v2689 = vpack.c.b16 %v2649, %v2645
    %v2690 = vpack.c.b16 %v2650, %v2646
    %v2691 = vpack.c.b16 %v2651, %v2647
    %v2692 = vpack.c.b16 %v2656, %v2652
    %v2693 = vpack.c.b16 %v2657, %v2653
    %v2694 = vpack.c.b16 %v2658, %v2654
    %v2695 = vpack.c.b16 %v2659, %v2655
    %v2696 = vpack.c.b16 %v2664, %v2660
    %v2697 = vpack.c.b16 %v2665, %v2661
    %v2698 = vpack.c.b16 %v2666, %v2662
    %v2699 = vpack.c.b16 %v2667, %v2663
    %2732 = vmatprep.subr.bf16.mxu0 %v2669
    %2733 = vmatpush1.bf16.msra.mxu0 %v2668
    %2734 = vmatprep.subr.bf16.mxu0 %v2673
    %2735 = vmatpush1.bf16.msra.mxu0 %v2672
    %2736 = vmatprep.subr.bf16.mxu0 %v2677
    %2737 = vmatpush1.bf16.msra.mxu0 %v2676
    %2738 = vmatprep.subr.bf16.mxu0 %v2681
    %2739 = vmatpush1.bf16.msra.mxu0 %v2680
    %2740 = vmatprep.subr.bf16.mxu0 %v2685
    %2741 = vmatpush1.bf16.msra.mxu0 %v2684
    %2742 = vmatprep.subr.bf16.mxu0 %v2689
    %2743 = vmatpush1.bf16.msra.mxu0 %v2688
    %2744 = vmatprep.subr.bf16.mxu0 %v2693
    %2745 = vmatpush1.bf16.msra.mxu0 %v2692
    %2746 = vmatprep.subr.bf16.mxu0 %v2697
    %2747 = vmatpush1.bf16.msra.mxu0 %v2696
    %2748 = vmatprep.subr.bf16.mxu0 0
    %2749 = vmatpush1.bf16.msra.mxu0 0
    %2750 = vmatprep.subr.bf16.mxu0 0
    %2751 = vmatpush1.bf16.msra.mxu0 0
    %2752 = vmatprep.subr.bf16.mxu0 0
    %2753 = vmatpush1.bf16.msra.mxu0 0
    %2754 = vmatprep.subr.bf16.mxu0 0
    %2755 = vmatpush1.bf16.msra.mxu0 0
    %2756 = vmatprep.subr.bf16.mxu0 0
    %2757 = vmatpush1.bf16.msra.mxu0 0
    %2758 = vmatprep.subr.bf16.mxu0 0
    %2759 = vmatpush1.bf16.msra.mxu0 0
    %2760 = vmatprep.subr.bf16.mxu0 0
    %2761 = vmatpush1.bf16.msra.mxu0 0
    %2762 = vmatprep.subr.bf16.mxu0 0
    %2763 = vmatpush1.bf16.msra.mxu0 0
    %2764 = vmatprep.mubr.bf16.mxu0 0
    %2765 = vmatmul.mubr.bf16.gmra.mrb[0].mxu0 %v2530
    %v2766 = vpop.f32.mrb[0].mxu0
    %v2767 = vadd.f32 %v2568, %v2766
    %v2768 = vpop.f32.mrb[0].mxu0
    %v2769 = vadd.f32 %v2569, %v2768
    %v2770 = vpop.f32.mrb[0].mxu0
    %v2771 = vpop.f32.mrb[0].mxu0
    %2772 = vdwg.mxu0
    %2773 = vmatprep.subr.bf16.mxu0 %v2671
    %2774 = vmatpush1.bf16.msra.mxu0 %v2670
    %2775 = vmatprep.subr.bf16.mxu0 %v2675
    %2776 = vmatpush1.bf16.msra.mxu0 %v2674
    %2777 = vmatprep.subr.bf16.mxu0 %v2679
    %2778 = vmatpush1.bf16.msra.mxu0 %v2678
    %2779 = vmatprep.subr.bf16.mxu0 %v2683
    %2780 = vmatpush1.bf16.msra.mxu0 %v2682
    %2781 = vmatprep.subr.bf16.mxu0 %v2687
    %2782 = vmatpush1.bf16.msra.mxu0 %v2686
    %2783 = vmatprep.subr.bf16.mxu0 %v2691
    %2784 = vmatpush1.bf16.msra.mxu0 %v2690
    %2785 = vmatprep.subr.bf16.mxu0 %v2695
    %2786 = vmatpush1.bf16.msra.mxu0 %v2694
    %2787 = vmatprep.subr.bf16.mxu0 %v2699
    %2788 = vmatpush1.bf16.msra.mxu0 %v2698
    %2789 = vmatprep.subr.bf16.mxu0 0
    %2790 = vmatpush1.bf16.msra.mxu0 0
    %2791 = vmatprep.subr.bf16.mxu0 0
    %2792 = vmatpush1.bf16.msra.mxu0 0
    %2793 = vmatprep.subr.bf16.mxu0 0
    %2794 = vmatpush1.bf16.msra.mxu0 0
    %2795 = vmatprep.subr.bf16.mxu0 0
    %2796 = vmatpush1.bf16.msra.mxu0 0
    %2797 = vmatprep.subr.bf16.mxu0 0
    %2798 = vmatpush1.bf16.msra.mxu0 0
    %2799 = vmatprep.subr.bf16.mxu0 0
    %2800 = vmatpush1.bf16.msra.mxu0 0
    %2801 = vmatprep.subr.bf16.mxu0 0
    %2802 = vmatpush1.bf16.msra.mxu0 0
    %2803 = vmatprep.subr.bf16.mxu0 0
    %2804 = vmatpush1.bf16.msra.mxu0 0
    %2805 = vmatprep.mubr.bf16.mxu0 0
    %2806 = vmatmul.mubr.bf16.gmra.mrb[0].mxu0 %v2530
    %v2807 = vpop.f32.mrb[0].mxu0
    %v2808 = vadd.f32 %v2570, %v2807
    %v2809 = vpop.f32.mrb[0].mxu0
    %v2810 = vadd.f32 %v2571, %v2809
    %v2811 = vpop.f32.mrb[0].mxu0
    %v2812 = vpop.f32.mrb[0].mxu0
    %2813 = vdwg.mxu0
    %v2814 = vtanh.pop %v2767
    %v2815 = vtanh.pop %v2769
    %v2816 = vtanh.pop %v2808
    %v2817 = vtanh.pop %v2810
    %v2818 = vmul.f32 %v2814, 0.5
    %v2819 = vmul.f32 %v2815, 0.5
    %v2820 = vmul.f32 %v2816, 0.5
    %v2821 = vadd.f32 %v2818, 0.5
    %v2822 = vadd.f32 %v2819, 0.5
    %v2823 = vadd.f32 %v2820, 0.5
    %v2824 = vmul.f32 %v2822, %v2527
    %v2825 = vmul.f32 %v2821, %v2817
    %v2826 = vadd.f32 %v2824, %v2825
    %v2827 = vtanh.pop %v2826
    %v2828 = vmul.f32 %v2823, %v2827
    %v2829 = vpack.c.bf16 %v2828, %v2828
    %s2830 = scalar_lea.vmem %s4, 28
    %2831 = vst [vmem:[%s2830] sm:$0xf] %v2829
    %2832 = vst [vmem:[#allocation2] sm:$0xf] %v2829
    %2833 = vst [vmem:[#allocation3] sm:$0xff] %v2826
    // Predicated region
    $region34: #{lstm_model_forward.2} parent=1 // pred_check
      _
    $region35: #{lstm_model_forward.2} parent=1 // pred_check_branch
      %2835 = sbr.rel (0) target = $region37
    $region36: #{lstm_model_forward.2} parent=1 // pred_region
      _
    $region37: #{lstm_model_forward.2} parent=1 // pred_fallthru
      _
    // Predicated region
    $region38: #{lstm_model_forward.2} parent=1 // pred_check
      _
    $region39: #{lstm_model_forward.2} parent=1 // pred_check_branch
      %2837 = sbr.rel (0) target = $region41
    $region40: #{lstm_model_forward.2} parent=1 // pred_region
      _
    $region41: #{lstm_model_forward.2} parent=1 // pred_fallthru
      _
    %2838 = vsyncpa [#allocation6], 1
    %2839 = vsyncpa [#allocation8], 1

</llo_original>
